<compile_context>
chip_gen: v6e
topology: v6e:2x2x1
jax: 0.10.0
libtpu: 0.0.40
codegen_flags: <defaults>
</compile_context>

<pallas_src>
import functools
import math

import jax
import jax.numpy as jnp
from jax import lax
from jax.experimental import pallas as pl
from jax.experimental.pallas import tpu as pltpu


# --------------------------------- the kernel --------------------------------

def duration_kernel(x_ref, tapmask_ref, mrow_ref, prompts_ref, bias_ref,
                    pre_w_ref, pre_b_ref, conv_w_ref, layer_vec_ref,
                    qkv_w_ref, qkv_b_ref, ow_ref, stack_vec_ref,
                    proj_w_ref, proj_b_ref, o_ref, *,
                    n_stack, n_stack_in_stack, num_heads, kernel_size,
                    ln_eps, use_pre):
    BT, C = x_ref.shape           # batch-folded time x channels
    K = kernel_size
    H = num_heads
    Dh = C // H
    pad = K // 2

    x = x_ref[...].astype(jnp.float32)

    # Per-tap combined masks (time mask shifted to the tap position, conv
    # 'same' boundary zeros, batch-boundary zeros) -- broadcast once, reused by
    # every conv layer and the final projection.
    tap_mask = [jnp.broadcast_to(tapmask_ref[j], (BT, C)) for j in range(K)]
    attn_bias = bias_ref[...]     # [BT, BTp] block-diagonal 0 / -1e9

    def taps_of(h):
        """K time-shifted copies of (h * mask), bf16, ready for the MXU."""
        out = []
        for j in range(K):
            d = j - pad
            t = h if d == 0 else pltpu.roll(h, shift=(-d) % BT, axis=0)
            out.append((t * tap_mask[j]).astype(jnp.bfloat16))
        return out

    def layer_norm(h, g, b):      # channel-wise LayerNorm (glow-tts style)
        mean = jnp.mean(h, axis=-1, keepdims=True)
        var = jnp.mean(h * h, axis=-1, keepdims=True) - mean * mean
        var = jnp.maximum(var, 0.0)
        return (h - mean) * lax.rsqrt(var + ln_eps) * g + b

    # --- pre_attention: 1x1 conv Cc -> C on the prompts (once) ---
    if use_pre:
        prompts = jnp.dot(prompts_ref[...].astype(jnp.bfloat16), pre_w_ref[...],
                          preferred_element_type=jnp.float32) + pre_b_ref[...]
    else:
        prompts = prompts_ref[...].astype(jnp.float32)
    prompts_bf = prompts.astype(jnp.bfloat16)

    layer = 0
    for s in range(n_stack):
        # ---- conv residual blocks: x = relu(LN(conv(x*m))) + x ----
        for _ in range(n_stack_in_stack):
            taps = taps_of(x)
            lv = layer_vec_ref[layer]                     # [3, C]: conv_b, g, b
            h = lv[0:1, :]
            for j in range(K):
                h = h + jnp.dot(taps[j], conv_w_ref[layer, j],
                                preferred_element_type=jnp.float32)
            h = layer_norm(h, lv[1:2, :], lv[2:3, :])
            x = jnp.maximum(h, 0.0) + x                   # ReLU; dropout = id
            layer += 1

        # ---- multi-head cross attention vs the speech prompts ----
        # q/k/v fused into one matmul each; per-head work on Dh lane slices;
        # batch handled block-diagonally via attn_bias.
        residual = x
        x_bf = x.astype(jnp.bfloat16)
        q = jnp.dot(x_bf, qkv_w_ref[s, 0],
                    preferred_element_type=jnp.float32) + qkv_b_ref[s, 0]
        k = jnp.dot(prompts_bf, qkv_w_ref[s, 1],
                    preferred_element_type=jnp.float32) + qkv_b_ref[s, 1]
        v = jnp.dot(prompts_bf, qkv_w_ref[s, 2],
                    preferred_element_type=jnp.float32) + qkv_b_ref[s, 2]
        q_bf = q.astype(jnp.bfloat16)
        k_bf = k.astype(jnp.bfloat16)
        v_bf = v.astype(jnp.bfloat16)

        attn = None
        for hh in range(H):
            c0 = hh * Dh
            scores = lax.dot_general(q_bf[:, c0:c0 + Dh], k_bf[:, c0:c0 + Dh],
                                     (((1,), (1,)), ((), ())),
                                     preferred_element_type=jnp.float32)
            scores = scores + attn_bias
            scores = scores - jnp.max(scores, axis=-1, keepdims=True)
            p = jnp.exp(scores)
            p = p * pl.reciprocal(jnp.sum(p, axis=-1, keepdims=True), approx=True)
            oh = jnp.dot(p.astype(jnp.bfloat16), v_bf[:, c0:c0 + Dh],
                         preferred_element_type=jnp.float32)       # [BT, Dh]
            # head-concat folded into the output projection: attn += oh @ ow_h^T
            contrib = lax.dot_general(oh.astype(jnp.bfloat16), ow_ref[s, hh],
                                      (((1,), (1,)), ((), ())),
                                      preferred_element_type=jnp.float32)
            attn = contrib if attn is None else attn + contrib

        sv = stack_vec_ref[s]                             # [3, C]: ob, ng, nb
        x = layer_norm(attn + sv[0:1, :] + residual, sv[1:2, :], sv[2:3, :])

    # ---- projection to 1 channel, lane-dense [1, BT] row ----
    taps = taps_of(x)
    y = None
    for j in range(K):
        part = lax.dot_general(proj_w_ref[j], taps[j],
                               (((1,), (1,)), ((), ())),
                               preferred_element_type=jnp.float32)  # [1, BT]
        y = part if y is None else y + part
    y = (y + proj_b_ref[...]) * mrow_ref[...]
    # numerically stable softplus
    y = jnp.maximum(y, 0.0) + jnp.log(1.0 + jnp.exp(-jnp.abs(y)))
    o_ref[...] = y


# --------------------------------- packing -----------------------------------

def pack_params(params, *, channels, condition_channels, kernel_size,
                n_stack, n_stack_in_stack, num_heads):
    """Pack per-tensor params into tile-aligned, leading-axis-indexed arrays."""
    del condition_channels  # pre_w already stored [Cc, C]
    C, K = channels, kernel_size
    L, S, H = n_stack * n_stack_in_stack, n_stack, num_heads
    Dh = C // H
    scale = 1.0 / math.sqrt(Dh)        # fold 1/sqrt(Dh) into q weights + bias

    pre_w = params["pre_w"].astype(jnp.bfloat16)                       # [Cc, C]
    pre_b = params["pre_b"].reshape(1, C).astype(jnp.float32)

    conv_w = params["conv_w"].astype(jnp.bfloat16)                     # [L,K,C,C]
    layer_vec = jnp.stack([params["conv_b"], params["ln_g"], params["ln_b"]],
                          axis=1).astype(jnp.float32)                  # [L,3,C]

    qkv_w = jnp.stack([params["qw"] * scale, params["kw"], params["vw"]],
                      axis=1).astype(jnp.bfloat16)                     # [S,3,C,C]
    qkv_b = jnp.stack([params["qb"] * scale, params["kb"], params["vb"]],
                      axis=1).reshape(S, 3, 1, C).astype(jnp.float32)  # [S,3,1,C]
    ow_t = params["ow"].reshape(S, H, Dh, C).transpose(0, 1, 3, 2)
    ow_t = ow_t.astype(jnp.bfloat16)                                   # [S,H,C,Dh]
    stack_vec = jnp.stack([params["ob"], params["ng"], params["nb"]],
                          axis=1).astype(jnp.float32)                  # [S,3,C]

    proj_w = params["proj_w"].reshape(K, 1, C).astype(jnp.bfloat16)
    proj_b = params["proj_b"].reshape(1, 1).astype(jnp.float32)

    return (pre_w, pre_b, conv_w, layer_vec, qkv_w, qkv_b, ow_t, stack_vec,
            proj_w, proj_b)


# --------------------------------- wrapper ------------------------------------

def duration_predictor(x, masks, speech_prompts, params, *,
                       kernel_size, n_stack, n_stack_in_stack, num_heads,
                       ln_eps=1e-5):
    """x: [B, T, C], masks: [B, T, 1], speech_prompts: [B, Tp, Cc] -> [B, T]."""
    B, T, C = x.shape
    _, Tp, Cc = speech_prompts.shape
    assert kernel_size % 2 == 1, "kernel_size must be odd for 'same' conv padding"
    assert C % num_heads == 0
    K, pad = kernel_size, kernel_size // 2
    BT, BTp = B * T, B * Tp

    (pre_w, pre_b, conv_w, layer_vec, qkv_w, qkv_b, ow_t, stack_vec,
     proj_w, proj_b) = pack_params(
        params, channels=C, condition_channels=Cc, kernel_size=K,
        n_stack=n_stack, n_stack_in_stack=n_stack_in_stack, num_heads=num_heads)

    # batch-folded activations
    x_flat = x.reshape(BT, C).astype(jnp.float32)
    prompts_flat = speech_prompts.reshape(BTp, Cc).astype(jnp.float32)
    m_bt = masks[:, :, 0].astype(jnp.float32)                  # [B, T]
    mask_row = m_bt.reshape(1, BT)                             # lane-dense row

    # Per-tap combined masks: time mask shifted to the tap position AND zeros
    # for conv 'same' boundaries / cross-batch rows of the in-kernel roll.
    t_idx = jnp.arange(T)
    tap_rows = []
    for j in range(K):
        d = j - pad
        valid = ((t_idx + d >= 0) & (t_idx + d < T)).astype(jnp.float32)
        tap_rows.append((jnp.roll(m_bt, -d, axis=1) * valid[None, :]).reshape(BT, 1))
    tapmask = jnp.stack(tap_rows, axis=0).astype(jnp.float32)  # [K, BT, 1]

    # Block-diagonal attention bias so the folded batch never attends across
    # batch boundaries (reference applies no other attention mask).
    rb = jnp.repeat(jnp.arange(B), T)
    cb = jnp.repeat(jnp.arange(B), Tp)
    attn_bias = jnp.where(rb[:, None] == cb[None, :], 0.0, -1e9).astype(jnp.float32)

    kernel = functools.partial(
        duration_kernel,
        n_stack=n_stack, n_stack_in_stack=n_stack_in_stack,
        num_heads=num_heads, kernel_size=K, ln_eps=ln_eps,
        use_pre=(C != Cc))

    out = pl.pallas_call(
        kernel,
        out_shape=jax.ShapeDtypeStruct((1, BT), jnp.float32),
        compiler_params=pltpu.CompilerParams(
            vmem_limit_bytes=32 * 1024 * 1024),
    )(x_flat, tapmask, mask_row, prompts_flat, attn_bias,
      pre_w, pre_b, conv_w, layer_vec, qkv_w, qkv_b, ow_t, stack_vec,
      proj_w, proj_b)

    return out.reshape(B, T)


def init_params(key, channels, condition_channels, kernel_size, n_stack,
                n_stack_in_stack):
    C, Cc, K = channels, condition_channels, kernel_size
    L, S = n_stack * n_stack_in_stack, n_stack
    keys = jax.random.split(key, 8)
    scale = 0.1
    params = {
        # pre_attention: Conv1d(Cc, C, 1) -> stored as [Cc, C]
        "pre_w": scale * jax.random.normal(keys[0], (Cc, C), jnp.float32),
        "pre_b": jnp.zeros((1, C), jnp.float32),
        # conv blocks: Conv1d(C, C, K) -> stored as [L, K, Cin, Cout]
        "conv_w": scale * jax.random.normal(keys[1], (L, K, C, C), jnp.float32),
        "conv_b": jnp.zeros((L, C), jnp.float32),
        "ln_g": jnp.ones((L, C), jnp.float32),
        "ln_b": jnp.zeros((L, C), jnp.float32),
        # attention 1x1 convs per stack: stored as [S, Cin, Cout]
        "qw": scale * jax.random.normal(keys[2], (S, C, C), jnp.float32),
        "qb": jnp.zeros((S, C), jnp.float32),
        "kw": scale * jax.random.normal(keys[3], (S, C, C), jnp.float32),
        "kb": jnp.zeros((S, C), jnp.float32),
        "vw": scale * jax.random.normal(keys[4], (S, C, C), jnp.float32),
        "vb": jnp.zeros((S, C), jnp.float32),
        "ow": scale * jax.random.normal(keys[5], (S, C, C), jnp.float32),
        "ob": jnp.zeros((S, C), jnp.float32),
        # post-attention LayerNorm per stack
        "ng": jnp.ones((S, C), jnp.float32),
        "nb": jnp.zeros((S, C), jnp.float32),
        # project: Conv1d(C, 1, K) -> stored as [K, C]
        "proj_w": scale * jax.random.normal(keys[6], (K, C), jnp.float32),
        "proj_b": jnp.zeros((1, 1), jnp.float32),
    }
    return params


if __name__ == "__main__":
    # module hyper-params
    channels = 32
    condition_channels = 48      # != channels -> use_pre_attention = True
    kernel_size = 3
    n_stack = 2
    n_stack_in_stack = 2
    attention_num_head = 2
    # shapes
    B, T, Tp = 2, 16, 8

    key = jax.random.PRNGKey(0)
    k_x, k_p, k_w = jax.random.split(key, 3)

    x = jax.random.normal(k_x, (B, T, channels), jnp.float32)
    speech_prompts = jax.random.normal(k_p, (B, Tp, condition_channels), jnp.float32)
    # masks: [B, T, 1] (PyTorch layout is [B, 1, T]); second sequence padded at 12
    lengths = jnp.array([T, 12])
    masks = (jnp.arange(T)[None, :] < lengths[:, None]).astype(jnp.float32)[:, :, None]

    params = init_params(k_w, channels, condition_channels, kernel_size,
                         n_stack, n_stack_in_stack)

    durations = duration_predictor(
        x, masks, speech_prompts, params,
        kernel_size=kernel_size, n_stack=n_stack,
        n_stack_in_stack=n_stack_in_stack, num_heads=attention_num_head)

    durations = jax.block_until_ready(durations)
    assert durations.shape == (B, T)
    assert bool(jnp.all(jnp.isfinite(durations)))
    assert bool(jnp.all(durations >= 0.0))   # softplus output is non-negative
    print("KERNEL_OK")
</pallas_src>

<mosaic_0001>
module attributes {stable_mosaic.version = 11 : i64} {
  func.func @duration_kernel(%arg0: memref<32x32xf32, #tpu.memory_space<vmem>>, %arg1: memref<3x32x1xf32, #tpu.memory_space<vmem>>, %arg2: memref<1x32xf32, #tpu.memory_space<vmem>>, %arg3: memref<16x48xf32, #tpu.memory_space<vmem>>, %arg4: memref<32x16xf32, #tpu.memory_space<vmem>>, %arg5: memref<48x32xbf16, #tpu.memory_space<vmem>>, %arg6: memref<1x32xf32, #tpu.memory_space<vmem>>, %arg7: memref<4x3x32x32xbf16, #tpu.memory_space<vmem>>, %arg8: memref<4x3x32xf32, #tpu.memory_space<vmem>>, %arg9: memref<2x3x32x32xbf16, #tpu.memory_space<vmem>>, %arg10: memref<2x3x1x32xf32, #tpu.memory_space<vmem>>, %arg11: memref<2x2x32x16xbf16, #tpu.memory_space<vmem>>, %arg12: memref<2x3x32xf32, #tpu.memory_space<vmem>>, %arg13: memref<3x1x32xbf16, #tpu.memory_space<vmem>>, %arg14: memref<1x1xf32, #tpu.memory_space<vmem>>, %arg15: memref<1x32xf32, #tpu.memory_space<vmem>>) attributes {dimension_semantics = [], scalar_prefetch = 0 : i64, scratch_operands = 0 : i64, tpu.core_type = #tpu.core_type<tc>} {
    %c0 = arith.constant 0 : index
    %c0_0 = arith.constant 0 : index
    %0 = vector.load %arg0[%c0, %c0_0] : memref<32x32xf32, #tpu.memory_space<vmem>>, vector<32x32xf32>
    %c0_1 = arith.constant 0 : index
    %c0_2 = arith.constant 0 : index
    %c0_3 = arith.constant 0 : index
    %1 = vector.load %arg1[%c0_1, %c0_2, %c0_3] : memref<3x32x1xf32, #tpu.memory_space<vmem>>, vector<1x32x1xf32>
    %2 = vector.shape_cast %1 : vector<1x32x1xf32> to vector<32x1xf32>
    %3 = vector.shape_cast %2 : vector<32x1xf32> to vector<32x1xf32>
    %4 = vector.broadcast %3 : vector<32x1xf32> to vector<32x32xf32>
    %c1 = arith.constant 1 : index
    %c0_4 = arith.constant 0 : index
    %c0_5 = arith.constant 0 : index
    %5 = vector.load %arg1[%c1, %c0_4, %c0_5] : memref<3x32x1xf32, #tpu.memory_space<vmem>>, vector<1x32x1xf32>
    %6 = vector.shape_cast %5 : vector<1x32x1xf32> to vector<32x1xf32>
    %7 = vector.shape_cast %6 : vector<32x1xf32> to vector<32x1xf32>
    %8 = vector.broadcast %7 : vector<32x1xf32> to vector<32x32xf32>
    %c2 = arith.constant 2 : index
    %c0_6 = arith.constant 0 : index
    %c0_7 = arith.constant 0 : index
    %9 = vector.load %arg1[%c2, %c0_6, %c0_7] : memref<3x32x1xf32, #tpu.memory_space<vmem>>, vector<1x32x1xf32>
    %10 = vector.shape_cast %9 : vector<1x32x1xf32> to vector<32x1xf32>
    %11 = vector.shape_cast %10 : vector<32x1xf32> to vector<32x1xf32>
    %12 = vector.broadcast %11 : vector<32x1xf32> to vector<32x32xf32>
    %c0_8 = arith.constant 0 : index
    %c0_9 = arith.constant 0 : index
    %13 = vector.load %arg4[%c0_8, %c0_9] : memref<32x16xf32, #tpu.memory_space<vmem>>, vector<32x16xf32>
    %c0_10 = arith.constant 0 : index
    %c0_11 = arith.constant 0 : index
    %14 = vector.load %arg3[%c0_10, %c0_11] : memref<16x48xf32, #tpu.memory_space<vmem>>, vector<16x48xf32>
    %15 = arith.truncf %14 : vector<16x48xf32> to vector<16x48xbf16>
    %c0_12 = arith.constant 0 : index
    %c0_13 = arith.constant 0 : index
    %16 = vector.load %arg5[%c0_12, %c0_13] : memref<48x32xbf16, #tpu.memory_space<vmem>>, vector<48x32xbf16>
    %cst = arith.constant dense<0.000000e+00> : vector<16x32xf32>
    %17 = tpu.matmul %15, %16, %cst {dimension_numbers = #tpu.dot_dimension_numbers<[1], [0], [0], [1], [0, 0, 1, 1], [], []>} : vector<16x48xbf16>, vector<48x32xbf16>, vector<16x32xf32> -> vector<16x32xf32>
    %c0_14 = arith.constant 0 : index
    %c0_15 = arith.constant 0 : index
    %18 = vector.load %arg6[%c0_14, %c0_15] : memref<1x32xf32, #tpu.memory_space<vmem>>, vector<1x32xf32>
    %19 = vector.broadcast %18 : vector<1x32xf32> to vector<16x32xf32>
    %20 = arith.addf %17, %19 : vector<16x32xf32>
    %21 = arith.truncf %20 : vector<16x32xf32> to vector<16x32xbf16>
    %c1_i32 = arith.constant 1 : i32
    %22 = tpu.dynamic_rotate %0 by %c1_i32 dim 0 : vector<32x32xf32>, i32 -> vector<32x32xf32>
    %23 = arith.mulf %22, %4 : vector<32x32xf32>
    %24 = arith.truncf %23 : vector<32x32xf32> to vector<32x32xbf16>
    %25 = arith.mulf %0, %8 : vector<32x32xf32>
    %26 = arith.truncf %25 : vector<32x32xf32> to vector<32x32xbf16>
    %c31_i32 = arith.constant 31 : i32
    %27 = tpu.dynamic_rotate %0 by %c31_i32 dim 0 : vector<32x32xf32>, i32 -> vector<32x32xf32>
    %28 = arith.mulf %27, %12 : vector<32x32xf32>
    %29 = arith.truncf %28 : vector<32x32xf32> to vector<32x32xbf16>
    %c0_16 = arith.constant 0 : index
    %c0_17 = arith.constant 0 : index
    %c0_18 = arith.constant 0 : index
    %30 = vector.load %arg8[%c0_16, %c0_17, %c0_18] : memref<4x3x32xf32, #tpu.memory_space<vmem>>, vector<1x3x32xf32>
    %31 = vector.shape_cast %30 : vector<1x3x32xf32> to vector<3x32xf32>
    %32 = vector.extract_strided_slice %31 {offsets = [0, 0], sizes = [1, 32], strides = [1, 1]} : vector<3x32xf32> to vector<1x32xf32>
    %c0_19 = arith.constant 0 : index
    %c0_20 = arith.constant 0 : index
    %c0_21 = arith.constant 0 : index
    %c0_22 = arith.constant 0 : index
    %33 = vector.load %arg7[%c0_19, %c0_20, %c0_21, %c0_22] : memref<4x3x32x32xbf16, #tpu.memory_space<vmem>>, vector<1x1x32x32xbf16>
    %34 = vector.shape_cast %33 : vector<1x1x32x32xbf16> to vector<32x32xbf16>
    %cst_23 = arith.constant dense<0.000000e+00> : vector<32x32xf32>
    %35 = tpu.matmul %24, %34, %cst_23 {dimension_numbers = #tpu.dot_dimension_numbers<[1], [0], [0], [1], [0, 0, 1, 1], [], []>} : vector<32x32xbf16>, vector<32x32xbf16>, vector<32x32xf32> -> vector<32x32xf32>
    %36 = vector.broadcast %32 : vector<1x32xf32> to vector<32x32xf32>
    %37 = arith.addf %36, %35 : vector<32x32xf32>
    %c0_24 = arith.constant 0 : index
    %c1_25 = arith.constant 1 : index
    %c0_26 = arith.constant 0 : index
    %c0_27 = arith.constant 0 : index
    %38 = vector.load %arg7[%c0_24, %c1_25, %c0_26, %c0_27] : memref<4x3x32x32xbf16, #tpu.memory_space<vmem>>, vector<1x1x32x32xbf16>
    %39 = vector.shape_cast %38 : vector<1x1x32x32xbf16> to vector<32x32xbf16>
    %cst_28 = arith.constant dense<0.000000e+00> : vector<32x32xf32>
    %40 = tpu.matmul %26, %39, %cst_28 {dimension_numbers = #tpu.dot_dimension_numbers<[1], [0], [0], [1], [0, 0, 1, 1], [], []>} : vector<32x32xbf16>, vector<32x32xbf16>, vector<32x32xf32> -> vector<32x32xf32>
    %41 = arith.addf %37, %40 : vector<32x32xf32>
    %c0_29 = arith.constant 0 : index
    %c2_30 = arith.constant 2 : index
    %c0_31 = arith.constant 0 : index
    %c0_32 = arith.constant 0 : index
    %42 = vector.load %arg7[%c0_29, %c2_30, %c0_31, %c0_32] : memref<4x3x32x32xbf16, #tpu.memory_space<vmem>>, vector<1x1x32x32xbf16>
    %43 = vector.shape_cast %42 : vector<1x1x32x32xbf16> to vector<32x32xbf16>
    %cst_33 = arith.constant dense<0.000000e+00> : vector<32x32xf32>
    %44 = tpu.matmul %29, %43, %cst_33 {dimension_numbers = #tpu.dot_dimension_numbers<[1], [0], [0], [1], [0, 0, 1, 1], [], []>} : vector<32x32xbf16>, vector<32x32xbf16>, vector<32x32xf32> -> vector<32x32xf32>
    %45 = arith.addf %41, %44 : vector<32x32xf32>
    %46 = vector.extract_strided_slice %31 {offsets = [1, 0], sizes = [1, 32], strides = [1, 1]} : vector<3x32xf32> to vector<1x32xf32>
    %47 = vector.extract_strided_slice %31 {offsets = [2, 0], sizes = [1, 32], strides = [1, 1]} : vector<3x32xf32> to vector<1x32xf32>
    %cst_34 = arith.constant dense<0.000000e+00> : vector<32xf32>
    %48 = vector.multi_reduction <add>, %45, %cst_34 [1] : vector<32x32xf32> to vector<32xf32>
    %49 = vector.shape_cast %48 : vector<32xf32> to vector<32x1xf32>
    %cst_35 = arith.constant 3.200000e+01 : f32
    %50 = vector.broadcast %cst_35 : f32 to vector<32x1xf32>
    %51 = arith.divf %49, %50 : vector<32x1xf32>
    %52 = arith.mulf %45, %45 : vector<32x32xf32>
    %cst_36 = arith.constant dense<0.000000e+00> : vector<32xf32>
    %53 = vector.multi_reduction <add>, %52, %cst_36 [1] : vector<32x32xf32> to vector<32xf32>
    %54 = vector.shape_cast %53 : vector<32xf32> to vector<32x1xf32>
    %cst_37 = arith.constant 3.200000e+01 : f32
    %55 = vector.broadcast %cst_37 : f32 to vector<32x1xf32>
    %56 = arith.divf %54, %55 : vector<32x1xf32>
    %57 = arith.mulf %51, %51 : vector<32x1xf32>
    %58 = arith.subf %56, %57 : vector<32x1xf32>
    %cst_38 = arith.constant 0.000000e+00 : f32
    %59 = vector.broadcast %cst_38 : f32 to vector<32x1xf32>
    %60 = arith.maximumf %58, %59 : vector<32x1xf32>
    %61 = vector.broadcast %51 : vector<32x1xf32> to vector<32x32xf32>
    %62 = arith.subf %45, %61 : vector<32x32xf32>
    %cst_39 = arith.constant 9.99999974E-6 : f32
    %63 = vector.broadcast %cst_39 : f32 to vector<32x1xf32>
    %64 = arith.addf %60, %63 : vector<32x1xf32>
    %65 = math.rsqrt %64 : vector<32x1xf32>
    %66 = vector.broadcast %65 : vector<32x1xf32> to vector<32x32xf32>
    %67 = arith.mulf %62, %66 : vector<32x32xf32>
    %68 = vector.broadcast %46 : vector<1x32xf32> to vector<32x32xf32>
    %69 = arith.mulf %67, %68 : vector<32x32xf32>
    %70 = vector.broadcast %47 : vector<1x32xf32> to vector<32x32xf32>
    %71 = arith.addf %69, %70 : vector<32x32xf32>
    %cst_40 = arith.constant 0.000000e+00 : f32
    %72 = vector.broadcast %cst_40 : f32 to vector<32x32xf32>
    %73 = arith.maximumf %71, %72 : vector<32x32xf32>
    %74 = arith.addf %73, %0 : vector<32x32xf32>
    %c1_i32_41 = arith.constant 1 : i32
    %75 = tpu.dynamic_rotate %74 by %c1_i32_41 dim 0 : vector<32x32xf32>, i32 -> vector<32x32xf32>
    %76 = arith.mulf %75, %4 : vector<32x32xf32>
    %77 = arith.truncf %76 : vector<32x32xf32> to vector<32x32xbf16>
    %78 = arith.mulf %74, %8 : vector<32x32xf32>
    %79 = arith.truncf %78 : vector<32x32xf32> to vector<32x32xbf16>
    %c31_i32_42 = arith.constant 31 : i32
    %80 = tpu.dynamic_rotate %74 by %c31_i32_42 dim 0 : vector<32x32xf32>, i32 -> vector<32x32xf32>
    %81 = arith.mulf %80, %12 : vector<32x32xf32>
    %82 = arith.truncf %81 : vector<32x32xf32> to vector<32x32xbf16>
    %c1_43 = arith.constant 1 : index
    %c0_44 = arith.constant 0 : index
    %c0_45 = arith.constant 0 : index
    %83 = vector.load %arg8[%c1_43, %c0_44, %c0_45] : memref<4x3x32xf32, #tpu.memory_space<vmem>>, vector<1x3x32xf32>
    %84 = vector.shape_cast %83 : vector<1x3x32xf32> to vector<3x32xf32>
    %85 = vector.extract_strided_slice %84 {offsets = [0, 0], sizes = [1, 32], strides = [1, 1]} : vector<3x32xf32> to vector<1x32xf32>
    %c1_46 = arith.constant 1 : index
    %c0_47 = arith.constant 0 : index
    %c0_48 = arith.constant 0 : index
    %c0_49 = arith.constant 0 : index
    %86 = vector.load %arg7[%c1_46, %c0_47, %c0_48, %c0_49] : memref<4x3x32x32xbf16, #tpu.memory_space<vmem>>, vector<1x1x32x32xbf16>
    %87 = vector.shape_cast %86 : vector<1x1x32x32xbf16> to vector<32x32xbf16>
    %cst_50 = arith.constant dense<0.000000e+00> : vector<32x32xf32>
    %88 = tpu.matmul %77, %87, %cst_50 {dimension_numbers = #tpu.dot_dimension_numbers<[1], [0], [0], [1], [0, 0, 1, 1], [], []>} : vector<32x32xbf16>, vector<32x32xbf16>, vector<32x32xf32> -> vector<32x32xf32>
    %89 = vector.broadcast %85 : vector<1x32xf32> to vector<32x32xf32>
    %90 = arith.addf %89, %88 : vector<32x32xf32>
    %c1_51 = arith.constant 1 : index
    %c1_52 = arith.constant 1 : index
    %c0_53 = arith.constant 0 : index
    %c0_54 = arith.constant 0 : index
    %91 = vector.load %arg7[%c1_51, %c1_52, %c0_53, %c0_54] : memref<4x3x32x32xbf16, #tpu.memory_space<vmem>>, vector<1x1x32x32xbf16>
    %92 = vector.shape_cast %91 : vector<1x1x32x32xbf16> to vector<32x32xbf16>
    %cst_55 = arith.constant dense<0.000000e+00> : vector<32x32xf32>
    %93 = tpu.matmul %79, %92, %cst_55 {dimension_numbers = #tpu.dot_dimension_numbers<[1], [0], [0], [1], [0, 0, 1, 1], [], []>} : vector<32x32xbf16>, vector<32x32xbf16>, vector<32x32xf32> -> vector<32x32xf32>
    %94 = arith.addf %90, %93 : vector<32x32xf32>
    %c1_56 = arith.constant 1 : index
    %c2_57 = arith.constant 2 : index
    %c0_58 = arith.constant 0 : index
    %c0_59 = arith.constant 0 : index
    %95 = vector.load %arg7[%c1_56, %c2_57, %c0_58, %c0_59] : memref<4x3x32x32xbf16, #tpu.memory_space<vmem>>, vector<1x1x32x32xbf16>
    %96 = vector.shape_cast %95 : vector<1x1x32x32xbf16> to vector<32x32xbf16>
    %cst_60 = arith.constant dense<0.000000e+00> : vector<32x32xf32>
    %97 = tpu.matmul %82, %96, %cst_60 {dimension_numbers = #tpu.dot_dimension_numbers<[1], [0], [0], [1], [0, 0, 1, 1], [], []>} : vector<32x32xbf16>, vector<32x32xbf16>, vector<32x32xf32> -> vector<32x32xf32>
    %98 = arith.addf %94, %97 : vector<32x32xf32>
    %99 = vector.extract_strided_slice %84 {offsets = [1, 0], sizes = [1, 32], strides = [1, 1]} : vector<3x32xf32> to vector<1x32xf32>
    %100 = vector.extract_strided_slice %84 {offsets = [2, 0], sizes = [1, 32], strides = [1, 1]} : vector<3x32xf32> to vector<1x32xf32>
    %cst_61 = arith.constant dense<0.000000e+00> : vector<32xf32>
    %101 = vector.multi_reduction <add>, %98, %cst_61 [1] : vector<32x32xf32> to vector<32xf32>
    %102 = vector.shape_cast %101 : vector<32xf32> to vector<32x1xf32>
    %cst_62 = arith.constant 3.200000e+01 : f32
    %103 = vector.broadcast %cst_62 : f32 to vector<32x1xf32>
    %104 = arith.divf %102, %103 : vector<32x1xf32>
    %105 = arith.mulf %98, %98 : vector<32x32xf32>
    %cst_63 = arith.constant dense<0.000000e+00> : vector<32xf32>
    %106 = vector.multi_reduction <add>, %105, %cst_63 [1] : vector<32x32xf32> to vector<32xf32>
    %107 = vector.shape_cast %106 : vector<32xf32> to vector<32x1xf32>
    %cst_64 = arith.constant 3.200000e+01 : f32
    %108 = vector.broadcast %cst_64 : f32 to vector<32x1xf32>
    %109 = arith.divf %107, %108 : vector<32x1xf32>
    %110 = arith.mulf %104, %104 : vector<32x1xf32>
    %111 = arith.subf %109, %110 : vector<32x1xf32>
    %cst_65 = arith.constant 0.000000e+00 : f32
    %112 = vector.broadcast %cst_65 : f32 to vector<32x1xf32>
    %113 = arith.maximumf %111, %112 : vector<32x1xf32>
    %114 = vector.broadcast %104 : vector<32x1xf32> to vector<32x32xf32>
    %115 = arith.subf %98, %114 : vector<32x32xf32>
    %cst_66 = arith.constant 9.99999974E-6 : f32
    %116 = vector.broadcast %cst_66 : f32 to vector<32x1xf32>
    %117 = arith.addf %113, %116 : vector<32x1xf32>
    %118 = math.rsqrt %117 : vector<32x1xf32>
    %119 = vector.broadcast %118 : vector<32x1xf32> to vector<32x32xf32>
    %120 = arith.mulf %115, %119 : vector<32x32xf32>
    %121 = vector.broadcast %99 : vector<1x32xf32> to vector<32x32xf32>
    %122 = arith.mulf %120, %121 : vector<32x32xf32>
    %123 = vector.broadcast %100 : vector<1x32xf32> to vector<32x32xf32>
    %124 = arith.addf %122, %123 : vector<32x32xf32>
    %cst_67 = arith.constant 0.000000e+00 : f32
    %125 = vector.broadcast %cst_67 : f32 to vector<32x32xf32>
    %126 = arith.maximumf %124, %125 : vector<32x32xf32>
    %127 = arith.addf %126, %74 : vector<32x32xf32>
    %128 = arith.truncf %127 : vector<32x32xf32> to vector<32x32xbf16>
    %c0_68 = arith.constant 0 : index
    %c0_69 = arith.constant 0 : index
    %c0_70 = arith.constant 0 : index
    %c0_71 = arith.constant 0 : index
    %129 = vector.load %arg9[%c0_68, %c0_69, %c0_70, %c0_71] : memref<2x3x32x32xbf16, #tpu.memory_space<vmem>>, vector<1x1x32x32xbf16>
    %130 = vector.shape_cast %129 : vector<1x1x32x32xbf16> to vector<32x32xbf16>
    %cst_72 = arith.constant dense<0.000000e+00> : vector<32x32xf32>
    %131 = tpu.matmul %128, %130, %cst_72 {dimension_numbers = #tpu.dot_dimension_numbers<[1], [0], [0], [1], [0, 0, 1, 1], [], []>} : vector<32x32xbf16>, vector<32x32xbf16>, vector<32x32xf32> -> vector<32x32xf32>
    %c0_73 = arith.constant 0 : index
    %c0_74 = arith.constant 0 : index
    %c0_75 = arith.constant 0 : index
    %c0_76 = arith.constant 0 : index
    %132 = vector.load %arg10[%c0_73, %c0_74, %c0_75, %c0_76] : memref<2x3x1x32xf32, #tpu.memory_space<vmem>>, vector<1x1x1x32xf32>
    %133 = vector.shape_cast %132 : vector<1x1x1x32xf32> to vector<1x32xf32>
    %134 = vector.broadcast %133 : vector<1x32xf32> to vector<32x32xf32>
    %135 = arith.addf %131, %134 : vector<32x32xf32>
    %c0_77 = arith.constant 0 : index
    %c1_78 = arith.constant 1 : index
    %c0_79 = arith.constant 0 : index
    %c0_80 = arith.constant 0 : index
    %136 = vector.load %arg9[%c0_77, %c1_78, %c0_79, %c0_80] : memref<2x3x32x32xbf16, #tpu.memory_space<vmem>>, vector<1x1x32x32xbf16>
    %137 = vector.shape_cast %136 : vector<1x1x32x32xbf16> to vector<32x32xbf16>
    %cst_81 = arith.constant dense<0.000000e+00> : vector<16x32xf32>
    %138 = tpu.matmul %21, %137, %cst_81 {dimension_numbers = #tpu.dot_dimension_numbers<[1], [0], [0], [1], [0, 0, 1, 1], [], []>} : vector<16x32xbf16>, vector<32x32xbf16>, vector<16x32xf32> -> vector<16x32xf32>
    %c0_82 = arith.constant 0 : index
    %c1_83 = arith.constant 1 : index
    %c0_84 = arith.constant 0 : index
    %c0_85 = arith.constant 0 : index
    %139 = vector.load %arg10[%c0_82, %c1_83, %c0_84, %c0_85] : memref<2x3x1x32xf32, #tpu.memory_space<vmem>>, vector<1x1x1x32xf32>
    %140 = vector.shape_cast %139 : vector<1x1x1x32xf32> to vector<1x32xf32>
    %141 = vector.broadcast %140 : vector<1x32xf32> to vector<16x32xf32>
    %142 = arith.addf %138, %141 : vector<16x32xf32>
    %c0_86 = arith.constant 0 : index
    %c2_87 = arith.constant 2 : index
    %c0_88 = arith.constant 0 : index
    %c0_89 = arith.constant 0 : index
    %143 = vector.load %arg9[%c0_86, %c2_87, %c0_88, %c0_89] : memref<2x3x32x32xbf16, #tpu.memory_space<vmem>>, vector<1x1x32x32xbf16>
    %144 = vector.shape_cast %143 : vector<1x1x32x32xbf16> to vector<32x32xbf16>
    %cst_90 = arith.constant dense<0.000000e+00> : vector<16x32xf32>
    %145 = tpu.matmul %21, %144, %cst_90 {dimension_numbers = #tpu.dot_dimension_numbers<[1], [0], [0], [1], [0, 0, 1, 1], [], []>} : vector<16x32xbf16>, vector<32x32xbf16>, vector<16x32xf32> -> vector<16x32xf32>
    %c0_91 = arith.constant 0 : index
    %c2_92 = arith.constant 2 : index
    %c0_93 = arith.constant 0 : index
    %c0_94 = arith.constant 0 : index
    %146 = vector.load %arg10[%c0_91, %c2_92, %c0_93, %c0_94] : memref<2x3x1x32xf32, #tpu.memory_space<vmem>>, vector<1x1x1x32xf32>
    %147 = vector.shape_cast %146 : vector<1x1x1x32xf32> to vector<1x32xf32>
    %148 = vector.broadcast %147 : vector<1x32xf32> to vector<16x32xf32>
    %149 = arith.addf %145, %148 : vector<16x32xf32>
    %150 = arith.truncf %135 : vector<32x32xf32> to vector<32x32xbf16>
    %151 = arith.truncf %142 : vector<16x32xf32> to vector<16x32xbf16>
    %152 = arith.truncf %149 : vector<16x32xf32> to vector<16x32xbf16>
    %153 = vector.extract_strided_slice %150 {offsets = [0, 0], sizes = [32, 16], strides = [1, 1]} : vector<32x32xbf16> to vector<32x16xbf16>
    %154 = vector.extract_strided_slice %151 {offsets = [0, 0], sizes = [16, 16], strides = [1, 1]} : vector<16x32xbf16> to vector<16x16xbf16>
    %cst_95 = arith.constant dense<0.000000e+00> : vector<32x16xf32>
    %155 = tpu.matmul %153, %154, %cst_95 {dimension_numbers = #tpu.dot_dimension_numbers<[1], [1], [0], [0], [0, 0, 1, 0], [], []>} : vector<32x16xbf16>, vector<16x16xbf16>, vector<32x16xf32> -> vector<32x16xf32>
    %156 = arith.addf %155, %13 : vector<32x16xf32>
    %cst_96 = arith.constant dense<0xFF800000> : vector<32xf32>
    %157 = vector.multi_reduction <maximumf>, %156, %cst_96 [1] : vector<32x16xf32> to vector<32xf32>
    %158 = vector.shape_cast %157 : vector<32xf32> to vector<32x1xf32>
    %159 = vector.broadcast %158 : vector<32x1xf32> to vector<32x16xf32>
    %160 = arith.subf %156, %159 : vector<32x16xf32>
    %161 = math.exp %160 : vector<32x16xf32>
    %cst_97 = arith.constant dense<0.000000e+00> : vector<32xf32>
    %162 = vector.multi_reduction <add>, %161, %cst_97 [1] : vector<32x16xf32> to vector<32xf32>
    %163 = vector.shape_cast %162 : vector<32xf32> to vector<32x1xf32>
    %164 = tpu.reciprocal %163 {approx = true} : vector<32x1xf32> -> vector<32x1xf32>
    %165 = vector.broadcast %164 : vector<32x1xf32> to vector<32x16xf32>
    %166 = arith.mulf %161, %165 : vector<32x16xf32>
    %167 = arith.truncf %166 : vector<32x16xf32> to vector<32x16xbf16>
    %168 = vector.extract_strided_slice %152 {offsets = [0, 0], sizes = [16, 16], strides = [1, 1]} : vector<16x32xbf16> to vector<16x16xbf16>
    %cst_98 = arith.constant dense<0.000000e+00> : vector<32x16xf32>
    %169 = tpu.matmul %167, %168, %cst_98 {dimension_numbers = #tpu.dot_dimension_numbers<[1], [0], [0], [1], [0, 0, 1, 1], [], []>} : vector<32x16xbf16>, vector<16x16xbf16>, vector<32x16xf32> -> vector<32x16xf32>
    %170 = arith.truncf %169 : vector<32x16xf32> to vector<32x16xbf16>
    %c0_99 = arith.constant 0 : index
    %c0_100 = arith.constant 0 : index
    %c0_101 = arith.constant 0 : index
    %c0_102 = arith.constant 0 : index
    %171 = vector.load %arg11[%c0_99, %c0_100, %c0_101, %c0_102] : memref<2x2x32x16xbf16, #tpu.memory_space<vmem>>, vector<1x1x32x16xbf16>
    %172 = vector.shape_cast %171 : vector<1x1x32x16xbf16> to vector<32x16xbf16>
    %cst_103 = arith.constant dense<0.000000e+00> : vector<32x32xf32>
    %173 = tpu.matmul %170, %172, %cst_103 {dimension_numbers = #tpu.dot_dimension_numbers<[1], [1], [0], [0], [0, 0, 1, 0], [], []>} : vector<32x16xbf16>, vector<32x16xbf16>, vector<32x32xf32> -> vector<32x32xf32>
    %174 = vector.extract_strided_slice %150 {offsets = [0, 16], sizes = [32, 16], strides = [1, 1]} : vector<32x32xbf16> to vector<32x16xbf16>
    %175 = vector.extract_strided_slice %151 {offsets = [0, 16], sizes = [16, 16], strides = [1, 1]} : vector<16x32xbf16> to vector<16x16xbf16>
    %cst_104 = arith.constant dense<0.000000e+00> : vector<32x16xf32>
    %176 = tpu.matmul %174, %175, %cst_104 {dimension_numbers = #tpu.dot_dimension_numbers<[1], [1], [0], [0], [0, 0, 1, 0], [], []>} : vector<32x16xbf16>, vector<16x16xbf16>, vector<32x16xf32> -> vector<32x16xf32>
    %177 = arith.addf %176, %13 : vector<32x16xf32>
    %cst_105 = arith.constant dense<0xFF800000> : vector<32xf32>
    %178 = vector.multi_reduction <maximumf>, %177, %cst_105 [1] : vector<32x16xf32> to vector<32xf32>
    %179 = vector.shape_cast %178 : vector<32xf32> to vector<32x1xf32>
    %180 = vector.broadcast %179 : vector<32x1xf32> to vector<32x16xf32>
    %181 = arith.subf %177, %180 : vector<32x16xf32>
    %182 = math.exp %181 : vector<32x16xf32>
    %cst_106 = arith.constant dense<0.000000e+00> : vector<32xf32>
    %183 = vector.multi_reduction <add>, %182, %cst_106 [1] : vector<32x16xf32> to vector<32xf32>
    %184 = vector.shape_cast %183 : vector<32xf32> to vector<32x1xf32>
    %185 = tpu.reciprocal %184 {approx = true} : vector<32x1xf32> -> vector<32x1xf32>
    %186 = vector.broadcast %185 : vector<32x1xf32> to vector<32x16xf32>
    %187 = arith.mulf %182, %186 : vector<32x16xf32>
    %188 = arith.truncf %187 : vector<32x16xf32> to vector<32x16xbf16>
    %189 = vector.extract_strided_slice %152 {offsets = [0, 16], sizes = [16, 16], strides = [1, 1]} : vector<16x32xbf16> to vector<16x16xbf16>
    %cst_107 = arith.constant dense<0.000000e+00> : vector<32x16xf32>
    %190 = tpu.matmul %188, %189, %cst_107 {dimension_numbers = #tpu.dot_dimension_numbers<[1], [0], [0], [1], [0, 0, 1, 1], [], []>} : vector<32x16xbf16>, vector<16x16xbf16>, vector<32x16xf32> -> vector<32x16xf32>
    %191 = arith.truncf %190 : vector<32x16xf32> to vector<32x16xbf16>
    %c0_108 = arith.constant 0 : index
    %c1_109 = arith.constant 1 : index
    %c0_110 = arith.constant 0 : index
    %c0_111 = arith.constant 0 : index
    %192 = vector.load %arg11[%c0_108, %c1_109, %c0_110, %c0_111] : memref<2x2x32x16xbf16, #tpu.memory_space<vmem>>, vector<1x1x32x16xbf16>
    %193 = vector.shape_cast %192 : vector<1x1x32x16xbf16> to vector<32x16xbf16>
    %cst_112 = arith.constant dense<0.000000e+00> : vector<32x32xf32>
    %194 = tpu.matmul %191, %193, %cst_112 {dimension_numbers = #tpu.dot_dimension_numbers<[1], [1], [0], [0], [0, 0, 1, 0], [], []>} : vector<32x16xbf16>, vector<32x16xbf16>, vector<32x32xf32> -> vector<32x32xf32>
    %195 = arith.addf %173, %194 : vector<32x32xf32>
    %c0_113 = arith.constant 0 : index
    %c0_114 = arith.constant 0 : index
    %c0_115 = arith.constant 0 : index
    %196 = vector.load %arg12[%c0_113, %c0_114, %c0_115] : memref<2x3x32xf32, #tpu.memory_space<vmem>>, vector<1x3x32xf32>
    %197 = vector.shape_cast %196 : vector<1x3x32xf32> to vector<3x32xf32>
    %198 = vector.extract_strided_slice %197 {offsets = [0, 0], sizes = [1, 32], strides = [1, 1]} : vector<3x32xf32> to vector<1x32xf32>
    %199 = vector.broadcast %198 : vector<1x32xf32> to vector<32x32xf32>
    %200 = arith.addf %195, %199 : vector<32x32xf32>
    %201 = arith.addf %200, %127 : vector<32x32xf32>
    %202 = vector.extract_strided_slice %197 {offsets = [1, 0], sizes = [1, 32], strides = [1, 1]} : vector<3x32xf32> to vector<1x32xf32>
    %203 = vector.extract_strided_slice %197 {offsets = [2, 0], sizes = [1, 32], strides = [1, 1]} : vector<3x32xf32> to vector<1x32xf32>
    %cst_116 = arith.constant dense<0.000000e+00> : vector<32xf32>
    %204 = vector.multi_reduction <add>, %201, %cst_116 [1] : vector<32x32xf32> to vector<32xf32>
    %205 = vector.shape_cast %204 : vector<32xf32> to vector<32x1xf32>
    %cst_117 = arith.constant 3.200000e+01 : f32
    %206 = vector.broadcast %cst_117 : f32 to vector<32x1xf32>
    %207 = arith.divf %205, %206 : vector<32x1xf32>
    %208 = arith.mulf %201, %201 : vector<32x32xf32>
    %cst_118 = arith.constant dense<0.000000e+00> : vector<32xf32>
    %209 = vector.multi_reduction <add>, %208, %cst_118 [1] : vector<32x32xf32> to vector<32xf32>
    %210 = vector.shape_cast %209 : vector<32xf32> to vector<32x1xf32>
    %cst_119 = arith.constant 3.200000e+01 : f32
    %211 = vector.broadcast %cst_119 : f32 to vector<32x1xf32>
    %212 = arith.divf %210, %211 : vector<32x1xf32>
    %213 = arith.mulf %207, %207 : vector<32x1xf32>
    %214 = arith.subf %212, %213 : vector<32x1xf32>
    %cst_120 = arith.constant 0.000000e+00 : f32
    %215 = vector.broadcast %cst_120 : f32 to vector<32x1xf32>
    %216 = arith.maximumf %214, %215 : vector<32x1xf32>
    %217 = vector.broadcast %207 : vector<32x1xf32> to vector<32x32xf32>
    %218 = arith.subf %201, %217 : vector<32x32xf32>
    %cst_121 = arith.constant 9.99999974E-6 : f32
    %219 = vector.broadcast %cst_121 : f32 to vector<32x1xf32>
    %220 = arith.addf %216, %219 : vector<32x1xf32>
    %221 = math.rsqrt %220 : vector<32x1xf32>
    %222 = vector.broadcast %221 : vector<32x1xf32> to vector<32x32xf32>
    %223 = arith.mulf %218, %222 : vector<32x32xf32>
    %224 = vector.broadcast %202 : vector<1x32xf32> to vector<32x32xf32>
    %225 = arith.mulf %223, %224 : vector<32x32xf32>
    %226 = vector.broadcast %203 : vector<1x32xf32> to vector<32x32xf32>
    %227 = arith.addf %225, %226 : vector<32x32xf32>
    %c1_i32_122 = arith.constant 1 : i32
    %228 = tpu.dynamic_rotate %227 by %c1_i32_122 dim 0 : vector<32x32xf32>, i32 -> vector<32x32xf32>
    %229 = arith.mulf %228, %4 : vector<32x32xf32>
    %230 = arith.truncf %229 : vector<32x32xf32> to vector<32x32xbf16>
    %231 = arith.mulf %227, %8 : vector<32x32xf32>
    %232 = arith.truncf %231 : vector<32x32xf32> to vector<32x32xbf16>
    %c31_i32_123 = arith.constant 31 : i32
    %233 = tpu.dynamic_rotate %227 by %c31_i32_123 dim 0 : vector<32x32xf32>, i32 -> vector<32x32xf32>
    %234 = arith.mulf %233, %12 : vector<32x32xf32>
    %235 = arith.truncf %234 : vector<32x32xf32> to vector<32x32xbf16>
    %c2_124 = arith.constant 2 : index
    %c0_125 = arith.constant 0 : index
    %c0_126 = arith.constant 0 : index
    %236 = vector.load %arg8[%c2_124, %c0_125, %c0_126] : memref<4x3x32xf32, #tpu.memory_space<vmem>>, vector<1x3x32xf32>
    %237 = vector.shape_cast %236 : vector<1x3x32xf32> to vector<3x32xf32>
    %238 = vector.extract_strided_slice %237 {offsets = [0, 0], sizes = [1, 32], strides = [1, 1]} : vector<3x32xf32> to vector<1x32xf32>
    %c2_127 = arith.constant 2 : index
    %c0_128 = arith.constant 0 : index
    %c0_129 = arith.constant 0 : index
    %c0_130 = arith.constant 0 : index
    %239 = vector.load %arg7[%c2_127, %c0_128, %c0_129, %c0_130] : memref<4x3x32x32xbf16, #tpu.memory_space<vmem>>, vector<1x1x32x32xbf16>
    %240 = vector.shape_cast %239 : vector<1x1x32x32xbf16> to vector<32x32xbf16>
    %cst_131 = arith.constant dense<0.000000e+00> : vector<32x32xf32>
    %241 = tpu.matmul %230, %240, %cst_131 {dimension_numbers = #tpu.dot_dimension_numbers<[1], [0], [0], [1], [0, 0, 1, 1], [], []>} : vector<32x32xbf16>, vector<32x32xbf16>, vector<32x32xf32> -> vector<32x32xf32>
    %242 = vector.broadcast %238 : vector<1x32xf32> to vector<32x32xf32>
    %243 = arith.addf %242, %241 : vector<32x32xf32>
    %c2_132 = arith.constant 2 : index
    %c1_133 = arith.constant 1 : index
    %c0_134 = arith.constant 0 : index
    %c0_135 = arith.constant 0 : index
    %244 = vector.load %arg7[%c2_132, %c1_133, %c0_134, %c0_135] : memref<4x3x32x32xbf16, #tpu.memory_space<vmem>>, vector<1x1x32x32xbf16>
    %245 = vector.shape_cast %244 : vector<1x1x32x32xbf16> to vector<32x32xbf16>
    %cst_136 = arith.constant dense<0.000000e+00> : vector<32x32xf32>
    %246 = tpu.matmul %232, %245, %cst_136 {dimension_numbers = #tpu.dot_dimension_numbers<[1], [0], [0], [1], [0, 0, 1, 1], [], []>} : vector<32x32xbf16>, vector<32x32xbf16>, vector<32x32xf32> -> vector<32x32xf32>
    %247 = arith.addf %243, %246 : vector<32x32xf32>
    %c2_137 = arith.constant 2 : index
    %c2_138 = arith.constant 2 : index
    %c0_139 = arith.constant 0 : index
    %c0_140 = arith.constant 0 : index
    %248 = vector.load %arg7[%c2_137, %c2_138, %c0_139, %c0_140] : memref<4x3x32x32xbf16, #tpu.memory_space<vmem>>, vector<1x1x32x32xbf16>
    %249 = vector.shape_cast %248 : vector<1x1x32x32xbf16> to vector<32x32xbf16>
    %cst_141 = arith.constant dense<0.000000e+00> : vector<32x32xf32>
    %250 = tpu.matmul %235, %249, %cst_141 {dimension_numbers = #tpu.dot_dimension_numbers<[1], [0], [0], [1], [0, 0, 1, 1], [], []>} : vector<32x32xbf16>, vector<32x32xbf16>, vector<32x32xf32> -> vector<32x32xf32>
    %251 = arith.addf %247, %250 : vector<32x32xf32>
    %252 = vector.extract_strided_slice %237 {offsets = [1, 0], sizes = [1, 32], strides = [1, 1]} : vector<3x32xf32> to vector<1x32xf32>
    %253 = vector.extract_strided_slice %237 {offsets = [2, 0], sizes = [1, 32], strides = [1, 1]} : vector<3x32xf32> to vector<1x32xf32>
    %cst_142 = arith.constant dense<0.000000e+00> : vector<32xf32>
    %254 = vector.multi_reduction <add>, %251, %cst_142 [1] : vector<32x32xf32> to vector<32xf32>
    %255 = vector.shape_cast %254 : vector<32xf32> to vector<32x1xf32>
    %cst_143 = arith.constant 3.200000e+01 : f32
    %256 = vector.broadcast %cst_143 : f32 to vector<32x1xf32>
    %257 = arith.divf %255, %256 : vector<32x1xf32>
    %258 = arith.mulf %251, %251 : vector<32x32xf32>
    %cst_144 = arith.constant dense<0.000000e+00> : vector<32xf32>
    %259 = vector.multi_reduction <add>, %258, %cst_144 [1] : vector<32x32xf32> to vector<32xf32>
    %260 = vector.shape_cast %259 : vector<32xf32> to vector<32x1xf32>
    %cst_145 = arith.constant 3.200000e+01 : f32
    %261 = vector.broadcast %cst_145 : f32 to vector<32x1xf32>
    %262 = arith.divf %260, %261 : vector<32x1xf32>
    %263 = arith.mulf %257, %257 : vector<32x1xf32>
    %264 = arith.subf %262, %263 : vector<32x1xf32>
    %cst_146 = arith.constant 0.000000e+00 : f32
    %265 = vector.broadcast %cst_146 : f32 to vector<32x1xf32>
    %266 = arith.maximumf %264, %265 : vector<32x1xf32>
    %267 = vector.broadcast %257 : vector<32x1xf32> to vector<32x32xf32>
    %268 = arith.subf %251, %267 : vector<32x32xf32>
    %cst_147 = arith.constant 9.99999974E-6 : f32
    %269 = vector.broadcast %cst_147 : f32 to vector<32x1xf32>
    %270 = arith.addf %266, %269 : vector<32x1xf32>
    %271 = math.rsqrt %270 : vector<32x1xf32>
    %272 = vector.broadcast %271 : vector<32x1xf32> to vector<32x32xf32>
    %273 = arith.mulf %268, %272 : vector<32x32xf32>
    %274 = vector.broadcast %252 : vector<1x32xf32> to vector<32x32xf32>
    %275 = arith.mulf %273, %274 : vector<32x32xf32>
    %276 = vector.broadcast %253 : vector<1x32xf32> to vector<32x32xf32>
    %277 = arith.addf %275, %276 : vector<32x32xf32>
    %cst_148 = arith.constant 0.000000e+00 : f32
    %278 = vector.broadcast %cst_148 : f32 to vector<32x32xf32>
    %279 = arith.maximumf %277, %278 : vector<32x32xf32>
    %280 = arith.addf %279, %227 : vector<32x32xf32>
    %c1_i32_149 = arith.constant 1 : i32
    %281 = tpu.dynamic_rotate %280 by %c1_i32_149 dim 0 : vector<32x32xf32>, i32 -> vector<32x32xf32>
    %282 = arith.mulf %281, %4 : vector<32x32xf32>
    %283 = arith.truncf %282 : vector<32x32xf32> to vector<32x32xbf16>
    %284 = arith.mulf %280, %8 : vector<32x32xf32>
    %285 = arith.truncf %284 : vector<32x32xf32> to vector<32x32xbf16>
    %c31_i32_150 = arith.constant 31 : i32
    %286 = tpu.dynamic_rotate %280 by %c31_i32_150 dim 0 : vector<32x32xf32>, i32 -> vector<32x32xf32>
    %287 = arith.mulf %286, %12 : vector<32x32xf32>
    %288 = arith.truncf %287 : vector<32x32xf32> to vector<32x32xbf16>
    %c3 = arith.constant 3 : index
    %c0_151 = arith.constant 0 : index
    %c0_152 = arith.constant 0 : index
    %289 = vector.load %arg8[%c3, %c0_151, %c0_152] : memref<4x3x32xf32, #tpu.memory_space<vmem>>, vector<1x3x32xf32>
    %290 = vector.shape_cast %289 : vector<1x3x32xf32> to vector<3x32xf32>
    %291 = vector.extract_strided_slice %290 {offsets = [0, 0], sizes = [1, 32], strides = [1, 1]} : vector<3x32xf32> to vector<1x32xf32>
    %c3_153 = arith.constant 3 : index
    %c0_154 = arith.constant 0 : index
    %c0_155 = arith.constant 0 : index
    %c0_156 = arith.constant 0 : index
    %292 = vector.load %arg7[%c3_153, %c0_154, %c0_155, %c0_156] : memref<4x3x32x32xbf16, #tpu.memory_space<vmem>>, vector<1x1x32x32xbf16>
    %293 = vector.shape_cast %292 : vector<1x1x32x32xbf16> to vector<32x32xbf16>
    %cst_157 = arith.constant dense<0.000000e+00> : vector<32x32xf32>
    %294 = tpu.matmul %283, %293, %cst_157 {dimension_numbers = #tpu.dot_dimension_numbers<[1], [0], [0], [1], [0, 0, 1, 1], [], []>} : vector<32x32xbf16>, vector<32x32xbf16>, vector<32x32xf32> -> vector<32x32xf32>
    %295 = vector.broadcast %291 : vector<1x32xf32> to vector<32x32xf32>
    %296 = arith.addf %295, %294 : vector<32x32xf32>
    %c3_158 = arith.constant 3 : index
    %c1_159 = arith.constant 1 : index
    %c0_160 = arith.constant 0 : index
    %c0_161 = arith.constant 0 : index
    %297 = vector.load %arg7[%c3_158, %c1_159, %c0_160, %c0_161] : memref<4x3x32x32xbf16, #tpu.memory_space<vmem>>, vector<1x1x32x32xbf16>
    %298 = vector.shape_cast %297 : vector<1x1x32x32xbf16> to vector<32x32xbf16>
    %cst_162 = arith.constant dense<0.000000e+00> : vector<32x32xf32>
    %299 = tpu.matmul %285, %298, %cst_162 {dimension_numbers = #tpu.dot_dimension_numbers<[1], [0], [0], [1], [0, 0, 1, 1], [], []>} : vector<32x32xbf16>, vector<32x32xbf16>, vector<32x32xf32> -> vector<32x32xf32>
    %300 = arith.addf %296, %299 : vector<32x32xf32>
    %c3_163 = arith.constant 3 : index
    %c2_164 = arith.constant 2 : index
    %c0_165 = arith.constant 0 : index
    %c0_166 = arith.constant 0 : index
    %301 = vector.load %arg7[%c3_163, %c2_164, %c0_165, %c0_166] : memref<4x3x32x32xbf16, #tpu.memory_space<vmem>>, vector<1x1x32x32xbf16>
    %302 = vector.shape_cast %301 : vector<1x1x32x32xbf16> to vector<32x32xbf16>
    %cst_167 = arith.constant dense<0.000000e+00> : vector<32x32xf32>
    %303 = tpu.matmul %288, %302, %cst_167 {dimension_numbers = #tpu.dot_dimension_numbers<[1], [0], [0], [1], [0, 0, 1, 1], [], []>} : vector<32x32xbf16>, vector<32x32xbf16>, vector<32x32xf32> -> vector<32x32xf32>
    %304 = arith.addf %300, %303 : vector<32x32xf32>
    %305 = vector.extract_strided_slice %290 {offsets = [1, 0], sizes = [1, 32], strides = [1, 1]} : vector<3x32xf32> to vector<1x32xf32>
    %306 = vector.extract_strided_slice %290 {offsets = [2, 0], sizes = [1, 32], strides = [1, 1]} : vector<3x32xf32> to vector<1x32xf32>
    %cst_168 = arith.constant dense<0.000000e+00> : vector<32xf32>
    %307 = vector.multi_reduction <add>, %304, %cst_168 [1] : vector<32x32xf32> to vector<32xf32>
    %308 = vector.shape_cast %307 : vector<32xf32> to vector<32x1xf32>
    %cst_169 = arith.constant 3.200000e+01 : f32
    %309 = vector.broadcast %cst_169 : f32 to vector<32x1xf32>
    %310 = arith.divf %308, %309 : vector<32x1xf32>
    %311 = arith.mulf %304, %304 : vector<32x32xf32>
    %cst_170 = arith.constant dense<0.000000e+00> : vector<32xf32>
    %312 = vector.multi_reduction <add>, %311, %cst_170 [1] : vector<32x32xf32> to vector<32xf32>
    %313 = vector.shape_cast %312 : vector<32xf32> to vector<32x1xf32>
    %cst_171 = arith.constant 3.200000e+01 : f32
    %314 = vector.broadcast %cst_171 : f32 to vector<32x1xf32>
    %315 = arith.divf %313, %314 : vector<32x1xf32>
    %316 = arith.mulf %310, %310 : vector<32x1xf32>
    %317 = arith.subf %315, %316 : vector<32x1xf32>
    %cst_172 = arith.constant 0.000000e+00 : f32
    %318 = vector.broadcast %cst_172 : f32 to vector<32x1xf32>
    %319 = arith.maximumf %317, %318 : vector<32x1xf32>
    %320 = vector.broadcast %310 : vector<32x1xf32> to vector<32x32xf32>
    %321 = arith.subf %304, %320 : vector<32x32xf32>
    %cst_173 = arith.constant 9.99999974E-6 : f32
    %322 = vector.broadcast %cst_173 : f32 to vector<32x1xf32>
    %323 = arith.addf %319, %322 : vector<32x1xf32>
    %324 = math.rsqrt %323 : vector<32x1xf32>
    %325 = vector.broadcast %324 : vector<32x1xf32> to vector<32x32xf32>
    %326 = arith.mulf %321, %325 : vector<32x32xf32>
    %327 = vector.broadcast %305 : vector<1x32xf32> to vector<32x32xf32>
    %328 = arith.mulf %326, %327 : vector<32x32xf32>
    %329 = vector.broadcast %306 : vector<1x32xf32> to vector<32x32xf32>
    %330 = arith.addf %328, %329 : vector<32x32xf32>
    %cst_174 = arith.constant 0.000000e+00 : f32
    %331 = vector.broadcast %cst_174 : f32 to vector<32x32xf32>
    %332 = arith.maximumf %330, %331 : vector<32x32xf32>
    %333 = arith.addf %332, %280 : vector<32x32xf32>
    %334 = arith.truncf %333 : vector<32x32xf32> to vector<32x32xbf16>
    %c1_175 = arith.constant 1 : index
    %c0_176 = arith.constant 0 : index
    %c0_177 = arith.constant 0 : index
    %c0_178 = arith.constant 0 : index
    %335 = vector.load %arg9[%c1_175, %c0_176, %c0_177, %c0_178] : memref<2x3x32x32xbf16, #tpu.memory_space<vmem>>, vector<1x1x32x32xbf16>
    %336 = vector.shape_cast %335 : vector<1x1x32x32xbf16> to vector<32x32xbf16>
    %cst_179 = arith.constant dense<0.000000e+00> : vector<32x32xf32>
    %337 = tpu.matmul %334, %336, %cst_179 {dimension_numbers = #tpu.dot_dimension_numbers<[1], [0], [0], [1], [0, 0, 1, 1], [], []>} : vector<32x32xbf16>, vector<32x32xbf16>, vector<32x32xf32> -> vector<32x32xf32>
    %c1_180 = arith.constant 1 : index
    %c0_181 = arith.constant 0 : index
    %c0_182 = arith.constant 0 : index
    %c0_183 = arith.constant 0 : index
    %338 = vector.load %arg10[%c1_180, %c0_181, %c0_182, %c0_183] : memref<2x3x1x32xf32, #tpu.memory_space<vmem>>, vector<1x1x1x32xf32>
    %339 = vector.shape_cast %338 : vector<1x1x1x32xf32> to vector<1x32xf32>
    %340 = vector.broadcast %339 : vector<1x32xf32> to vector<32x32xf32>
    %341 = arith.addf %337, %340 : vector<32x32xf32>
    %c1_184 = arith.constant 1 : index
    %c1_185 = arith.constant 1 : index
    %c0_186 = arith.constant 0 : index
    %c0_187 = arith.constant 0 : index
    %342 = vector.load %arg9[%c1_184, %c1_185, %c0_186, %c0_187] : memref<2x3x32x32xbf16, #tpu.memory_space<vmem>>, vector<1x1x32x32xbf16>
    %343 = vector.shape_cast %342 : vector<1x1x32x32xbf16> to vector<32x32xbf16>
    %cst_188 = arith.constant dense<0.000000e+00> : vector<16x32xf32>
    %344 = tpu.matmul %21, %343, %cst_188 {dimension_numbers = #tpu.dot_dimension_numbers<[1], [0], [0], [1], [0, 0, 1, 1], [], []>} : vector<16x32xbf16>, vector<32x32xbf16>, vector<16x32xf32> -> vector<16x32xf32>
    %c1_189 = arith.constant 1 : index
    %c1_190 = arith.constant 1 : index
    %c0_191 = arith.constant 0 : index
    %c0_192 = arith.constant 0 : index
    %345 = vector.load %arg10[%c1_189, %c1_190, %c0_191, %c0_192] : memref<2x3x1x32xf32, #tpu.memory_space<vmem>>, vector<1x1x1x32xf32>
    %346 = vector.shape_cast %345 : vector<1x1x1x32xf32> to vector<1x32xf32>
    %347 = vector.broadcast %346 : vector<1x32xf32> to vector<16x32xf32>
    %348 = arith.addf %344, %347 : vector<16x32xf32>
    %c1_193 = arith.constant 1 : index
    %c2_194 = arith.constant 2 : index
    %c0_195 = arith.constant 0 : index
    %c0_196 = arith.constant 0 : index
    %349 = vector.load %arg9[%c1_193, %c2_194, %c0_195, %c0_196] : memref<2x3x32x32xbf16, #tpu.memory_space<vmem>>, vector<1x1x32x32xbf16>
    %350 = vector.shape_cast %349 : vector<1x1x32x32xbf16> to vector<32x32xbf16>
    %cst_197 = arith.constant dense<0.000000e+00> : vector<16x32xf32>
    %351 = tpu.matmul %21, %350, %cst_197 {dimension_numbers = #tpu.dot_dimension_numbers<[1], [0], [0], [1], [0, 0, 1, 1], [], []>} : vector<16x32xbf16>, vector<32x32xbf16>, vector<16x32xf32> -> vector<16x32xf32>
    %c1_198 = arith.constant 1 : index
    %c2_199 = arith.constant 2 : index
    %c0_200 = arith.constant 0 : index
    %c0_201 = arith.constant 0 : index
    %352 = vector.load %arg10[%c1_198, %c2_199, %c0_200, %c0_201] : memref<2x3x1x32xf32, #tpu.memory_space<vmem>>, vector<1x1x1x32xf32>
    %353 = vector.shape_cast %352 : vector<1x1x1x32xf32> to vector<1x32xf32>
    %354 = vector.broadcast %353 : vector<1x32xf32> to vector<16x32xf32>
    %355 = arith.addf %351, %354 : vector<16x32xf32>
    %356 = arith.truncf %341 : vector<32x32xf32> to vector<32x32xbf16>
    %357 = arith.truncf %348 : vector<16x32xf32> to vector<16x32xbf16>
    %358 = arith.truncf %355 : vector<16x32xf32> to vector<16x32xbf16>
    %359 = vector.extract_strided_slice %356 {offsets = [0, 0], sizes = [32, 16], strides = [1, 1]} : vector<32x32xbf16> to vector<32x16xbf16>
    %360 = vector.extract_strided_slice %357 {offsets = [0, 0], sizes = [16, 16], strides = [1, 1]} : vector<16x32xbf16> to vector<16x16xbf16>
    %cst_202 = arith.constant dense<0.000000e+00> : vector<32x16xf32>
    %361 = tpu.matmul %359, %360, %cst_202 {dimension_numbers = #tpu.dot_dimension_numbers<[1], [1], [0], [0], [0, 0, 1, 0], [], []>} : vector<32x16xbf16>, vector<16x16xbf16>, vector<32x16xf32> -> vector<32x16xf32>
    %362 = arith.addf %361, %13 : vector<32x16xf32>
    %cst_203 = arith.constant dense<0xFF800000> : vector<32xf32>
    %363 = vector.multi_reduction <maximumf>, %362, %cst_203 [1] : vector<32x16xf32> to vector<32xf32>
    %364 = vector.shape_cast %363 : vector<32xf32> to vector<32x1xf32>
    %365 = vector.broadcast %364 : vector<32x1xf32> to vector<32x16xf32>
    %366 = arith.subf %362, %365 : vector<32x16xf32>
    %367 = math.exp %366 : vector<32x16xf32>
    %cst_204 = arith.constant dense<0.000000e+00> : vector<32xf32>
    %368 = vector.multi_reduction <add>, %367, %cst_204 [1] : vector<32x16xf32> to vector<32xf32>
    %369 = vector.shape_cast %368 : vector<32xf32> to vector<32x1xf32>
    %370 = tpu.reciprocal %369 {approx = true} : vector<32x1xf32> -> vector<32x1xf32>
    %371 = vector.broadcast %370 : vector<32x1xf32> to vector<32x16xf32>
    %372 = arith.mulf %367, %371 : vector<32x16xf32>
    %373 = arith.truncf %372 : vector<32x16xf32> to vector<32x16xbf16>
    %374 = vector.extract_strided_slice %358 {offsets = [0, 0], sizes = [16, 16], strides = [1, 1]} : vector<16x32xbf16> to vector<16x16xbf16>
    %cst_205 = arith.constant dense<0.000000e+00> : vector<32x16xf32>
    %375 = tpu.matmul %373, %374, %cst_205 {dimension_numbers = #tpu.dot_dimension_numbers<[1], [0], [0], [1], [0, 0, 1, 1], [], []>} : vector<32x16xbf16>, vector<16x16xbf16>, vector<32x16xf32> -> vector<32x16xf32>
    %376 = arith.truncf %375 : vector<32x16xf32> to vector<32x16xbf16>
    %c1_206 = arith.constant 1 : index
    %c0_207 = arith.constant 0 : index
    %c0_208 = arith.constant 0 : index
    %c0_209 = arith.constant 0 : index
    %377 = vector.load %arg11[%c1_206, %c0_207, %c0_208, %c0_209] : memref<2x2x32x16xbf16, #tpu.memory_space<vmem>>, vector<1x1x32x16xbf16>
    %378 = vector.shape_cast %377 : vector<1x1x32x16xbf16> to vector<32x16xbf16>
    %cst_210 = arith.constant dense<0.000000e+00> : vector<32x32xf32>
    %379 = tpu.matmul %376, %378, %cst_210 {dimension_numbers = #tpu.dot_dimension_numbers<[1], [1], [0], [0], [0, 0, 1, 0], [], []>} : vector<32x16xbf16>, vector<32x16xbf16>, vector<32x32xf32> -> vector<32x32xf32>
    %380 = vector.extract_strided_slice %356 {offsets = [0, 16], sizes = [32, 16], strides = [1, 1]} : vector<32x32xbf16> to vector<32x16xbf16>
    %381 = vector.extract_strided_slice %357 {offsets = [0, 16], sizes = [16, 16], strides = [1, 1]} : vector<16x32xbf16> to vector<16x16xbf16>
    %cst_211 = arith.constant dense<0.000000e+00> : vector<32x16xf32>
    %382 = tpu.matmul %380, %381, %cst_211 {dimension_numbers = #tpu.dot_dimension_numbers<[1], [1], [0], [0], [0, 0, 1, 0], [], []>} : vector<32x16xbf16>, vector<16x16xbf16>, vector<32x16xf32> -> vector<32x16xf32>
    %383 = arith.addf %382, %13 : vector<32x16xf32>
    %cst_212 = arith.constant dense<0xFF800000> : vector<32xf32>
    %384 = vector.multi_reduction <maximumf>, %383, %cst_212 [1] : vector<32x16xf32> to vector<32xf32>
    %385 = vector.shape_cast %384 : vector<32xf32> to vector<32x1xf32>
    %386 = vector.broadcast %385 : vector<32x1xf32> to vector<32x16xf32>
    %387 = arith.subf %383, %386 : vector<32x16xf32>
    %388 = math.exp %387 : vector<32x16xf32>
    %cst_213 = arith.constant dense<0.000000e+00> : vector<32xf32>
    %389 = vector.multi_reduction <add>, %388, %cst_213 [1] : vector<32x16xf32> to vector<32xf32>
    %390 = vector.shape_cast %389 : vector<32xf32> to vector<32x1xf32>
    %391 = tpu.reciprocal %390 {approx = true} : vector<32x1xf32> -> vector<32x1xf32>
    %392 = vector.broadcast %391 : vector<32x1xf32> to vector<32x16xf32>
    %393 = arith.mulf %388, %392 : vector<32x16xf32>
    %394 = arith.truncf %393 : vector<32x16xf32> to vector<32x16xbf16>
    %395 = vector.extract_strided_slice %358 {offsets = [0, 16], sizes = [16, 16], strides = [1, 1]} : vector<16x32xbf16> to vector<16x16xbf16>
    %cst_214 = arith.constant dense<0.000000e+00> : vector<32x16xf32>
    %396 = tpu.matmul %394, %395, %cst_214 {dimension_numbers = #tpu.dot_dimension_numbers<[1], [0], [0], [1], [0, 0, 1, 1], [], []>} : vector<32x16xbf16>, vector<16x16xbf16>, vector<32x16xf32> -> vector<32x16xf32>
    %397 = arith.truncf %396 : vector<32x16xf32> to vector<32x16xbf16>
    %c1_215 = arith.constant 1 : index
    %c1_216 = arith.constant 1 : index
    %c0_217 = arith.constant 0 : index
    %c0_218 = arith.constant 0 : index
    %398 = vector.load %arg11[%c1_215, %c1_216, %c0_217, %c0_218] : memref<2x2x32x16xbf16, #tpu.memory_space<vmem>>, vector<1x1x32x16xbf16>
    %399 = vector.shape_cast %398 : vector<1x1x32x16xbf16> to vector<32x16xbf16>
    %cst_219 = arith.constant dense<0.000000e+00> : vector<32x32xf32>
    %400 = tpu.matmul %397, %399, %cst_219 {dimension_numbers = #tpu.dot_dimension_numbers<[1], [1], [0], [0], [0, 0, 1, 0], [], []>} : vector<32x16xbf16>, vector<32x16xbf16>, vector<32x32xf32> -> vector<32x32xf32>
    %401 = arith.addf %379, %400 : vector<32x32xf32>
    %c1_220 = arith.constant 1 : index
    %c0_221 = arith.constant 0 : index
    %c0_222 = arith.constant 0 : index
    %402 = vector.load %arg12[%c1_220, %c0_221, %c0_222] : memref<2x3x32xf32, #tpu.memory_space<vmem>>, vector<1x3x32xf32>
    %403 = vector.shape_cast %402 : vector<1x3x32xf32> to vector<3x32xf32>
    %404 = vector.extract_strided_slice %403 {offsets = [0, 0], sizes = [1, 32], strides = [1, 1]} : vector<3x32xf32> to vector<1x32xf32>
    %405 = vector.broadcast %404 : vector<1x32xf32> to vector<32x32xf32>
    %406 = arith.addf %401, %405 : vector<32x32xf32>
    %407 = arith.addf %406, %333 : vector<32x32xf32>
    %408 = vector.extract_strided_slice %403 {offsets = [1, 0], sizes = [1, 32], strides = [1, 1]} : vector<3x32xf32> to vector<1x32xf32>
    %409 = vector.extract_strided_slice %403 {offsets = [2, 0], sizes = [1, 32], strides = [1, 1]} : vector<3x32xf32> to vector<1x32xf32>
    %cst_223 = arith.constant dense<0.000000e+00> : vector<32xf32>
    %410 = vector.multi_reduction <add>, %407, %cst_223 [1] : vector<32x32xf32> to vector<32xf32>
    %411 = vector.shape_cast %410 : vector<32xf32> to vector<32x1xf32>
    %cst_224 = arith.constant 3.200000e+01 : f32
    %412 = vector.broadcast %cst_224 : f32 to vector<32x1xf32>
    %413 = arith.divf %411, %412 : vector<32x1xf32>
    %414 = arith.mulf %407, %407 : vector<32x32xf32>
    %cst_225 = arith.constant dense<0.000000e+00> : vector<32xf32>
    %415 = vector.multi_reduction <add>, %414, %cst_225 [1] : vector<32x32xf32> to vector<32xf32>
    %416 = vector.shape_cast %415 : vector<32xf32> to vector<32x1xf32>
    %cst_226 = arith.constant 3.200000e+01 : f32
    %417 = vector.broadcast %cst_226 : f32 to vector<32x1xf32>
    %418 = arith.divf %416, %417 : vector<32x1xf32>
    %419 = arith.mulf %413, %413 : vector<32x1xf32>
    %420 = arith.subf %418, %419 : vector<32x1xf32>
    %cst_227 = arith.constant 0.000000e+00 : f32
    %421 = vector.broadcast %cst_227 : f32 to vector<32x1xf32>
    %422 = arith.maximumf %420, %421 : vector<32x1xf32>
    %423 = vector.broadcast %413 : vector<32x1xf32> to vector<32x32xf32>
    %424 = arith.subf %407, %423 : vector<32x32xf32>
    %cst_228 = arith.constant 9.99999974E-6 : f32
    %425 = vector.broadcast %cst_228 : f32 to vector<32x1xf32>
    %426 = arith.addf %422, %425 : vector<32x1xf32>
    %427 = math.rsqrt %426 : vector<32x1xf32>
    %428 = vector.broadcast %427 : vector<32x1xf32> to vector<32x32xf32>
    %429 = arith.mulf %424, %428 : vector<32x32xf32>
    %430 = vector.broadcast %408 : vector<1x32xf32> to vector<32x32xf32>
    %431 = arith.mulf %429, %430 : vector<32x32xf32>
    %432 = vector.broadcast %409 : vector<1x32xf32> to vector<32x32xf32>
    %433 = arith.addf %431, %432 : vector<32x32xf32>
    %c1_i32_229 = arith.constant 1 : i32
    %434 = tpu.dynamic_rotate %433 by %c1_i32_229 dim 0 : vector<32x32xf32>, i32 -> vector<32x32xf32>
    %435 = arith.mulf %434, %4 : vector<32x32xf32>
    %436 = arith.truncf %435 : vector<32x32xf32> to vector<32x32xbf16>
    %437 = arith.mulf %433, %8 : vector<32x32xf32>
    %438 = arith.truncf %437 : vector<32x32xf32> to vector<32x32xbf16>
    %c31_i32_230 = arith.constant 31 : i32
    %439 = tpu.dynamic_rotate %433 by %c31_i32_230 dim 0 : vector<32x32xf32>, i32 -> vector<32x32xf32>
    %440 = arith.mulf %439, %12 : vector<32x32xf32>
    %441 = arith.truncf %440 : vector<32x32xf32> to vector<32x32xbf16>
    %c0_231 = arith.constant 0 : index
    %c0_232 = arith.constant 0 : index
    %c0_233 = arith.constant 0 : index
    %442 = vector.load %arg13[%c0_231, %c0_232, %c0_233] : memref<3x1x32xbf16, #tpu.memory_space<vmem>>, vector<1x1x32xbf16>
    %443 = vector.shape_cast %442 : vector<1x1x32xbf16> to vector<1x32xbf16>
    %cst_234 = arith.constant dense<0.000000e+00> : vector<1x32xf32>
    %444 = tpu.matmul %443, %436, %cst_234 {dimension_numbers = #tpu.dot_dimension_numbers<[1], [1], [0], [0], [0, 0, 1, 0], [], []>} : vector<1x32xbf16>, vector<32x32xbf16>, vector<1x32xf32> -> vector<1x32xf32>
    %c1_235 = arith.constant 1 : index
    %c0_236 = arith.constant 0 : index
    %c0_237 = arith.constant 0 : index
    %445 = vector.load %arg13[%c1_235, %c0_236, %c0_237] : memref<3x1x32xbf16, #tpu.memory_space<vmem>>, vector<1x1x32xbf16>
    %446 = vector.shape_cast %445 : vector<1x1x32xbf16> to vector<1x32xbf16>
    %cst_238 = arith.constant dense<0.000000e+00> : vector<1x32xf32>
    %447 = tpu.matmul %446, %438, %cst_238 {dimension_numbers = #tpu.dot_dimension_numbers<[1], [1], [0], [0], [0, 0, 1, 0], [], []>} : vector<1x32xbf16>, vector<32x32xbf16>, vector<1x32xf32> -> vector<1x32xf32>
    %448 = arith.addf %444, %447 : vector<1x32xf32>
    %c2_239 = arith.constant 2 : index
    %c0_240 = arith.constant 0 : index
    %c0_241 = arith.constant 0 : index
    %449 = vector.load %arg13[%c2_239, %c0_240, %c0_241] : memref<3x1x32xbf16, #tpu.memory_space<vmem>>, vector<1x1x32xbf16>
    %450 = vector.shape_cast %449 : vector<1x1x32xbf16> to vector<1x32xbf16>
    %cst_242 = arith.constant dense<0.000000e+00> : vector<1x32xf32>
    %451 = tpu.matmul %450, %441, %cst_242 {dimension_numbers = #tpu.dot_dimension_numbers<[1], [1], [0], [0], [0, 0, 1, 0], [], []>} : vector<1x32xbf16>, vector<32x32xbf16>, vector<1x32xf32> -> vector<1x32xf32>
    %452 = arith.addf %448, %451 : vector<1x32xf32>
    %c0_243 = arith.constant 0 : index
    %c0_244 = arith.constant 0 : index
    %453 = vector.load %arg14[%c0_243, %c0_244] : memref<1x1xf32, #tpu.memory_space<vmem>>, vector<1x1xf32>
    %454 = vector.broadcast %453 : vector<1x1xf32> to vector<1x32xf32>
    %455 = arith.addf %452, %454 : vector<1x32xf32>
    %c0_245 = arith.constant 0 : index
    %c0_246 = arith.constant 0 : index
    %456 = vector.load %arg2[%c0_245, %c0_246] : memref<1x32xf32, #tpu.memory_space<vmem>>, vector<1x32xf32>
    %457 = arith.mulf %455, %456 : vector<1x32xf32>
    %cst_247 = arith.constant 0.000000e+00 : f32
    %458 = vector.broadcast %cst_247 : f32 to vector<1x32xf32>
    %459 = arith.maximumf %457, %458 : vector<1x32xf32>
    %460 = math.absf %457 : vector<1x32xf32>
    %cst_248 = arith.constant 0.000000e+00 : f32
    %461 = vector.broadcast %cst_248 : f32 to vector<1x32xf32>
    %462 = arith.subf %461, %460 : vector<1x32xf32>
    %463 = math.exp %462 : vector<1x32xf32>
    %cst_249 = arith.constant 1.000000e+00 : f32
    %464 = vector.broadcast %cst_249 : f32 to vector<1x32xf32>
    %465 = arith.addf %464, %463 : vector<1x32xf32>
    %466 = math.log %465 : vector<1x32xf32>
    %467 = arith.addf %459, %466 : vector<1x32xf32>
    %c0_250 = arith.constant 0 : index
    %c0_251 = arith.constant 0 : index
    %468 = vector.load %arg15[%c0_250, %c0_251] : memref<1x32xf32, #tpu.memory_space<vmem>>, vector<1x32xf32>
    tpu.vector_store %arg15[%c0_250, %c0_251], %467 {strides = array<i32>} : memref<1x32xf32, #tpu.memory_space<vmem>>, vector<1x32xf32>,
    return
  }
}

</mosaic_0001>

<llo_original>
// kernel: tpu_custom_call.1
$region0: #{tpu_custom_call.1}
  #allocation0 [shape = 'u32[]', space=smem, size = 0x4, offset = 0x4, fixed_abs, tag = 'smem constant byte address 0x4 - core index']
  #allocation1 [shape = 'u32[144,128]{1,0:T(1,128)}', space=vmem, size = 0x12000, scoped, tag = 'internal scratch']
  #allocation2 [shape = 'f32[1,1]{1,0:T(1,128)S(1)}', space=vmem, size = 0x200, scoped, tag = 'scoped memory for tpu_custom_call.1']
  %s0 = inlined_call_operand.hbm [shape: f32[32,32], index: 0, kind: input, shape index: {}]
  %s1 = inlined_call_operand.vmem [shape: f32[3,32,1], index: 1, kind: input, shape index: {}]
  %s2 = inlined_call_operand.hbm [shape: f32[1,32], index: 2, kind: input, shape index: {}]
  %s3 = inlined_call_operand.vmem [shape: f32[16,48], index: 3, kind: input, shape index: {}]
  %s4 = inlined_call_operand.vmem [shape: f32[32,16], index: 4, kind: input, shape index: {}]
  %s5 = inlined_call_operand.vmem [shape: bf16[48,32], index: 5, kind: input, shape index: {}]
  %s6 = inlined_call_operand.hbm [shape: f32[1,32], index: 6, kind: input, shape index: {}]
  %s7 = inlined_call_operand.vmem [shape: bf16[4,3,32,32], index: 7, kind: input, shape index: {}]
  %s8 = inlined_call_operand.vmem [shape: f32[4,3,32], index: 8, kind: input, shape index: {}]
  %s9 = inlined_call_operand.vmem [shape: bf16[2,3,32,32], index: 9, kind: input, shape index: {}]
  %s10 = inlined_call_operand.vmem [shape: f32[2,3,1,32], index: 10, kind: input, shape index: {}]
  %s11 = inlined_call_operand.vmem [shape: bf16[2,2,32,16], index: 11, kind: input, shape index: {}]
  %s12 = inlined_call_operand.vmem [shape: f32[2,3,32], index: 12, kind: input, shape index: {}]
  %s13 = inlined_call_operand.vmem [shape: bf16[3,1,32], index: 13, kind: input, shape index: {}]
  %s14 = inlined_call_operand.<no memory space> [shape: f32[1,1], index: 14, kind: input, shape index: {}]
  %s15 = inlined_call_operand.hbm [shape: f32[1,32], index: 15, kind: output, shape index: {}]
  %s16 = sld [smem:[#allocation0]]
  $region82: #{tpu_custom_call.1} parent=0
    _
  %s18 = ssub.s32 1, %s16
  %s19 = scalar_select 0, %s18, %s16
  %v20 = vstv %s14
  %21 = vst [vmem:[#allocation2] sm:$0x1] %v20
  $region1: #{tpu_custom_call.1} parent=0
    #allocation3 [shape = 'u8[16384]{0}', space=vmem, size = 0x4000, scoped, tag = 'input window, operand 0, single buffered']
    #allocation4 [shape = 's32[1]{0}', space=sflag, size = 0x4, scoped, tag = 'scoped memory for tpu_custom_call.1']
    #allocation5 [shape = 's32[1]{0}', space=sflag, size = 0x4, scoped, tag = 'scoped memory for tpu_custom_call.1']
    #allocation6 [shape = 'u8[512]{0}', space=vmem, size = 0x400, scoped, tag = 'input window, operand 2, single buffered']
    #allocation7 [shape = 's32[1]{0}', space=sflag, size = 0x4, scoped, tag = 'scoped memory for tpu_custom_call.1']
    #allocation8 [shape = 'u8[512]{0}', space=vmem, size = 0x400, scoped, tag = 'input window, operand 6, single buffered']
    #allocation9 [shape = 'u8[512]{0}', space=vmem, size = 0x400, scoped, tag = 'output window, operand 0, single buffered']
    %22 = vsyncpa [#allocation4], 0
    %23 = vsyncpa [#allocation7], 0
    %24 = vsyncpa [#allocation5], 0
    // Predicated region
    $region2: #{tpu_custom_call.1} parent=1 // pred_check
      _
    $region3: #{tpu_custom_call.1} parent=1 // pred_check_branch
      %26 = sbr.rel (0) target = $region5
    $region4: #{tpu_custom_call.1} parent=1 // pred_region
      %s28 = ssub.s32 512, 512
      %29 = vsyncadd [#allocation4], %s28
      %s30 = sshll.u32 [#allocation3], 4
      %s31 = int_to_ptr.vmem [resolvable:$true] %s30
      %36 = dma.hbm_to_vmem [thread:$0]  %s0, 512, %s31, [#allocation4], 128, 128, 8
    $region5: #{tpu_custom_call.1} parent=1 // pred_fallthru
      _
    // Predicated region
    $region6: #{tpu_custom_call.1} parent=1 // pred_check
      _
    $region7: #{tpu_custom_call.1} parent=1 // pred_check_branch
      %38 = sbr.rel (0) target = $region9
    $region8: #{tpu_custom_call.1} parent=1 // pred_region
      _
    $region9: #{tpu_custom_call.1} parent=1 // pred_fallthru
      _
    // Predicated region
    $region10: #{tpu_custom_call.1} parent=1 // pred_check
      _
    $region11: #{tpu_custom_call.1} parent=1 // pred_check_branch
      %40 = sbr.rel (0) target = $region13
    $region12: #{tpu_custom_call.1} parent=1 // pred_region
      %s42 = ssub.s32 16, 16
      %43 = vsyncadd [#allocation7], %s42
      %s45 = sshll.u32 [#allocation6], 4
      %s46 = int_to_ptr.vmem [resolvable:$true] %s45
      %48 = dma.hbm_to_vmem [thread:$0]  %s2, 16, %s46, [#allocation7]
    $region13: #{tpu_custom_call.1} parent=1 // pred_fallthru
      _
    // Predicated region
    $region14: #{tpu_custom_call.1} parent=1 // pred_check
      _
    $region15: #{tpu_custom_call.1} parent=1 // pred_check_branch
      %50 = sbr.rel (0) target = $region17
    $region16: #{tpu_custom_call.1} parent=1 // pred_region
      _
    $region17: #{tpu_custom_call.1} parent=1 // pred_fallthru
      _
    // Predicated region
    $region18: #{tpu_custom_call.1} parent=1 // pred_check
      _
    $region19: #{tpu_custom_call.1} parent=1 // pred_check_branch
      %52 = sbr.rel (0) target = $region21
    $region20: #{tpu_custom_call.1} parent=1 // pred_region
      _
    $region21: #{tpu_custom_call.1} parent=1 // pred_fallthru
      _
    // Predicated region
    $region22: #{tpu_custom_call.1} parent=1 // pred_check
      _
    $region23: #{tpu_custom_call.1} parent=1 // pred_check_branch
      %54 = sbr.rel (0) target = $region25
    $region24: #{tpu_custom_call.1} parent=1 // pred_region
      _
    $region25: #{tpu_custom_call.1} parent=1 // pred_fallthru
      _
    // Predicated region
    $region26: #{tpu_custom_call.1} parent=1 // pred_check
      _
    $region27: #{tpu_custom_call.1} parent=1 // pred_check_branch
      %56 = sbr.rel (0) target = $region29
    $region28: #{tpu_custom_call.1} parent=1 // pred_region
      %s58 = ssub.s32 16, 16
      %59 = vsyncadd [#allocation7], %s58
      %s61 = sshll.u32 [#allocation8], 4
      %s62 = int_to_ptr.vmem [resolvable:$true] %s61
      %64 = dma.hbm_to_vmem [thread:$0]  %s6, 16, %s62, [#allocation7]
    $region29: #{tpu_custom_call.1} parent=1 // pred_fallthru
      _
    // Predicated region
    $region30: #{tpu_custom_call.1} parent=1 // pred_check
      _
    $region31: #{tpu_custom_call.1} parent=1 // pred_check_branch
      %66 = sbr.rel (0) target = $region33
    $region32: #{tpu_custom_call.1} parent=1 // pred_region
      _
    $region33: #{tpu_custom_call.1} parent=1 // pred_fallthru
      _
    // Predicated region
    $region34: #{tpu_custom_call.1} parent=1 // pred_check
      _
    $region35: #{tpu_custom_call.1} parent=1 // pred_check_branch
      %68 = sbr.rel (0) target = $region37
    $region36: #{tpu_custom_call.1} parent=1 // pred_region
      _
    $region37: #{tpu_custom_call.1} parent=1 // pred_fallthru
      _
    // Predicated region
    $region38: #{tpu_custom_call.1} parent=1 // pred_check
      _
    $region39: #{tpu_custom_call.1} parent=1 // pred_check_branch
      %70 = sbr.rel (0) target = $region41
    $region40: #{tpu_custom_call.1} parent=1 // pred_region
      _
    $region41: #{tpu_custom_call.1} parent=1 // pred_fallthru
      _
    // Predicated region
    $region42: #{tpu_custom_call.1} parent=1 // pred_check
      _
    $region43: #{tpu_custom_call.1} parent=1 // pred_check_branch
      %72 = sbr.rel (0) target = $region45
    $region44: #{tpu_custom_call.1} parent=1 // pred_region
      _
    $region45: #{tpu_custom_call.1} parent=1 // pred_fallthru
      _
    // Predicated region
    $region46: #{tpu_custom_call.1} parent=1 // pred_check
      _
    $region47: #{tpu_custom_call.1} parent=1 // pred_check_branch
      %74 = sbr.rel (0) target = $region49
    $region48: #{tpu_custom_call.1} parent=1 // pred_region
      _
    $region49: #{tpu_custom_call.1} parent=1 // pred_fallthru
      _
    // Predicated region
    $region50: #{tpu_custom_call.1} parent=1 // pred_check
      _
    $region51: #{tpu_custom_call.1} parent=1 // pred_check_branch
      %76 = sbr.rel (0) target = $region53
    $region52: #{tpu_custom_call.1} parent=1 // pred_region
      _
    $region53: #{tpu_custom_call.1} parent=1 // pred_fallthru
      _
    // Predicated region
    $region54: #{tpu_custom_call.1} parent=1 // pred_check
      _
    $region55: #{tpu_custom_call.1} parent=1 // pred_check_branch
      %78 = sbr.rel (0) target = $region57
    $region56: #{tpu_custom_call.1} parent=1 // pred_region
      _
    $region57: #{tpu_custom_call.1} parent=1 // pred_fallthru
      _
    // Predicated region
    $region58: #{tpu_custom_call.1} parent=1 // pred_check
      _
    $region59: #{tpu_custom_call.1} parent=1 // pred_check_branch
      %80 = sbr.rel (0) target = $region61
    $region60: #{tpu_custom_call.1} parent=1 // pred_region
      _
    $region61: #{tpu_custom_call.1} parent=1 // pred_fallthru
      _
    // Predicated region
    $region62: #{tpu_custom_call.1} parent=1 // pred_check
      _
    $region63: #{tpu_custom_call.1} parent=1 // pred_check_branch
      %82 = sbr.rel (0) target = $region65
    $region64: #{tpu_custom_call.1} parent=1 // pred_region
      %83 = dma.done [#allocation4], 512
    $region65: #{tpu_custom_call.1} parent=1 // pred_fallthru
      _
    // Predicated region
    $region66: #{tpu_custom_call.1} parent=1 // pred_check
      _
    $region67: #{tpu_custom_call.1} parent=1 // pred_check_branch
      %85 = sbr.rel (0) target = $region69
    $region68: #{tpu_custom_call.1} parent=1 // pred_region
      %86 = dma.done [#allocation7], 16
    $region69: #{tpu_custom_call.1} parent=1 // pred_fallthru
      _
    // Predicated region
    $region70: #{tpu_custom_call.1} parent=1 // pred_check
      _
    $region71: #{tpu_custom_call.1} parent=1 // pred_check_branch
      %88 = sbr.rel (0) target = $region73
    $region72: #{tpu_custom_call.1} parent=1 // pred_region
      %89 = dma.done [#allocation7], 16
    $region73: #{tpu_custom_call.1} parent=1 // pred_fallthru
      _
    %v91 = vld [vmem:[#allocation3] sm:$0xff]
    %v92 = vld [vmem:[#allocation3 + $0x8] sm:$0xff]
    %v93 = vld [vmem:[#allocation3 + $0x10] sm:$0xff]
    %v94 = vld [vmem:[#allocation3 + $0x18] sm:$0xff]
    %v95 = vld [vmem:[%s1] sm:$0xff]
    %v96 = vld [vmem:[%s1 + $0x8] sm:$0xff]
    %v97 = vld [vmem:[%s1 + $0x10] sm:$0xff]
    %v98 = vld [vmem:[%s1 + $0x18] sm:$0xff]
    %100 = vset.pattern.permute.xlu0 0
    %101 = vperm.xlu0 %100, %v95
    %v102 = vpop.permute.xlu0 %101
    %105 = vset.pattern.permute.xlu0 0
    %106 = vperm.xlu0 %105, %v96
    %v107 = vpop.permute.xlu0 %106
    %110 = vset.pattern.permute.xlu0 0
    %111 = vperm.xlu0 %110, %v97
    %v112 = vpop.permute.xlu0 %111
    %115 = vset.pattern.permute.xlu0 0
    %116 = vperm.xlu0 %115, %v98
    %v117 = vpop.permute.xlu0 %116
    %s119 = scalar_lea.vmem %s1, 32
    %v120 = vld [vmem:[%s119] sm:$0xff]
    %v121 = vld [vmem:[%s119 + $0x8] sm:$0xff]
    %v122 = vld [vmem:[%s119 + $0x10] sm:$0xff]
    %v123 = vld [vmem:[%s119 + $0x18] sm:$0xff]
    %125 = vset.pattern.permute.xlu0 0
    %126 = vperm.xlu0 %125, %v120
    %v127 = vpop.permute.xlu0 %126
    %130 = vset.pattern.permute.xlu0 0
    %131 = vperm.xlu0 %130, %v121
    %v132 = vpop.permute.xlu0 %131
    %135 = vset.pattern.permute.xlu0 0
    %136 = vperm.xlu0 %135, %v122
    %v137 = vpop.permute.xlu0 %136
    %140 = vset.pattern.permute.xlu0 0
    %141 = vperm.xlu0 %140, %v123
    %v142 = vpop.permute.xlu0 %141
    %s144 = scalar_lea.vmem %s1, 64
    %v145 = vld [vmem:[%s144] sm:$0xff]
    %v146 = vld [vmem:[%s144 + $0x8] sm:$0xff]
    %v147 = vld [vmem:[%s144 + $0x10] sm:$0xff]
    %v148 = vld [vmem:[%s144 + $0x18] sm:$0xff]
    %150 = vset.pattern.permute.xlu0 0
    %151 = vperm.xlu0 %150, %v145
    %v152 = vpop.permute.xlu0 %151
    %155 = vset.pattern.permute.xlu0 0
    %156 = vperm.xlu0 %155, %v146
    %v157 = vpop.permute.xlu0 %156
    %160 = vset.pattern.permute.xlu0 0
    %161 = vperm.xlu0 %160, %v147
    %v162 = vpop.permute.xlu0 %161
    %165 = vset.pattern.permute.xlu0 0
    %166 = vperm.xlu0 %165, %v148
    %v167 = vpop.permute.xlu0 %166
    %v169 = vld [vmem:[%s4] sm:$0xff]
    %v170 = vld [vmem:[%s4 + $0x8] sm:$0xff]
    %v171 = vld [vmem:[%s4 + $0x10] sm:$0xff]
    %v172 = vld [vmem:[%s4 + $0x18] sm:$0xff]
    %v173 = vld [vmem:[%s3] sm:$0xff]
    %v174 = vld [vmem:[%s3 + $0x8] sm:$0xff]
    %v175 = vpack.c.bf16 %v174, %v173
    %v176 = vld [vmem:[%s5] sm:$0xf]
    %v177 = vld [vmem:[%s5 + $0x4] sm:$0xf]
    %v178 = vld [vmem:[%s5 + $0x8] sm:$0xf]
    %v179 = vld [vmem:[%s5 + $0xc] sm:$0xf]
    %v180 = vld [vmem:[%s5 + $0x10] sm:$0xf]
    %v181 = vld [vmem:[%s5 + $0x14] sm:$0xf]
    %v182 = vld [vmem:[#allocation8] sm:$0x1]
    %v184 = vlaneseq
    %v185 = vshrl.u32 %v184, 7
    %v186 = vsub.s32 0, %v185
    %v187 = vrot.slane %v182, %v186
    %v195 = vunpack.c.l.b16 %v176
    %v196 = vunpack.c.l.b16 %v177
    %v197 = vunpack.c.l.b16 %v178
    %v198 = vunpack.c.l.b16 %v179
    %v199 = vunpack.c.l.b16 %v180
    %v200 = vunpack.c.l.b16 %v181
    %v201 = vpack.c.b16 %v196, %v195
    %v202 = vpack.c.b16 %v198, %v197
    %v203 = vpack.c.b16 %v200, %v199
    %vm207 = vcmask 392192
    %v209 = vsel %vm207, %v175, 0
    %211 = vmatprep.subr.bf16.mxu0 0
    %212 = vmatpush1.bf16.msra.mxu0 0
    %213 = vmatprep.subr.bf16.mxu0 0
    %214 = vmatpush1.bf16.msra.mxu0 0
    %215 = vmatprep.subr.bf16.mxu0 0
    %216 = vmatpush1.bf16.msra.mxu0 0
    %217 = vmatprep.subr.bf16.mxu0 0
    %218 = vmatpush1.bf16.msra.mxu0 0
    %219 = vmatprep.subr.bf16.mxu0 0
    %220 = vmatpush1.bf16.msra.mxu0 0
    %221 = vmatprep.subr.bf16.mxu0 0
    %222 = vmatpush1.bf16.msra.mxu0 %v203
    %223 = vmatprep.subr.bf16.mxu0 0
    %224 = vmatpush1.bf16.msra.mxu0 %v202
    %225 = vmatprep.subr.bf16.mxu0 0
    %226 = vmatpush1.bf16.msra.mxu0 %v201
    %227 = vmatprep.subr.bf16.mxu0 0
    %228 = vmatpush2.bf16.msra.mxu0 0
    %229 = vmatprep.subr.bf16.mxu0 0
    %230 = vmatpush2.bf16.msra.mxu0 0
    %231 = vmatprep.subr.bf16.mxu0 0
    %232 = vmatpush2.bf16.msra.mxu0 0
    %233 = vmatprep.subr.bf16.mxu0 0
    %234 = vmatpush2.bf16.msra.mxu0 0
    %235 = vmatprep.subr.bf16.mxu0 0
    %236 = vmatpush2.bf16.msra.mxu0 0
    %237 = vmatprep.subr.bf16.mxu0 0
    %238 = vmatpush2.bf16.msra.mxu0 0
    %239 = vmatprep.subr.bf16.mxu0 0
    %240 = vmatpush2.bf16.msra.mxu0 0
    %241 = vmatprep.subr.bf16.mxu0 0
    %242 = vmatpush2.bf16.msra.mxu0 0
    %243 = vmatprep.mubr.bf16.mxu0 0
    %244 = vmatmul.mubr.bf16.gmra.mxu0 %v209
    %v245 = vpop.f32.mrf.mxu0
    %v246 = vadd.f32 %v187, %v245
    %v247 = vpop.f32.mrf.mxu0
    %v248 = vpop.f32.mrf.mxu0
    %v249 = vadd.f32 %v187, %v248
    %v250 = vpop.f32.mrf.mxu0
    %251 = vdwg.mxu0
    %v252 = vpack.c.bf16 %v249, %v246
    %v253 = vrot.slane %v91, 7
    %v254 = vrot.slane %v92, 7
    %v255 = vrot.slane %v93, 7
    %v256 = vrot.slane %v94, 7
    %v257 = vlaneseq
    %v258 = vshrl.u32 %v257, 7
    %vm259 = vcmp.lt.s32.totalorder %v258, 1
    %v260 = vsel %vm259, %v255, %v256
    %v261 = vsel %vm259, %v254, %v255
    %v262 = vsel %vm259, %v253, %v254
    %v263 = vsel %vm259, %v256, %v253
    %v264 = vmul.f32 %v263, %v102
    %v265 = vmul.f32 %v262, %v107
    %v266 = vmul.f32 %v261, %v112
    %v267 = vmul.f32 %v260, %v117
    %v268 = vpack.c.bf16 %v265, %v264
    %v269 = vpack.c.bf16 %v267, %v266
    %v270 = vmul.f32 %v91, %v127
    %v271 = vmul.f32 %v92, %v132
    %v272 = vmul.f32 %v93, %v137
    %v273 = vmul.f32 %v94, %v142
    %v274 = vpack.c.bf16 %v271, %v270
    %v275 = vpack.c.bf16 %v273, %v272
    %v276 = vrot.slane %v91, 1
    %v277 = vrot.slane %v92, 1
    %v278 = vrot.slane %v93, 1
    %v279 = vrot.slane %v94, 1
    %vm280 = vcmp.lt.s32.totalorder %v258, 7
    %v281 = vsel %vm280, %v278, %v279
    %v282 = vsel %vm280, %v277, %v278
    %v283 = vsel %vm280, %v276, %v277
    %v284 = vsel %vm280, %v279, %v276
    %v285 = vmul.f32 %v283, %v152
    %v286 = vmul.f32 %v282, %v157
    %v287 = vmul.f32 %v281, %v162
    %v288 = vmul.f32 %v284, %v167
    %v289 = vpack.c.bf16 %v286, %v285
    %v290 = vpack.c.bf16 %v288, %v287
    %v291 = vld [vmem:[%s8] sm:$0x7]
    %v292 = vld [vmem:[%s7] sm:$0xf]
    %v293 = vld [vmem:[%s7 + $0x4] sm:$0xf]
    %v294 = vld [vmem:[%s7 + $0x8] sm:$0xf]
    %v295 = vld [vmem:[%s7 + $0xc] sm:$0xf]
    %v300 = vunpack.c.l.b16 %v292
    %v301 = vunpack.c.l.b16 %v293
    %v302 = vunpack.c.l.b16 %v294
    %v303 = vunpack.c.l.b16 %v295
    %v304 = vpack.c.b16 %v301, %v300
    %v305 = vpack.c.b16 %v303, %v302
    %vm308 = vcmask 261120
    %v310 = vsel %vm308, %v268, 0
    %v313 = vsel %vm308, %v269, 0
    %315 = vmatprep.subr.bf16.mxu0 0
    %316 = vmatpush1.bf16.msra.mxu0 0
    %317 = vmatprep.subr.bf16.mxu0 0
    %318 = vmatpush1.bf16.msra.mxu0 0
    %319 = vmatprep.subr.bf16.mxu0 0
    %320 = vmatpush1.bf16.msra.mxu0 0
    %321 = vmatprep.subr.bf16.mxu0 0
    %322 = vmatpush1.bf16.msra.mxu0 0
    %323 = vmatprep.subr.bf16.mxu0 0
    %324 = vmatpush1.bf16.msra.mxu0 0
    %325 = vmatprep.subr.bf16.mxu0 0
    %326 = vmatpush1.bf16.msra.mxu0 0
    %327 = vmatprep.subr.bf16.mxu0 0
    %328 = vmatpush1.bf16.msra.mxu0 %v305
    %329 = vmatprep.subr.bf16.mxu0 0
    %330 = vmatpush1.bf16.msra.mxu0 %v304
    %331 = vmatprep.subr.bf16.mxu0 0
    %332 = vmatpush2.bf16.msra.mxu0 0
    %333 = vmatprep.subr.bf16.mxu0 0
    %334 = vmatpush2.bf16.msra.mxu0 0
    %335 = vmatprep.subr.bf16.mxu0 0
    %336 = vmatpush2.bf16.msra.mxu0 0
    %337 = vmatprep.subr.bf16.mxu0 0
    %338 = vmatpush2.bf16.msra.mxu0 0
    %339 = vmatprep.subr.bf16.mxu0 0
    %340 = vmatpush2.bf16.msra.mxu0 0
    %341 = vmatprep.subr.bf16.mxu0 0
    %342 = vmatpush2.bf16.msra.mxu0 0
    %343 = vmatprep.subr.bf16.mxu0 0
    %344 = vmatpush2.bf16.msra.mxu0 0
    %345 = vmatprep.subr.bf16.mxu0 0
    %346 = vmatpush2.bf16.msra.mxu0 0
    %347 = vmatprep.mubr.bf16.mxu0 0
    %348 = vmatmul.mubr.bf16.gmra.mxu0 %v310
    %v349 = vpop.f32.mrf.mxu0
    %v350 = vadd.f32 0.0, %v349
    %v351 = vpop.f32.mrf.mxu0
    %v352 = vpop.f32.mrf.mxu0
    %v353 = vadd.f32 0.0, %v352
    %v354 = vpop.f32.mrf.mxu0
    %355 = vmatprep.mubr.bf16.mxu0 0
    %356 = vmatmul.mubr.bf16.gmra.mxu0 %v313
    %v357 = vpop.f32.mrf.mxu0
    %v358 = vadd.f32 0.0, %v357
    %v359 = vpop.f32.mrf.mxu0
    %v360 = vpop.f32.mrf.mxu0
    %v361 = vadd.f32 0.0, %v360
    %v362 = vpop.f32.mrf.mxu0
    %363 = vdwg.mxu0
    %v364 = vlaneseq
    %v365 = vshrl.u32 %v364, 7
    %v366 = vsub.s32 0, %v365
    %v367 = vrot.slane %v291, %v366
    %v368 = vadd.f32 %v367, %v350
    %v369 = vadd.f32 %v367, %v353
    %v370 = vadd.f32 %v367, %v358
    %v371 = vadd.f32 %v367, %v361
    %s372 = scalar_lea.vmem %s7, 16
    %v373 = vld [vmem:[%s372] sm:$0xf]
    %v374 = vld [vmem:[%s372 + $0x4] sm:$0xf]
    %v375 = vld [vmem:[%s372 + $0x8] sm:$0xf]
    %v376 = vld [vmem:[%s372 + $0xc] sm:$0xf]
    %v381 = vunpack.c.l.b16 %v373
    %v382 = vunpack.c.l.b16 %v374
    %v383 = vunpack.c.l.b16 %v375
    %v384 = vunpack.c.l.b16 %v376
    %v385 = vpack.c.b16 %v382, %v381
    %v386 = vpack.c.b16 %v384, %v383
    %v390 = vsel %vm308, %v274, 0
    %v393 = vsel %vm308, %v275, 0
    %395 = vmatprep.subr.bf16.mxu0 0
    %396 = vmatpush1.bf16.msra.mxu0 0
    %397 = vmatprep.subr.bf16.mxu0 0
    %398 = vmatpush1.bf16.msra.mxu0 0
    %399 = vmatprep.subr.bf16.mxu0 0
    %400 = vmatpush1.bf16.msra.mxu0 0
    %401 = vmatprep.subr.bf16.mxu0 0
    %402 = vmatpush1.bf16.msra.mxu0 0
    %403 = vmatprep.subr.bf16.mxu0 0
    %404 = vmatpush1.bf16.msra.mxu0 0
    %405 = vmatprep.subr.bf16.mxu0 0
    %406 = vmatpush1.bf16.msra.mxu0 0
    %407 = vmatprep.subr.bf16.mxu0 0
    %408 = vmatpush1.bf16.msra.mxu0 %v386
    %409 = vmatprep.subr.bf16.mxu0 0
    %410 = vmatpush1.bf16.msra.mxu0 %v385
    %411 = vmatprep.subr.bf16.mxu0 0
    %412 = vmatpush2.bf16.msra.mxu0 0
    %413 = vmatprep.subr.bf16.mxu0 0
    %414 = vmatpush2.bf16.msra.mxu0 0
    %415 = vmatprep.subr.bf16.mxu0 0
    %416 = vmatpush2.bf16.msra.mxu0 0
    %417 = vmatprep.subr.bf16.mxu0 0
    %418 = vmatpush2.bf16.msra.mxu0 0
    %419 = vmatprep.subr.bf16.mxu0 0
    %420 = vmatpush2.bf16.msra.mxu0 0
    %421 = vmatprep.subr.bf16.mxu0 0
    %422 = vmatpush2.bf16.msra.mxu0 0
    %423 = vmatprep.subr.bf16.mxu0 0
    %424 = vmatpush2.bf16.msra.mxu0 0
    %425 = vmatprep.subr.bf16.mxu0 0
    %426 = vmatpush2.bf16.msra.mxu0 0
    %427 = vmatprep.mubr.bf16.mxu0 0
    %428 = vmatmul.mubr.bf16.gmra.mxu0 %v390
    %v429 = vpop.f32.mrf.mxu0
    %v430 = vadd.f32 0.0, %v429
    %v431 = vpop.f32.mrf.mxu0
    %v432 = vpop.f32.mrf.mxu0
    %v433 = vadd.f32 0.0, %v432
    %v434 = vpop.f32.mrf.mxu0
    %435 = vmatprep.mubr.bf16.mxu0 0
    %436 = vmatmul.mubr.bf16.gmra.mxu0 %v393
    %v437 = vpop.f32.mrf.mxu0
    %v438 = vadd.f32 0.0, %v437
    %v439 = vpop.f32.mrf.mxu0
    %v440 = vpop.f32.mrf.mxu0
    %v441 = vadd.f32 0.0, %v440
    %v442 = vpop.f32.mrf.mxu0
    %443 = vdwg.mxu0
    %v444 = vadd.f32 %v368, %v430
    %v445 = vadd.f32 %v369, %v433
    %v446 = vadd.f32 %v370, %v438
    %v447 = vadd.f32 %v371, %v441
    %s448 = scalar_lea.vmem %s7, 32
    %v449 = vld [vmem:[%s448] sm:$0xf]
    %v450 = vld [vmem:[%s448 + $0x4] sm:$0xf]
    %v451 = vld [vmem:[%s448 + $0x8] sm:$0xf]
    %v452 = vld [vmem:[%s448 + $0xc] sm:$0xf]
    %v457 = vunpack.c.l.b16 %v449
    %v458 = vunpack.c.l.b16 %v450
    %v459 = vunpack.c.l.b16 %v451
    %v460 = vunpack.c.l.b16 %v452
    %v461 = vpack.c.b16 %v458, %v457
    %v462 = vpack.c.b16 %v460, %v459
    %v466 = vsel %vm308, %v289, 0
    %v469 = vsel %vm308, %v290, 0
    %471 = vmatprep.subr.bf16.mxu0 0
    %472 = vmatpush1.bf16.msra.mxu0 0
    %473 = vmatprep.subr.bf16.mxu0 0
    %474 = vmatpush1.bf16.msra.mxu0 0
    %475 = vmatprep.subr.bf16.mxu0 0
    %476 = vmatpush1.bf16.msra.mxu0 0
    %477 = vmatprep.subr.bf16.mxu0 0
    %478 = vmatpush1.bf16.msra.mxu0 0
    %479 = vmatprep.subr.bf16.mxu0 0
    %480 = vmatpush1.bf16.msra.mxu0 0
    %481 = vmatprep.subr.bf16.mxu0 0
    %482 = vmatpush1.bf16.msra.mxu0 0
    %483 = vmatprep.subr.bf16.mxu0 0
    %484 = vmatpush1.bf16.msra.mxu0 %v462
    %485 = vmatprep.subr.bf16.mxu0 0
    %486 = vmatpush1.bf16.msra.mxu0 %v461
    %487 = vmatprep.subr.bf16.mxu0 0
    %488 = vmatpush2.bf16.msra.mxu0 0
    %489 = vmatprep.subr.bf16.mxu0 0
    %490 = vmatpush2.bf16.msra.mxu0 0
    %491 = vmatprep.subr.bf16.mxu0 0
    %492 = vmatpush2.bf16.msra.mxu0 0
    %493 = vmatprep.subr.bf16.mxu0 0
    %494 = vmatpush2.bf16.msra.mxu0 0
    %495 = vmatprep.subr.bf16.mxu0 0
    %496 = vmatpush2.bf16.msra.mxu0 0
    %497 = vmatprep.subr.bf16.mxu0 0
    %498 = vmatpush2.bf16.msra.mxu0 0
    %499 = vmatprep.subr.bf16.mxu0 0
    %500 = vmatpush2.bf16.msra.mxu0 0
    %501 = vmatprep.subr.bf16.mxu0 0
    %502 = vmatpush2.bf16.msra.mxu0 0
    %503 = vmatprep.mubr.bf16.mxu0 0
    %504 = vmatmul.mubr.bf16.gmra.mxu0 %v466
    %v505 = vpop.f32.mrf.mxu0
    %v506 = vadd.f32 0.0, %v505
    %v507 = vpop.f32.mrf.mxu0
    %v508 = vpop.f32.mrf.mxu0
    %v509 = vadd.f32 0.0, %v508
    %v510 = vpop.f32.mrf.mxu0
    %511 = vmatprep.mubr.bf16.mxu0 0
    %512 = vmatmul.mubr.bf16.gmra.mxu0 %v469
    %v513 = vpop.f32.mrf.mxu0
    %v514 = vadd.f32 0.0, %v513
    %v515 = vpop.f32.mrf.mxu0
    %v516 = vpop.f32.mrf.mxu0
    %v517 = vadd.f32 0.0, %v516
    %v518 = vpop.f32.mrf.mxu0
    %519 = vdwg.mxu0
    %v520 = vadd.f32 %v444, %v506
    %v521 = vadd.f32 %v445, %v509
    %v522 = vadd.f32 %v446, %v514
    %v523 = vadd.f32 %v447, %v517
    %v524 = vsel %vm308, %v520, 0.0
    %525 = vadd.xlane.f32.xlu0 %v524
    %v526 = vpop.xlane.xlu0 %525
    %v527 = vsel %vm308, %v521, 0.0
    %528 = vadd.xlane.f32.xlu0 %v527
    %v529 = vpop.xlane.xlu0 %528
    %v530 = vsel %vm308, %v522, 0.0
    %531 = vadd.xlane.f32.xlu0 %v530
    %v532 = vpop.xlane.xlu0 %531
    %v533 = vsel %vm308, %v523, 0.0
    %534 = vadd.xlane.f32.xlu0 %v533
    %v535 = vpop.xlane.xlu0 %534
    %v536 = vrcp.pop 32.0
    %v537 = vmul.f32 %v526, %v536
    %v538 = vmul.f32 %v529, %v536
    %v539 = vmul.f32 %v532, %v536
    %v540 = vmul.f32 %v535, %v536
    %v541 = vmul.f32 %v520, %v520
    %v542 = vmul.f32 %v521, %v521
    %v543 = vmul.f32 %v522, %v522
    %v544 = vmul.f32 %v523, %v523
    %v545 = vsel %vm308, %v541, 0.0
    %546 = vadd.xlane.f32.xlu0 %v545
    %v547 = vpop.xlane.xlu0 %546
    %v548 = vsel %vm308, %v542, 0.0
    %549 = vadd.xlane.f32.xlu0 %v548
    %v550 = vpop.xlane.xlu0 %549
    %v551 = vsel %vm308, %v543, 0.0
    %552 = vadd.xlane.f32.xlu0 %v551
    %v553 = vpop.xlane.xlu0 %552
    %v554 = vsel %vm308, %v544, 0.0
    %555 = vadd.xlane.f32.xlu0 %v554
    %v556 = vpop.xlane.xlu0 %555
    %v557 = vmul.f32 %v547, %v536
    %v558 = vmul.f32 %v550, %v536
    %v559 = vmul.f32 %v553, %v536
    %v560 = vmul.f32 %v556, %v536
    %v561 = vmul.f32 %v537, %v537
    %v562 = vmul.f32 %v538, %v538
    %v563 = vmul.f32 %v539, %v539
    %v564 = vmul.f32 %v540, %v540
    %v565 = vsub.f32 %v557, %v561
    %v566 = vsub.f32 %v558, %v562
    %v567 = vsub.f32 %v559, %v563
    %v568 = vsub.f32 %v560, %v564
    %v569 = vmax.f32 %v565, 0.0
    %v570 = vmax.f32 %v566, 0.0
    %v571 = vmax.f32 %v567, 0.0
    %v572 = vmax.f32 %v568, 0.0
    %v573 = vsub.f32 %v520, %v537
    %v574 = vsub.f32 %v521, %v538
    %v575 = vsub.f32 %v522, %v539
    %v576 = vsub.f32 %v523, %v540
    %v577 = vadd.f32 %v569, 1e-05
    %v578 = vadd.f32 %v570, 1e-05
    %v579 = vadd.f32 %v571, 1e-05
    %v580 = vadd.f32 %v572, 1e-05
    %v581 = vrsqrt.pop %v577
    %v582 = vrsqrt.pop %v578
    %v583 = vrsqrt.pop %v579
    %v584 = vrsqrt.pop %v580
    %v585 = vmul.f32 %v573, %v581
    %v586 = vmul.f32 %v574, %v582
    %v587 = vmul.f32 %v575, %v583
    %v588 = vmul.f32 %v576, %v584
    %v589 = vlaneseq
    %v590 = vshrl.u32 %v589, 7
    %v591 = vsub.s32 1, %v590
    %v592 = vrot.slane %v291, %v591
    %v593 = vmul.f32 %v585, %v592
    %v594 = vmul.f32 %v586, %v592
    %v595 = vmul.f32 %v587, %v592
    %v596 = vmul.f32 %v588, %v592
    %v597 = vlaneseq
    %v598 = vshrl.u32 %v597, 7
    %v599 = vsub.s32 2, %v598
    %v600 = vrot.slane %v291, %v599
    %v601 = vadd.f32 %v593, %v600
    %v602 = vadd.f32 %v594, %v600
    %v603 = vadd.f32 %v595, %v600
    %v604 = vadd.f32 %v596, %v600
    %v605 = vmax.f32 %v601, 0.0
    %v606 = vmax.f32 %v602, 0.0
    %v607 = vmax.f32 %v603, 0.0
    %v608 = vmax.f32 %v604, 0.0
    %v609 = vadd.f32 %v605, %v91
    %v610 = vadd.f32 %v606, %v92
    %v611 = vadd.f32 %v607, %v93
    %v612 = vadd.f32 %v608, %v94
    %v613 = vrot.slane %v609, 7
    %v614 = vrot.slane %v610, 7
    %v615 = vrot.slane %v611, 7
    %v616 = vrot.slane %v612, 7
    %v617 = vsel %vm259, %v615, %v616
    %v618 = vsel %vm259, %v614, %v615
    %v619 = vsel %vm259, %v613, %v614
    %v620 = vsel %vm259, %v616, %v613
    %v621 = vmul.f32 %v620, %v102
    %v622 = vmul.f32 %v619, %v107
    %v623 = vmul.f32 %v618, %v112
    %v624 = vmul.f32 %v617, %v117
    %v625 = vpack.c.bf16 %v622, %v621
    %v626 = vpack.c.bf16 %v624, %v623
    %v627 = vmul.f32 %v609, %v127
    %v628 = vmul.f32 %v610, %v132
    %v629 = vmul.f32 %v611, %v137
    %v630 = vmul.f32 %v612, %v142
    %v631 = vpack.c.bf16 %v628, %v627
    %v632 = vpack.c.bf16 %v630, %v629
    %v633 = vrot.slane %v609, 1
    %v634 = vrot.slane %v610, 1
    %v635 = vrot.slane %v611, 1
    %v636 = vrot.slane %v612, 1
    %v637 = vsel %vm280, %v635, %v636
    %v638 = vsel %vm280, %v634, %v635
    %v639 = vsel %vm280, %v633, %v634
    %v640 = vsel %vm280, %v636, %v633
    %v641 = vmul.f32 %v639, %v152
    %v642 = vmul.f32 %v638, %v157
    %v643 = vmul.f32 %v637, %v162
    %v644 = vmul.f32 %v640, %v167
    %v645 = vpack.c.bf16 %v642, %v641
    %v646 = vpack.c.bf16 %v644, %v643
    %s647 = scalar_lea.vmem %s8, 4
    %v648 = vld [vmem:[%s647] sm:$0x7]
    %s649 = scalar_lea.vmem %s7, 48
    %v650 = vld [vmem:[%s649] sm:$0xf]
    %v651 = vld [vmem:[%s649 + $0x4] sm:$0xf]
    %v652 = vld [vmem:[%s649 + $0x8] sm:$0xf]
    %v653 = vld [vmem:[%s649 + $0xc] sm:$0xf]
    %v658 = vunpack.c.l.b16 %v650
    %v659 = vunpack.c.l.b16 %v651
    %v660 = vunpack.c.l.b16 %v652
    %v661 = vunpack.c.l.b16 %v653
    %v662 = vpack.c.b16 %v659, %v658
    %v663 = vpack.c.b16 %v661, %v660
    %v667 = vsel %vm308, %v625, 0
    %v670 = vsel %vm308, %v626, 0
    %672 = vmatprep.subr.bf16.mxu0 0
    %673 = vmatpush1.bf16.msra.mxu0 0
    %674 = vmatprep.subr.bf16.mxu0 0
    %675 = vmatpush1.bf16.msra.mxu0 0
    %676 = vmatprep.subr.bf16.mxu0 0
    %677 = vmatpush1.bf16.msra.mxu0 0
    %678 = vmatprep.subr.bf16.mxu0 0
    %679 = vmatpush1.bf16.msra.mxu0 0
    %680 = vmatprep.subr.bf16.mxu0 0
    %681 = vmatpush1.bf16.msra.mxu0 0
    %682 = vmatprep.subr.bf16.mxu0 0
    %683 = vmatpush1.bf16.msra.mxu0 0
    %684 = vmatprep.subr.bf16.mxu0 0
    %685 = vmatpush1.bf16.msra.mxu0 %v663
    %686 = vmatprep.subr.bf16.mxu0 0
    %687 = vmatpush1.bf16.msra.mxu0 %v662
    %688 = vmatprep.subr.bf16.mxu0 0
    %689 = vmatpush2.bf16.msra.mxu0 0
    %690 = vmatprep.subr.bf16.mxu0 0
    %691 = vmatpush2.bf16.msra.mxu0 0
    %692 = vmatprep.subr.bf16.mxu0 0
    %693 = vmatpush2.bf16.msra.mxu0 0
    %694 = vmatprep.subr.bf16.mxu0 0
    %695 = vmatpush2.bf16.msra.mxu0 0
    %696 = vmatprep.subr.bf16.mxu0 0
    %697 = vmatpush2.bf16.msra.mxu0 0
    %698 = vmatprep.subr.bf16.mxu0 0
    %699 = vmatpush2.bf16.msra.mxu0 0
    %700 = vmatprep.subr.bf16.mxu0 0
    %701 = vmatpush2.bf16.msra.mxu0 0
    %702 = vmatprep.subr.bf16.mxu0 0
    %703 = vmatpush2.bf16.msra.mxu0 0
    %704 = vmatprep.mubr.bf16.mxu0 0
    %705 = vmatmul.mubr.bf16.gmra.mxu0 %v667
    %v706 = vpop.f32.mrf.mxu0
    %v707 = vadd.f32 0.0, %v706
    %v708 = vpop.f32.mrf.mxu0
    %v709 = vpop.f32.mrf.mxu0
    %v710 = vadd.f32 0.0, %v709
    %v711 = vpop.f32.mrf.mxu0
    %712 = vmatprep.mubr.bf16.mxu0 0
    %713 = vmatmul.mubr.bf16.gmra.mxu0 %v670
    %v714 = vpop.f32.mrf.mxu0
    %v715 = vadd.f32 0.0, %v714
    %v716 = vpop.f32.mrf.mxu0
    %v717 = vpop.f32.mrf.mxu0
    %v718 = vadd.f32 0.0, %v717
    %v719 = vpop.f32.mrf.mxu0
    %720 = vdwg.mxu0
    %v721 = vlaneseq
    %v722 = vshrl.u32 %v721, 7
    %v723 = vsub.s32 0, %v722
    %v724 = vrot.slane %v648, %v723
    %v725 = vadd.f32 %v724, %v707
    %v726 = vadd.f32 %v724, %v710
    %v727 = vadd.f32 %v724, %v715
    %v728 = vadd.f32 %v724, %v718
    %s729 = scalar_lea.vmem %s7, 64
    %v730 = vld [vmem:[%s729] sm:$0xf]
    %v731 = vld [vmem:[%s729 + $0x4] sm:$0xf]
    %v732 = vld [vmem:[%s729 + $0x8] sm:$0xf]
    %v733 = vld [vmem:[%s729 + $0xc] sm:$0xf]
    %v738 = vunpack.c.l.b16 %v730
    %v739 = vunpack.c.l.b16 %v731
    %v740 = vunpack.c.l.b16 %v732
    %v741 = vunpack.c.l.b16 %v733
    %v742 = vpack.c.b16 %v739, %v738
    %v743 = vpack.c.b16 %v741, %v740
    %v747 = vsel %vm308, %v631, 0
    %v750 = vsel %vm308, %v632, 0
    %752 = vmatprep.subr.bf16.mxu0 0
    %753 = vmatpush1.bf16.msra.mxu0 0
    %754 = vmatprep.subr.bf16.mxu0 0
    %755 = vmatpush1.bf16.msra.mxu0 0
    %756 = vmatprep.subr.bf16.mxu0 0
    %757 = vmatpush1.bf16.msra.mxu0 0
    %758 = vmatprep.subr.bf16.mxu0 0
    %759 = vmatpush1.bf16.msra.mxu0 0
    %760 = vmatprep.subr.bf16.mxu0 0
    %761 = vmatpush1.bf16.msra.mxu0 0
    %762 = vmatprep.subr.bf16.mxu0 0
    %763 = vmatpush1.bf16.msra.mxu0 0
    %764 = vmatprep.subr.bf16.mxu0 0
    %765 = vmatpush1.bf16.msra.mxu0 %v743
    %766 = vmatprep.subr.bf16.mxu0 0
    %767 = vmatpush1.bf16.msra.mxu0 %v742
    %768 = vmatprep.subr.bf16.mxu0 0
    %769 = vmatpush2.bf16.msra.mxu0 0
    %770 = vmatprep.subr.bf16.mxu0 0
    %771 = vmatpush2.bf16.msra.mxu0 0
    %772 = vmatprep.subr.bf16.mxu0 0
    %773 = vmatpush2.bf16.msra.mxu0 0
    %774 = vmatprep.subr.bf16.mxu0 0
    %775 = vmatpush2.bf16.msra.mxu0 0
    %776 = vmatprep.subr.bf16.mxu0 0
    %777 = vmatpush2.bf16.msra.mxu0 0
    %778 = vmatprep.subr.bf16.mxu0 0
    %779 = vmatpush2.bf16.msra.mxu0 0
    %780 = vmatprep.subr.bf16.mxu0 0
    %781 = vmatpush2.bf16.msra.mxu0 0
    %782 = vmatprep.subr.bf16.mxu0 0
    %783 = vmatpush2.bf16.msra.mxu0 0
    %784 = vmatprep.mubr.bf16.mxu0 0
    %785 = vmatmul.mubr.bf16.gmra.mxu0 %v747
    %v786 = vpop.f32.mrf.mxu0
    %v787 = vadd.f32 0.0, %v786
    %v788 = vpop.f32.mrf.mxu0
    %v789 = vpop.f32.mrf.mxu0
    %v790 = vadd.f32 0.0, %v789
    %v791 = vpop.f32.mrf.mxu0
    %792 = vmatprep.mubr.bf16.mxu0 0
    %793 = vmatmul.mubr.bf16.gmra.mxu0 %v750
    %v794 = vpop.f32.mrf.mxu0
    %v795 = vadd.f32 0.0, %v794
    %v796 = vpop.f32.mrf.mxu0
    %v797 = vpop.f32.mrf.mxu0
    %v798 = vadd.f32 0.0, %v797
    %v799 = vpop.f32.mrf.mxu0
    %800 = vdwg.mxu0
    %v801 = vadd.f32 %v725, %v787
    %v802 = vadd.f32 %v726, %v790
    %v803 = vadd.f32 %v727, %v795
    %v804 = vadd.f32 %v728, %v798
    %s805 = scalar_lea.vmem %s7, 80
    %v806 = vld [vmem:[%s805] sm:$0xf]
    %v807 = vld [vmem:[%s805 + $0x4] sm:$0xf]
    %v808 = vld [vmem:[%s805 + $0x8] sm:$0xf]
    %v809 = vld [vmem:[%s805 + $0xc] sm:$0xf]
    %v814 = vunpack.c.l.b16 %v806
    %v815 = vunpack.c.l.b16 %v807
    %v816 = vunpack.c.l.b16 %v808
    %v817 = vunpack.c.l.b16 %v809
    %v818 = vpack.c.b16 %v815, %v814
    %v819 = vpack.c.b16 %v817, %v816
    %v823 = vsel %vm308, %v645, 0
    %v826 = vsel %vm308, %v646, 0
    %828 = vmatprep.subr.bf16.mxu0 0
    %829 = vmatpush1.bf16.msra.mxu0 0
    %830 = vmatprep.subr.bf16.mxu0 0
    %831 = vmatpush1.bf16.msra.mxu0 0
    %832 = vmatprep.subr.bf16.mxu0 0
    %833 = vmatpush1.bf16.msra.mxu0 0
    %834 = vmatprep.subr.bf16.mxu0 0
    %835 = vmatpush1.bf16.msra.mxu0 0
    %836 = vmatprep.subr.bf16.mxu0 0
    %837 = vmatpush1.bf16.msra.mxu0 0
    %838 = vmatprep.subr.bf16.mxu0 0
    %839 = vmatpush1.bf16.msra.mxu0 0
    %840 = vmatprep.subr.bf16.mxu0 0
    %841 = vmatpush1.bf16.msra.mxu0 %v819
    %842 = vmatprep.subr.bf16.mxu0 0
    %843 = vmatpush1.bf16.msra.mxu0 %v818
    %844 = vmatprep.subr.bf16.mxu0 0
    %845 = vmatpush2.bf16.msra.mxu0 0
    %846 = vmatprep.subr.bf16.mxu0 0
    %847 = vmatpush2.bf16.msra.mxu0 0
    %848 = vmatprep.subr.bf16.mxu0 0
    %849 = vmatpush2.bf16.msra.mxu0 0
    %850 = vmatprep.subr.bf16.mxu0 0
    %851 = vmatpush2.bf16.msra.mxu0 0
    %852 = vmatprep.subr.bf16.mxu0 0
    %853 = vmatpush2.bf16.msra.mxu0 0
    %854 = vmatprep.subr.bf16.mxu0 0
    %855 = vmatpush2.bf16.msra.mxu0 0
    %856 = vmatprep.subr.bf16.mxu0 0
    %857 = vmatpush2.bf16.msra.mxu0 0
    %858 = vmatprep.subr.bf16.mxu0 0
    %859 = vmatpush2.bf16.msra.mxu0 0
    %860 = vmatprep.mubr.bf16.mxu0 0
    %861 = vmatmul.mubr.bf16.gmra.mxu0 %v823
    %v862 = vpop.f32.mrf.mxu0
    %v863 = vadd.f32 0.0, %v862
    %v864 = vpop.f32.mrf.mxu0
    %v865 = vpop.f32.mrf.mxu0
    %v866 = vadd.f32 0.0, %v865
    %v867 = vpop.f32.mrf.mxu0
    %868 = vmatprep.mubr.bf16.mxu0 0
    %869 = vmatmul.mubr.bf16.gmra.mxu0 %v826
    %v870 = vpop.f32.mrf.mxu0
    %v871 = vadd.f32 0.0, %v870
    %v872 = vpop.f32.mrf.mxu0
    %v873 = vpop.f32.mrf.mxu0
    %v874 = vadd.f32 0.0, %v873
    %v875 = vpop.f32.mrf.mxu0
    %876 = vdwg.mxu0
    %v877 = vadd.f32 %v801, %v863
    %v878 = vadd.f32 %v802, %v866
    %v879 = vadd.f32 %v803, %v871
    %v880 = vadd.f32 %v804, %v874
    %v881 = vsel %vm308, %v877, 0.0
    %882 = vadd.xlane.f32.xlu0 %v881
    %v883 = vpop.xlane.xlu0 %882
    %v884 = vsel %vm308, %v878, 0.0
    %885 = vadd.xlane.f32.xlu0 %v884
    %v886 = vpop.xlane.xlu0 %885
    %v887 = vsel %vm308, %v879, 0.0
    %888 = vadd.xlane.f32.xlu0 %v887
    %v889 = vpop.xlane.xlu0 %888
    %v890 = vsel %vm308, %v880, 0.0
    %891 = vadd.xlane.f32.xlu0 %v890
    %v892 = vpop.xlane.xlu0 %891
    %v893 = vmul.f32 %v883, %v536
    %v894 = vmul.f32 %v886, %v536
    %v895 = vmul.f32 %v889, %v536
    %v896 = vmul.f32 %v892, %v536
    %v897 = vmul.f32 %v877, %v877
    %v898 = vmul.f32 %v878, %v878
    %v899 = vmul.f32 %v879, %v879
    %v900 = vmul.f32 %v880, %v880
    %v901 = vsel %vm308, %v897, 0.0
    %902 = vadd.xlane.f32.xlu0 %v901
    %v903 = vpop.xlane.xlu0 %902
    %v904 = vsel %vm308, %v898, 0.0
    %905 = vadd.xlane.f32.xlu0 %v904
    %v906 = vpop.xlane.xlu0 %905
    %v907 = vsel %vm308, %v899, 0.0
    %908 = vadd.xlane.f32.xlu0 %v907
    %v909 = vpop.xlane.xlu0 %908
    %v910 = vsel %vm308, %v900, 0.0
    %911 = vadd.xlane.f32.xlu0 %v910
    %v912 = vpop.xlane.xlu0 %911
    %v913 = vmul.f32 %v903, %v536
    %v914 = vmul.f32 %v906, %v536
    %v915 = vmul.f32 %v909, %v536
    %v916 = vmul.f32 %v912, %v536
    %v917 = vmul.f32 %v893, %v893
    %v918 = vmul.f32 %v894, %v894
    %v919 = vmul.f32 %v895, %v895
    %v920 = vmul.f32 %v896, %v896
    %v921 = vsub.f32 %v913, %v917
    %v922 = vsub.f32 %v914, %v918
    %v923 = vsub.f32 %v915, %v919
    %v924 = vsub.f32 %v916, %v920
    %v925 = vmax.f32 %v921, 0.0
    %v926 = vmax.f32 %v922, 0.0
    %v927 = vmax.f32 %v923, 0.0
    %v928 = vmax.f32 %v924, 0.0
    %v929 = vsub.f32 %v877, %v893
    %v930 = vsub.f32 %v878, %v894
    %v931 = vsub.f32 %v879, %v895
    %v932 = vsub.f32 %v880, %v896
    %v933 = vadd.f32 %v925, 1e-05
    %v934 = vadd.f32 %v926, 1e-05
    %v935 = vadd.f32 %v927, 1e-05
    %v936 = vadd.f32 %v928, 1e-05
    %v937 = vrsqrt.pop %v933
    %v938 = vrsqrt.pop %v934
    %v939 = vrsqrt.pop %v935
    %v940 = vrsqrt.pop %v936
    %v941 = vmul.f32 %v929, %v937
    %v942 = vmul.f32 %v930, %v938
    %v943 = vmul.f32 %v931, %v939
    %v944 = vmul.f32 %v932, %v940
    %v945 = vlaneseq
    %v946 = vshrl.u32 %v945, 7
    %v947 = vsub.s32 1, %v946
    %v948 = vrot.slane %v648, %v947
    %v949 = vmul.f32 %v941, %v948
    %v950 = vmul.f32 %v942, %v948
    %v951 = vmul.f32 %v943, %v948
    %v952 = vmul.f32 %v944, %v948
    %v953 = vlaneseq
    %v954 = vshrl.u32 %v953, 7
    %v955 = vsub.s32 2, %v954
    %v956 = vrot.slane %v648, %v955
    %v957 = vadd.f32 %v949, %v956
    %v958 = vadd.f32 %v950, %v956
    %v959 = vadd.f32 %v951, %v956
    %v960 = vadd.f32 %v952, %v956
    %v961 = vmax.f32 %v957, 0.0
    %v962 = vmax.f32 %v958, 0.0
    %v963 = vmax.f32 %v959, 0.0
    %v964 = vmax.f32 %v960, 0.0
    %v965 = vadd.f32 %v961, %v609
    %v966 = vadd.f32 %v962, %v610
    %v967 = vadd.f32 %v963, %v611
    %v968 = vadd.f32 %v964, %v612
    %v969 = vpack.c.bf16 %v966, %v965
    %v970 = vpack.c.bf16 %v968, %v967
    %v971 = vld [vmem:[%s9] sm:$0xf]
    %v972 = vld [vmem:[%s9 + $0x4] sm:$0xf]
    %v973 = vld [vmem:[%s9 + $0x8] sm:$0xf]
    %v974 = vld [vmem:[%s9 + $0xc] sm:$0xf]
    %v975 = vld [vmem:[%s10] sm:$0x1]
    %v977 = vlaneseq
    %v978 = vshrl.u32 %v977, 7
    %v979 = vsub.s32 0, %v978
    %v980 = vrot.slane %v975, %v979
    %v986 = vunpack.c.l.b16 %v971
    %v987 = vunpack.c.l.b16 %v972
    %v988 = vunpack.c.l.b16 %v973
    %v989 = vunpack.c.l.b16 %v974
    %v990 = vpack.c.b16 %v987, %v986
    %v991 = vpack.c.b16 %v989, %v988
    %v995 = vsel %vm308, %v969, 0
    %v998 = vsel %vm308, %v970, 0
    %1000 = vmatprep.subr.bf16.mxu0 0
    %1001 = vmatpush1.bf16.msra.mxu0 0
    %1002 = vmatprep.subr.bf16.mxu0 0
    %1003 = vmatpush1.bf16.msra.mxu0 0
    %1004 = vmatprep.subr.bf16.mxu0 0
    %1005 = vmatpush1.bf16.msra.mxu0 0
    %1006 = vmatprep.subr.bf16.mxu0 0
    %1007 = vmatpush1.bf16.msra.mxu0 0
    %1008 = vmatprep.subr.bf16.mxu0 0
    %1009 = vmatpush1.bf16.msra.mxu0 0
    %1010 = vmatprep.subr.bf16.mxu0 0
    %1011 = vmatpush1.bf16.msra.mxu0 0
    %1012 = vmatprep.subr.bf16.mxu0 0
    %1013 = vmatpush1.bf16.msra.mxu0 %v991
    %1014 = vmatprep.subr.bf16.mxu0 0
    %1015 = vmatpush1.bf16.msra.mxu0 %v990
    %1016 = vmatprep.subr.bf16.mxu0 0
    %1017 = vmatpush2.bf16.msra.mxu0 0
    %1018 = vmatprep.subr.bf16.mxu0 0
    %1019 = vmatpush2.bf16.msra.mxu0 0
    %1020 = vmatprep.subr.bf16.mxu0 0
    %1021 = vmatpush2.bf16.msra.mxu0 0
    %1022 = vmatprep.subr.bf16.mxu0 0
    %1023 = vmatpush2.bf16.msra.mxu0 0
    %1024 = vmatprep.subr.bf16.mxu0 0
    %1025 = vmatpush2.bf16.msra.mxu0 0
    %1026 = vmatprep.subr.bf16.mxu0 0
    %1027 = vmatpush2.bf16.msra.mxu0 0
    %1028 = vmatprep.subr.bf16.mxu0 0
    %1029 = vmatpush2.bf16.msra.mxu0 0
    %1030 = vmatprep.subr.bf16.mxu0 0
    %1031 = vmatpush2.bf16.msra.mxu0 0
    %1032 = vmatprep.mubr.bf16.mxu0 0
    %1033 = vmatmul.mubr.bf16.gmra.mxu0 %v995
    %v1034 = vpop.f32.mrf.mxu0
    %v1035 = vadd.f32 %v980, %v1034
    %v1036 = vpop.f32.mrf.mxu0
    %v1037 = vpop.f32.mrf.mxu0
    %v1038 = vadd.f32 %v980, %v1037
    %v1039 = vpop.f32.mrf.mxu0
    %1040 = vmatprep.mubr.bf16.mxu0 0
    %1041 = vmatmul.mubr.bf16.gmra.mxu0 %v998
    %v1042 = vpop.f32.mrf.mxu0
    %v1043 = vadd.f32 %v980, %v1042
    %v1044 = vpop.f32.mrf.mxu0
    %v1045 = vpop.f32.mrf.mxu0
    %v1046 = vadd.f32 %v980, %v1045
    %v1047 = vpop.f32.mrf.mxu0
    %1048 = vdwg.mxu0
    %s1049 = scalar_lea.vmem %s9, 16
    %v1050 = vld [vmem:[%s1049] sm:$0xf]
    %v1051 = vld [vmem:[%s1049 + $0x4] sm:$0xf]
    %v1052 = vld [vmem:[%s1049 + $0x8] sm:$0xf]
    %v1053 = vld [vmem:[%s1049 + $0xc] sm:$0xf]
    %s1054 = scalar_lea.vmem %s10, 1
    %v1055 = vld [vmem:[%s1054] sm:$0x1]
    %v1057 = vlaneseq
    %v1058 = vshrl.u32 %v1057, 7
    %v1059 = vsub.s32 0, %v1058
    %v1060 = vrot.slane %v1055, %v1059
    %v1066 = vunpack.c.l.b16 %v1050
    %v1067 = vunpack.c.l.b16 %v1051
    %v1068 = vunpack.c.l.b16 %v1052
    %v1069 = vunpack.c.l.b16 %v1053
    %v1070 = vpack.c.b16 %v1067, %v1066
    %v1071 = vpack.c.b16 %v1069, %v1068
    %v1075 = vsel %vm308, %v252, 0
    %1077 = vmatprep.subr.bf16.mxu0 0
    %1078 = vmatpush1.bf16.msra.mxu0 0
    %1079 = vmatprep.subr.bf16.mxu0 0
    %1080 = vmatpush1.bf16.msra.mxu0 0
    %1081 = vmatprep.subr.bf16.mxu0 0
    %1082 = vmatpush1.bf16.msra.mxu0 0
    %1083 = vmatprep.subr.bf16.mxu0 0
    %1084 = vmatpush1.bf16.msra.mxu0 0
    %1085 = vmatprep.subr.bf16.mxu0 0
    %1086 = vmatpush1.bf16.msra.mxu0 0
    %1087 = vmatprep.subr.bf16.mxu0 0
    %1088 = vmatpush1.bf16.msra.mxu0 0
    %1089 = vmatprep.subr.bf16.mxu0 0
    %1090 = vmatpush1.bf16.msra.mxu0 %v1071
    %1091 = vmatprep.subr.bf16.mxu0 0
    %1092 = vmatpush1.bf16.msra.mxu0 %v1070
    %1093 = vmatprep.subr.bf16.mxu0 0
    %1094 = vmatpush2.bf16.msra.mxu0 0
    %1095 = vmatprep.subr.bf16.mxu0 0
    %1096 = vmatpush2.bf16.msra.mxu0 0
    %1097 = vmatprep.subr.bf16.mxu0 0
    %1098 = vmatpush2.bf16.msra.mxu0 0
    %1099 = vmatprep.subr.bf16.mxu0 0
    %1100 = vmatpush2.bf16.msra.mxu0 0
    %1101 = vmatprep.subr.bf16.mxu0 0
    %1102 = vmatpush2.bf16.msra.mxu0 0
    %1103 = vmatprep.subr.bf16.mxu0 0
    %1104 = vmatpush2.bf16.msra.mxu0 0
    %1105 = vmatprep.subr.bf16.mxu0 0
    %1106 = vmatpush2.bf16.msra.mxu0 0
    %1107 = vmatprep.subr.bf16.mxu0 0
    %1108 = vmatpush2.bf16.msra.mxu0 0
    %1109 = vmatprep.mubr.bf16.mxu0 0
    %1110 = vmatmul.mubr.bf16.gmra.mxu0 %v1075
    %v1111 = vpop.f32.mrf.mxu0
    %v1112 = vadd.f32 %v1060, %v1111
    %v1113 = vpop.f32.mrf.mxu0
    %v1114 = vpop.f32.mrf.mxu0
    %v1115 = vadd.f32 %v1060, %v1114
    %v1116 = vpop.f32.mrf.mxu0
    %1117 = vdwg.mxu0
    %s1118 = scalar_lea.vmem %s9, 32
    %v1119 = vld [vmem:[%s1118] sm:$0xf]
    %v1120 = vld [vmem:[%s1118 + $0x4] sm:$0xf]
    %v1121 = vld [vmem:[%s1118 + $0x8] sm:$0xf]
    %v1122 = vld [vmem:[%s1118 + $0xc] sm:$0xf]
    %s1123 = scalar_lea.vmem %s10, 2
    %v1124 = vld [vmem:[%s1123] sm:$0x1]
    %v1126 = vlaneseq
    %v1127 = vshrl.u32 %v1126, 7
    %v1128 = vsub.s32 0, %v1127
    %v1129 = vrot.slane %v1124, %v1128
    %v1135 = vunpack.c.l.b16 %v1119
    %v1136 = vunpack.c.l.b16 %v1120
    %v1137 = vunpack.c.l.b16 %v1121
    %v1138 = vunpack.c.l.b16 %v1122
    %v1139 = vpack.c.b16 %v1136, %v1135
    %v1140 = vpack.c.b16 %v1138, %v1137
    %1143 = vmatprep.subr.bf16.mxu0 0
    %1144 = vmatpush1.bf16.msra.mxu0 0
    %1145 = vmatprep.subr.bf16.mxu0 0
    %1146 = vmatpush1.bf16.msra.mxu0 0
    %1147 = vmatprep.subr.bf16.mxu0 0
    %1148 = vmatpush1.bf16.msra.mxu0 0
    %1149 = vmatprep.subr.bf16.mxu0 0
    %1150 = vmatpush1.bf16.msra.mxu0 0
    %1151 = vmatprep.subr.bf16.mxu0 0
    %1152 = vmatpush1.bf16.msra.mxu0 0
    %1153 = vmatprep.subr.bf16.mxu0 0
    %1154 = vmatpush1.bf16.msra.mxu0 0
    %1155 = vmatprep.subr.bf16.mxu0 0
    %1156 = vmatpush1.bf16.msra.mxu0 %v1140
    %1157 = vmatprep.subr.bf16.mxu0 0
    %1158 = vmatpush1.bf16.msra.mxu0 %v1139
    %1159 = vmatprep.subr.bf16.mxu0 0
    %1160 = vmatpush2.bf16.msra.mxu0 0
    %1161 = vmatprep.subr.bf16.mxu0 0
    %1162 = vmatpush2.bf16.msra.mxu0 0
    %1163 = vmatprep.subr.bf16.mxu0 0
    %1164 = vmatpush2.bf16.msra.mxu0 0
    %1165 = vmatprep.subr.bf16.mxu0 0
    %1166 = vmatpush2.bf16.msra.mxu0 0
    %1167 = vmatprep.subr.bf16.mxu0 0
    %1168 = vmatpush2.bf16.msra.mxu0 0
    %1169 = vmatprep.subr.bf16.mxu0 0
    %1170 = vmatpush2.bf16.msra.mxu0 0
    %1171 = vmatprep.subr.bf16.mxu0 0
    %1172 = vmatpush2.bf16.msra.mxu0 0
    %1173 = vmatprep.subr.bf16.mxu0 0
    %1174 = vmatpush2.bf16.msra.mxu0 0
    %1175 = vmatprep.mubr.bf16.mxu0 0
    %1176 = vmatmul.mubr.bf16.gmra.mxu0 %v1075
    %v1177 = vpop.f32.mrf.mxu0
    %v1178 = vadd.f32 %v1129, %v1177
    %v1179 = vpop.f32.mrf.mxu0
    %v1180 = vpop.f32.mrf.mxu0
    %v1181 = vadd.f32 %v1129, %v1180
    %v1182 = vpop.f32.mrf.mxu0
    %1183 = vdwg.mxu0
    %v1184 = vpack.c.bf16 %v1038, %v1035
    %v1185 = vpack.c.bf16 %v1046, %v1043
    %v1186 = vpack.c.bf16 %v1115, %v1112
    %v1187 = vpack.c.bf16 %v1181, %v1178
    %vm1188 = vcmask 130048
    %v1190 = vsel %vm1188, %v1184, 0
    %v1193 = vsel %vm1188, %v1185, 0
    %v1196 = vsel %vm1188, %v1186, 0
    %1198 = vmatprep.subr.bf16.mxu0 0
    %1199 = vmatpush1.bf16.xpose.msra.mxu0 0
    %1200 = vmatprep.subr.bf16.mxu0 0
    %1201 = vmatpush1.bf16.xpose.msra.mxu0 0
    %1202 = vmatprep.subr.bf16.mxu0 0
    %1203 = vmatpush1.bf16.xpose.msra.mxu0 0
    %1204 = vmatprep.subr.bf16.mxu0 0
    %1205 = vmatpush1.bf16.xpose.msra.mxu0 0
    %1206 = vmatprep.subr.bf16.mxu0 0
    %1207 = vmatpush1.bf16.xpose.msra.mxu0 0
    %1208 = vmatprep.subr.bf16.mxu0 0
    %1209 = vmatpush1.bf16.xpose.msra.mxu0 0
    %1210 = vmatprep.subr.bf16.mxu0 0
    %1211 = vmatpush1.bf16.xpose.msra.mxu0 0
    %1212 = vmatprep.subr.bf16.mxu0 0
    %1213 = vmatpush1.bf16.xpose.msra.mxu0 %v1196
    %1214 = vmatprep.subr.bf16.mxu0 0
    %1215 = vmatpush2.bf16.xpose.msra.mxu0 0
    %1216 = vmatprep.subr.bf16.mxu0 0
    %1217 = vmatpush2.bf16.xpose.msra.mxu0 0
    %1218 = vmatprep.subr.bf16.mxu0 0
    %1219 = vmatpush2.bf16.xpose.msra.mxu0 0
    %1220 = vmatprep.subr.bf16.mxu0 0
    %1221 = vmatpush2.bf16.xpose.msra.mxu0 0
    %1222 = vmatprep.subr.bf16.mxu0 0
    %1223 = vmatpush2.bf16.xpose.msra.mxu0 0
    %1224 = vmatprep.subr.bf16.mxu0 0
    %1225 = vmatpush2.bf16.xpose.msra.mxu0 0
    %1226 = vmatprep.subr.bf16.mxu0 0
    %1227 = vmatpush2.bf16.xpose.msra.mxu0 0
    %1228 = vmatprep.subr.bf16.mxu0 0
    %1229 = vmatpush2.bf16.xpose.msra.mxu0 0
    %1230 = vmatprep.mubr.bf16.mxu0 0
    %1231 = vmatmul.mubr.bf16.gmra.mxu0 %v1190
    %v1232 = vpop.f32.mrf.mxu0
    %v1233 = vadd.f32 %v169, %v1232
    %v1234 = vpop.f32.mrf.mxu0
    %v1235 = vpop.f32.mrf.mxu0
    %v1236 = vadd.f32 %v170, %v1235
    %v1237 = vpop.f32.mrf.mxu0
    %1238 = vmatprep.mubr.bf16.mxu0 0
    %1239 = vmatmul.mubr.bf16.gmra.mxu0 %v1193
    %v1240 = vpop.f32.mrf.mxu0
    %v1241 = vadd.f32 %v171, %v1240
    %v1242 = vpop.f32.mrf.mxu0
    %v1243 = vpop.f32.mrf.mxu0
    %v1244 = vadd.f32 %v172, %v1243
    %v1245 = vpop.f32.mrf.mxu0
    %1246 = vdwg.mxu0
    %v1247 = vsel %vm1188, %v1233, -inf
    %1248 = vmax.xlane.f32.xlu0 %v1247
    %v1249 = vpop.xlane.xlu0 %1248
    %v1250 = vsel %vm1188, %v1236, -inf
    %1251 = vmax.xlane.f32.xlu0 %v1250
    %v1252 = vpop.xlane.xlu0 %1251
    %v1253 = vsel %vm1188, %v1241, -inf
    %1254 = vmax.xlane.f32.xlu0 %v1253
    %v1255 = vpop.xlane.xlu0 %1254
    %v1256 = vsel %vm1188, %v1244, -inf
    %1257 = vmax.xlane.f32.xlu0 %v1256
    %v1258 = vpop.xlane.xlu0 %1257
    %v1259 = vsub.f32 %v1233, %v1249
    %v1260 = vsub.f32 %v1236, %v1252
    %v1261 = vsub.f32 %v1241, %v1255
    %v1262 = vsub.f32 %v1244, %v1258
    %v1263 = vmul.f32 %v1259, 1.442695
    %v1264 = vpow.pop %v1263
    %v1265 = vmul.f32 %v1260, 1.442695
    %v1266 = vpow.pop %v1265
    %v1267 = vmul.f32 %v1261, 1.442695
    %v1268 = vpow.pop %v1267
    %v1269 = vmul.f32 %v1262, 1.442695
    %v1270 = vpow.pop %v1269
    %v1271 = vsel %vm1188, %v1264, 0.0
    %1272 = vadd.xlane.f32.xlu0 %v1271
    %v1273 = vpop.xlane.xlu0 %1272
    %v1274 = vsel %vm1188, %v1266, 0.0
    %1275 = vadd.xlane.f32.xlu0 %v1274
    %v1276 = vpop.xlane.xlu0 %1275
    %v1277 = vsel %vm1188, %v1268, 0.0
    %1278 = vadd.xlane.f32.xlu0 %v1277
    %v1279 = vpop.xlane.xlu0 %1278
    %v1280 = vsel %vm1188, %v1270, 0.0
    %1281 = vadd.xlane.f32.xlu0 %v1280
    %v1282 = vpop.xlane.xlu0 %1281
    %v1283 = vrcp.pop %v1273
    %v1284 = vrcp.pop %v1276
    %v1285 = vrcp.pop %v1279
    %v1286 = vrcp.pop %v1282
    %v1287 = vmul.f32 %v1264, %v1283
    %v1288 = vmul.f32 %v1266, %v1284
    %v1289 = vmul.f32 %v1268, %v1285
    %v1290 = vmul.f32 %v1270, %v1286
    %v1291 = vpack.c.bf16 %v1288, %v1287
    %v1292 = vpack.c.bf16 %v1290, %v1289
    %v1294 = vsel %vm1188, %v1291, 0
    %v1297 = vsel %vm1188, %v1292, 0
    %1299 = vmatprep.subr.bf16.mxu0 0
    %1300 = vmatpush1.bf16.msra.mxu0 0
    %1301 = vmatprep.subr.bf16.mxu0 0
    %1302 = vmatpush1.bf16.msra.mxu0 0
    %1303 = vmatprep.subr.bf16.mxu0 0
    %1304 = vmatpush1.bf16.msra.mxu0 0
    %1305 = vmatprep.subr.bf16.mxu0 0
    %1306 = vmatpush1.bf16.msra.mxu0 0
    %1307 = vmatprep.subr.bf16.mxu0 0
    %1308 = vmatpush1.bf16.msra.mxu0 0
    %1309 = vmatprep.subr.bf16.mxu0 0
    %1310 = vmatpush1.bf16.msra.mxu0 0
    %1311 = vmatprep.subr.bf16.mxu0 0
    %1312 = vmatpush1.bf16.msra.mxu0 0
    %1313 = vmatprep.subr.bf16.mxu0 0
    %1314 = vmatpush1.bf16.msra.mxu0 %v1187
    %1315 = vmatprep.subr.bf16.mxu0 0
    %1316 = vmatpush2.bf16.msra.mxu0 0
    %1317 = vmatprep.subr.bf16.mxu0 0
    %1318 = vmatpush2.bf16.msra.mxu0 0
    %1319 = vmatprep.subr.bf16.mxu0 0
    %1320 = vmatpush2.bf16.msra.mxu0 0
    %1321 = vmatprep.subr.bf16.mxu0 0
    %1322 = vmatpush2.bf16.msra.mxu0 0
    %1323 = vmatprep.subr.bf16.mxu0 0
    %1324 = vmatpush2.bf16.msra.mxu0 0
    %1325 = vmatprep.subr.bf16.mxu0 0
    %1326 = vmatpush2.bf16.msra.mxu0 0
    %1327 = vmatprep.subr.bf16.mxu0 0
    %1328 = vmatpush2.bf16.msra.mxu0 0
    %1329 = vmatprep.subr.bf16.mxu0 0
    %1330 = vmatpush2.bf16.msra.mxu0 0
    %1331 = vmatprep.mubr.bf16.mxu0 0
    %1332 = vmatmul.mubr.bf16.gmra.mxu0 %v1294
    %v1333 = vpop.f32.mrf.mxu0
    %v1334 = vadd.f32 0.0, %v1333
    %v1335 = vpop.f32.mrf.mxu0
    %v1336 = vpop.f32.mrf.mxu0
    %v1337 = vadd.f32 0.0, %v1336
    %v1338 = vpop.f32.mrf.mxu0
    %1339 = vmatprep.mubr.bf16.mxu0 0
    %1340 = vmatmul.mubr.bf16.gmra.mxu0 %v1297
    %v1341 = vpop.f32.mrf.mxu0
    %v1342 = vadd.f32 0.0, %v1341
    %v1343 = vpop.f32.mrf.mxu0
    %v1344 = vpop.f32.mrf.mxu0
    %v1345 = vadd.f32 0.0, %v1344
    %v1346 = vpop.f32.mrf.mxu0
    %1347 = vdwg.mxu0
    %v1348 = vpack.c.bf16 %v1337, %v1334
    %v1349 = vpack.c.bf16 %v1345, %v1342
    %v1350 = vld [vmem:[%s11] sm:$0xf]
    %v1351 = vld [vmem:[%s11 + $0x4] sm:$0xf]
    %v1352 = vld [vmem:[%s11 + $0x8] sm:$0xf]
    %v1353 = vld [vmem:[%s11 + $0xc] sm:$0xf]
    %1356 = vrot.lane.b32.xlu0 %v1184, 112
    %v1357 = vpop.permute.xlu0 %1356
    %1358 = vrot.lane.b32.xlu0 %v1185, 112
    %v1359 = vpop.permute.xlu0 %1358
    %1361 = vrot.lane.b32.xlu0 %v1186, 112
    %v1362 = vpop.permute.xlu0 %1361
    %v1364 = vsel %vm1188, %v1357, 0
    %v1367 = vsel %vm1188, %v1359, 0
    %v1370 = vsel %vm1188, %v1362, 0
    %1372 = vmatprep.subr.bf16.mxu0 0
    %1373 = vmatpush1.bf16.xpose.msra.mxu0 0
    %1374 = vmatprep.subr.bf16.mxu0 0
    %1375 = vmatpush1.bf16.xpose.msra.mxu0 0
    %1376 = vmatprep.subr.bf16.mxu0 0
    %1377 = vmatpush1.bf16.xpose.msra.mxu0 0
    %1378 = vmatprep.subr.bf16.mxu0 0
    %1379 = vmatpush1.bf16.xpose.msra.mxu0 0
    %1380 = vmatprep.subr.bf16.mxu0 0
    %1381 = vmatpush1.bf16.xpose.msra.mxu0 0
    %1382 = vmatprep.subr.bf16.mxu0 0
    %1383 = vmatpush1.bf16.xpose.msra.mxu0 0
    %1384 = vmatprep.subr.bf16.mxu0 0
    %1385 = vmatpush1.bf16.xpose.msra.mxu0 0
    %1386 = vmatprep.subr.bf16.mxu0 0
    %1387 = vmatpush1.bf16.xpose.msra.mxu0 %v1370
    %1388 = vmatprep.subr.bf16.mxu0 0
    %1389 = vmatpush2.bf16.xpose.msra.mxu0 0
    %1390 = vmatprep.subr.bf16.mxu0 0
    %1391 = vmatpush2.bf16.xpose.msra.mxu0 0
    %1392 = vmatprep.subr.bf16.mxu0 0
    %1393 = vmatpush2.bf16.xpose.msra.mxu0 0
    %1394 = vmatprep.subr.bf16.mxu0 0
    %1395 = vmatpush2.bf16.xpose.msra.mxu0 0
    %1396 = vmatprep.subr.bf16.mxu0 0
    %1397 = vmatpush2.bf16.xpose.msra.mxu0 0
    %1398 = vmatprep.subr.bf16.mxu0 0
    %1399 = vmatpush2.bf16.xpose.msra.mxu0 0
    %1400 = vmatprep.subr.bf16.mxu0 0
    %1401 = vmatpush2.bf16.xpose.msra.mxu0 0
    %1402 = vmatprep.subr.bf16.mxu0 0
    %1403 = vmatpush2.bf16.xpose.msra.mxu0 0
    %1404 = vmatprep.mubr.bf16.mxu0 0
    %1405 = vmatmul.mubr.bf16.gmra.mxu0 %v1364
    %v1406 = vpop.f32.mrf.mxu0
    %v1407 = vadd.f32 %v169, %v1406
    %v1408 = vpop.f32.mrf.mxu0
    %v1409 = vpop.f32.mrf.mxu0
    %v1410 = vadd.f32 %v170, %v1409
    %v1411 = vpop.f32.mrf.mxu0
    %1412 = vmatprep.mubr.bf16.mxu0 0
    %1413 = vmatmul.mubr.bf16.gmra.mxu0 %v1367
    %v1414 = vpop.f32.mrf.mxu0
    %v1415 = vadd.f32 %v171, %v1414
    %v1416 = vpop.f32.mrf.mxu0
    %v1417 = vpop.f32.mrf.mxu0
    %v1418 = vadd.f32 %v172, %v1417
    %v1419 = vpop.f32.mrf.mxu0
    %1420 = vdwg.mxu0
    %v1421 = vsel %vm1188, %v1407, -inf
    %1422 = vmax.xlane.f32.xlu0 %v1421
    %v1423 = vpop.xlane.xlu0 %1422
    %v1424 = vsel %vm1188, %v1410, -inf
    %1425 = vmax.xlane.f32.xlu0 %v1424
    %v1426 = vpop.xlane.xlu0 %1425
    %v1427 = vsel %vm1188, %v1415, -inf
    %1428 = vmax.xlane.f32.xlu0 %v1427
    %v1429 = vpop.xlane.xlu0 %1428
    %v1430 = vsel %vm1188, %v1418, -inf
    %1431 = vmax.xlane.f32.xlu0 %v1430
    %v1432 = vpop.xlane.xlu0 %1431
    %v1433 = vsub.f32 %v1407, %v1423
    %v1434 = vsub.f32 %v1410, %v1426
    %v1435 = vsub.f32 %v1415, %v1429
    %v1436 = vsub.f32 %v1418, %v1432
    %v1437 = vmul.f32 %v1433, 1.442695
    %v1438 = vpow.pop %v1437
    %v1439 = vmul.f32 %v1434, 1.442695
    %v1440 = vpow.pop %v1439
    %v1441 = vmul.f32 %v1435, 1.442695
    %v1442 = vpow.pop %v1441
    %v1443 = vmul.f32 %v1436, 1.442695
    %v1444 = vpow.pop %v1443
    %v1445 = vsel %vm1188, %v1438, 0.0
    %1446 = vadd.xlane.f32.xlu0 %v1445
    %v1447 = vpop.xlane.xlu0 %1446
    %v1448 = vsel %vm1188, %v1440, 0.0
    %1449 = vadd.xlane.f32.xlu0 %v1448
    %v1450 = vpop.xlane.xlu0 %1449
    %v1451 = vsel %vm1188, %v1442, 0.0
    %1452 = vadd.xlane.f32.xlu0 %v1451
    %v1453 = vpop.xlane.xlu0 %1452
    %v1454 = vsel %vm1188, %v1444, 0.0
    %1455 = vadd.xlane.f32.xlu0 %v1454
    %v1456 = vpop.xlane.xlu0 %1455
    %v1457 = vrcp.pop %v1447
    %v1458 = vrcp.pop %v1450
    %v1459 = vrcp.pop %v1453
    %v1460 = vrcp.pop %v1456
    %v1461 = vmul.f32 %v1438, %v1457
    %v1462 = vmul.f32 %v1440, %v1458
    %v1463 = vmul.f32 %v1442, %v1459
    %v1464 = vmul.f32 %v1444, %v1460
    %v1465 = vpack.c.bf16 %v1462, %v1461
    %v1466 = vpack.c.bf16 %v1464, %v1463
    %1468 = vrot.lane.b32.xlu0 %v1187, 112
    %v1469 = vpop.permute.xlu0 %1468
    %v1472 = vsel %vm1188, %v1465, 0
    %v1475 = vsel %vm1188, %v1466, 0
    %1477 = vmatprep.subr.bf16.mxu0 0
    %1478 = vmatpush1.bf16.msra.mxu0 0
    %1479 = vmatprep.subr.bf16.mxu0 0
    %1480 = vmatpush1.bf16.msra.mxu0 0
    %1481 = vmatprep.subr.bf16.mxu0 0
    %1482 = vmatpush1.bf16.msra.mxu0 0
    %1483 = vmatprep.subr.bf16.mxu0 0
    %1484 = vmatpush1.bf16.msra.mxu0 0
    %1485 = vmatprep.subr.bf16.mxu0 0
    %1486 = vmatpush1.bf16.msra.mxu0 0
    %1487 = vmatprep.subr.bf16.mxu0 0
    %1488 = vmatpush1.bf16.msra.mxu0 0
    %1489 = vmatprep.subr.bf16.mxu0 0
    %1490 = vmatpush1.bf16.msra.mxu0 0
    %1491 = vmatprep.subr.bf16.mxu0 0
    %1492 = vmatpush1.bf16.msra.mxu0 %v1469
    %1493 = vmatprep.subr.bf16.mxu0 0
    %1494 = vmatpush2.bf16.msra.mxu0 0
    %1495 = vmatprep.subr.bf16.mxu0 0
    %1496 = vmatpush2.bf16.msra.mxu0 0
    %1497 = vmatprep.subr.bf16.mxu0 0
    %1498 = vmatpush2.bf16.msra.mxu0 0
    %1499 = vmatprep.subr.bf16.mxu0 0
    %1500 = vmatpush2.bf16.msra.mxu0 0
    %1501 = vmatprep.subr.bf16.mxu0 0
    %1502 = vmatpush2.bf16.msra.mxu0 0
    %1503 = vmatprep.subr.bf16.mxu0 0
    %1504 = vmatpush2.bf16.msra.mxu0 0
    %1505 = vmatprep.subr.bf16.mxu0 0
    %1506 = vmatpush2.bf16.msra.mxu0 0
    %1507 = vmatprep.subr.bf16.mxu0 0
    %1508 = vmatpush2.bf16.msra.mxu0 0
    %1509 = vmatprep.mubr.bf16.mxu0 0
    %1510 = vmatmul.mubr.bf16.gmra.mxu0 %v1472
    %v1511 = vpop.f32.mrf.mxu0
    %v1512 = vadd.f32 0.0, %v1511
    %v1513 = vpop.f32.mrf.mxu0
    %v1514 = vpop.f32.mrf.mxu0
    %v1515 = vadd.f32 0.0, %v1514
    %v1516 = vpop.f32.mrf.mxu0
    %1517 = vmatprep.mubr.bf16.mxu0 0
    %1518 = vmatmul.mubr.bf16.gmra.mxu0 %v1475
    %v1519 = vpop.f32.mrf.mxu0
    %v1520 = vadd.f32 0.0, %v1519
    %v1521 = vpop.f32.mrf.mxu0
    %v1522 = vpop.f32.mrf.mxu0
    %v1523 = vadd.f32 0.0, %v1522
    %v1524 = vpop.f32.mrf.mxu0
    %1525 = vdwg.mxu0
    %v1526 = vpack.c.bf16 %v1515, %v1512
    %v1527 = vpack.c.bf16 %v1523, %v1520
    %s1528 = scalar_lea.vmem %s11, 16
    %v1529 = vld [vmem:[%s1528] sm:$0xf]
    %v1530 = vld [vmem:[%s1528 + $0x4] sm:$0xf]
    %v1531 = vld [vmem:[%s1528 + $0x8] sm:$0xf]
    %v1532 = vld [vmem:[%s1528 + $0xc] sm:$0xf]
    %v1537 = vunpack.c.l.b16 %v1529
    %v1538 = vunpack.c.l.b16 %v1530
    %v1539 = vunpack.c.l.b16 %v1531
    %v1540 = vunpack.c.l.b16 %v1532
    %v1541 = vpack.c.b16 %v1538, %v1537
    %v1542 = vpack.c.b16 %v1540, %v1539
    %v1544 = vsel %vm1188, %v1526, 0
    %v1547 = vsel %vm1188, %v1527, 0
    %v1550 = vsel %vm1188, %v1541, 0
    %v1553 = vsel %vm1188, %v1542, 0
    %1555 = vmatprep.subr.bf16.mxu0 0
    %1556 = vmatpush1.bf16.xpose.msra.mxu0 0
    %1557 = vmatprep.subr.bf16.mxu0 0
    %1558 = vmatpush1.bf16.xpose.msra.mxu0 0
    %1559 = vmatprep.subr.bf16.mxu0 0
    %1560 = vmatpush1.bf16.xpose.msra.mxu0 0
    %1561 = vmatprep.subr.bf16.mxu0 0
    %1562 = vmatpush1.bf16.xpose.msra.mxu0 0
    %1563 = vmatprep.subr.bf16.mxu0 0
    %1564 = vmatpush1.bf16.xpose.msra.mxu0 0
    %1565 = vmatprep.subr.bf16.mxu0 0
    %1566 = vmatpush1.bf16.xpose.msra.mxu0 0
    %1567 = vmatprep.subr.bf16.mxu0 0
    %1568 = vmatpush1.bf16.xpose.msra.mxu0 %v1553
    %1569 = vmatprep.subr.bf16.mxu0 0
    %1570 = vmatpush1.bf16.xpose.msra.mxu0 %v1550
    %1571 = vmatprep.subr.bf16.mxu0 0
    %1572 = vmatpush2.bf16.xpose.msra.mxu0 0
    %1573 = vmatprep.subr.bf16.mxu0 0
    %1574 = vmatpush2.bf16.xpose.msra.mxu0 0
    %1575 = vmatprep.subr.bf16.mxu0 0
    %1576 = vmatpush2.bf16.xpose.msra.mxu0 0
    %1577 = vmatprep.subr.bf16.mxu0 0
    %1578 = vmatpush2.bf16.xpose.msra.mxu0 0
    %1579 = vmatprep.subr.bf16.mxu0 0
    %1580 = vmatpush2.bf16.xpose.msra.mxu0 0
    %1581 = vmatprep.subr.bf16.mxu0 0
    %1582 = vmatpush2.bf16.xpose.msra.mxu0 0
    %1583 = vmatprep.subr.bf16.mxu0 0
    %1584 = vmatpush2.bf16.xpose.msra.mxu0 0
    %1585 = vmatprep.subr.bf16.mxu0 0
    %1586 = vmatpush2.bf16.xpose.msra.mxu0 0
    %1587 = vmatprep.mubr.bf16.mxu0 0
    %1588 = vmatmul.mubr.bf16.gmra.mxu0 %v1544
    %v1589 = vpop.f32.mrf.mxu0
    %v1590 = vadd.f32 0.0, %v1589
    %v1591 = vpop.f32.mrf.mxu0
    %v1592 = vpop.f32.mrf.mxu0
    %v1593 = vadd.f32 0.0, %v1592
    %v1594 = vpop.f32.mrf.mxu0
    %1595 = vmatprep.mubr.bf16.mxu0 0
    %1596 = vmatmul.mubr.bf16.gmra.mxu0 %v1547
    %v1597 = vpop.f32.mrf.mxu0
    %v1598 = vadd.f32 0.0, %v1597
    %v1599 = vpop.f32.mrf.mxu0
    %v1600 = vpop.f32.mrf.mxu0
    %v1601 = vadd.f32 0.0, %v1600
    %v1602 = vpop.f32.mrf.mxu0
    %1603 = vdwg.mxu0
    %v1608 = vunpack.c.l.b16 %v1350
    %v1609 = vunpack.c.l.b16 %v1351
    %v1610 = vunpack.c.l.b16 %v1352
    %v1611 = vunpack.c.l.b16 %v1353
    %v1612 = vpack.c.b16 %v1609, %v1608
    %v1613 = vpack.c.b16 %v1611, %v1610
    %v1615 = vsel %vm1188, %v1348, 0
    %v1618 = vsel %vm1188, %v1349, 0
    %v1621 = vsel %vm1188, %v1612, 0
    %v1624 = vsel %vm1188, %v1613, 0
    %1626 = vmatprep.subr.bf16.mxu0 0
    %1627 = vmatpush1.bf16.xpose.msra.mxu0 0
    %1628 = vmatprep.subr.bf16.mxu0 0
    %1629 = vmatpush1.bf16.xpose.msra.mxu0 0
    %1630 = vmatprep.subr.bf16.mxu0 0
    %1631 = vmatpush1.bf16.xpose.msra.mxu0 0
    %1632 = vmatprep.subr.bf16.mxu0 0
    %1633 = vmatpush1.bf16.xpose.msra.mxu0 0
    %1634 = vmatprep.subr.bf16.mxu0 0
    %1635 = vmatpush1.bf16.xpose.msra.mxu0 0
    %1636 = vmatprep.subr.bf16.mxu0 0
    %1637 = vmatpush1.bf16.xpose.msra.mxu0 0
    %1638 = vmatprep.subr.bf16.mxu0 0
    %1639 = vmatpush1.bf16.xpose.msra.mxu0 %v1624
    %1640 = vmatprep.subr.bf16.mxu0 0
    %1641 = vmatpush1.bf16.xpose.msra.mxu0 %v1621
    %1642 = vmatprep.subr.bf16.mxu0 0
    %1643 = vmatpush2.bf16.xpose.msra.mxu0 0
    %1644 = vmatprep.subr.bf16.mxu0 0
    %1645 = vmatpush2.bf16.xpose.msra.mxu0 0
    %1646 = vmatprep.subr.bf16.mxu0 0
    %1647 = vmatpush2.bf16.xpose.msra.mxu0 0
    %1648 = vmatprep.subr.bf16.mxu0 0
    %1649 = vmatpush2.bf16.xpose.msra.mxu0 0
    %1650 = vmatprep.subr.bf16.mxu0 0
    %1651 = vmatpush2.bf16.xpose.msra.mxu0 0
    %1652 = vmatprep.subr.bf16.mxu0 0
    %1653 = vmatpush2.bf16.xpose.msra.mxu0 0
    %1654 = vmatprep.subr.bf16.mxu0 0
    %1655 = vmatpush2.bf16.xpose.msra.mxu0 0
    %1656 = vmatprep.subr.bf16.mxu0 0
    %1657 = vmatpush2.bf16.xpose.msra.mxu0 0
    %1658 = vmatprep.mubr.bf16.mxu0 0
    %1659 = vmatmul.mubr.bf16.gmra.mxu0 %v1615
    %v1660 = vpop.f32.mrf.mxu0
    %v1661 = vadd.f32 %v1590, %v1660
    %v1662 = vpop.f32.mrf.mxu0
    %v1663 = vpop.f32.mrf.mxu0
    %v1664 = vadd.f32 %v1593, %v1663
    %v1665 = vpop.f32.mrf.mxu0
    %1666 = vmatprep.mubr.bf16.mxu0 0
    %1667 = vmatmul.mubr.bf16.gmra.mxu0 %v1618
    %v1668 = vpop.f32.mrf.mxu0
    %v1669 = vadd.f32 %v1598, %v1668
    %v1670 = vpop.f32.mrf.mxu0
    %v1671 = vpop.f32.mrf.mxu0
    %v1672 = vadd.f32 %v1601, %v1671
    %v1673 = vpop.f32.mrf.mxu0
    %1674 = vdwg.mxu0
    %v1675 = vld [vmem:[%s12] sm:$0x7]
    %v1676 = vlaneseq
    %v1677 = vshrl.u32 %v1676, 7
    %v1678 = vsub.s32 0, %v1677
    %v1679 = vrot.slane %v1675, %v1678
    %v1680 = vadd.f32 %v1661, %v1679
    %v1681 = vadd.f32 %v1664, %v1679
    %v1682 = vadd.f32 %v1669, %v1679
    %v1683 = vadd.f32 %v1672, %v1679
    %v1684 = vadd.f32 %v1680, %v965
    %v1685 = vadd.f32 %v1681, %v966
    %v1686 = vadd.f32 %v1682, %v967
    %v1687 = vadd.f32 %v1683, %v968
    %v1688 = vsel %vm308, %v1684, 0.0
    %1689 = vadd.xlane.f32.xlu0 %v1688
    %v1690 = vpop.xlane.xlu0 %1689
    %v1691 = vsel %vm308, %v1685, 0.0
    %1692 = vadd.xlane.f32.xlu0 %v1691
    %v1693 = vpop.xlane.xlu0 %1692
    %v1694 = vsel %vm308, %v1686, 0.0
    %1695 = vadd.xlane.f32.xlu0 %v1694
    %v1696 = vpop.xlane.xlu0 %1695
    %v1697 = vsel %vm308, %v1687, 0.0
    %1698 = vadd.xlane.f32.xlu0 %v1697
    %v1699 = vpop.xlane.xlu0 %1698
    %v1700 = vmul.f32 %v1690, %v536
    %v1701 = vmul.f32 %v1693, %v536
    %v1702 = vmul.f32 %v1696, %v536
    %v1703 = vmul.f32 %v1699, %v536
    %v1704 = vmul.f32 %v1684, %v1684
    %v1705 = vmul.f32 %v1685, %v1685
    %v1706 = vmul.f32 %v1686, %v1686
    %v1707 = vmul.f32 %v1687, %v1687
    %v1708 = vsel %vm308, %v1704, 0.0
    %1709 = vadd.xlane.f32.xlu0 %v1708
    %v1710 = vpop.xlane.xlu0 %1709
    %v1711 = vsel %vm308, %v1705, 0.0
    %1712 = vadd.xlane.f32.xlu0 %v1711
    %v1713 = vpop.xlane.xlu0 %1712
    %v1714 = vsel %vm308, %v1706, 0.0
    %1715 = vadd.xlane.f32.xlu0 %v1714
    %v1716 = vpop.xlane.xlu0 %1715
    %v1717 = vsel %vm308, %v1707, 0.0
    %1718 = vadd.xlane.f32.xlu0 %v1717
    %v1719 = vpop.xlane.xlu0 %1718
    %v1720 = vmul.f32 %v1710, %v536
    %v1721 = vmul.f32 %v1713, %v536
    %v1722 = vmul.f32 %v1716, %v536
    %v1723 = vmul.f32 %v1719, %v536
    %v1724 = vmul.f32 %v1700, %v1700
    %v1725 = vmul.f32 %v1701, %v1701
    %v1726 = vmul.f32 %v1702, %v1702
    %v1727 = vmul.f32 %v1703, %v1703
    %v1728 = vsub.f32 %v1720, %v1724
    %v1729 = vsub.f32 %v1721, %v1725
    %v1730 = vsub.f32 %v1722, %v1726
    %v1731 = vsub.f32 %v1723, %v1727
    %v1732 = vmax.f32 %v1728, 0.0
    %v1733 = vmax.f32 %v1729, 0.0
    %v1734 = vmax.f32 %v1730, 0.0
    %v1735 = vmax.f32 %v1731, 0.0
    %v1736 = vsub.f32 %v1684, %v1700
    %v1737 = vsub.f32 %v1685, %v1701
    %v1738 = vsub.f32 %v1686, %v1702
    %v1739 = vsub.f32 %v1687, %v1703
    %v1740 = vadd.f32 %v1732, 1e-05
    %v1741 = vadd.f32 %v1733, 1e-05
    %v1742 = vadd.f32 %v1734, 1e-05
    %v1743 = vadd.f32 %v1735, 1e-05
    %v1744 = vrsqrt.pop %v1740
    %v1745 = vrsqrt.pop %v1741
    %v1746 = vrsqrt.pop %v1742
    %v1747 = vrsqrt.pop %v1743
    %v1748 = vmul.f32 %v1736, %v1744
    %v1749 = vmul.f32 %v1737, %v1745
    %v1750 = vmul.f32 %v1738, %v1746
    %v1751 = vmul.f32 %v1739, %v1747
    %v1752 = vlaneseq
    %v1753 = vshrl.u32 %v1752, 7
    %v1754 = vsub.s32 1, %v1753
    %v1755 = vrot.slane %v1675, %v1754
    %v1756 = vmul.f32 %v1748, %v1755
    %v1757 = vmul.f32 %v1749, %v1755
    %v1758 = vmul.f32 %v1750, %v1755
    %v1759 = vmul.f32 %v1751, %v1755
    %v1760 = vlaneseq
    %v1761 = vshrl.u32 %v1760, 7
    %v1762 = vsub.s32 2, %v1761
    %v1763 = vrot.slane %v1675, %v1762
    %v1764 = vadd.f32 %v1756, %v1763
    %v1765 = vadd.f32 %v1757, %v1763
    %v1766 = vadd.f32 %v1758, %v1763
    %v1767 = vadd.f32 %v1759, %v1763
    %v1768 = vrot.slane %v1764, 7
    %v1769 = vrot.slane %v1765, 7
    %v1770 = vrot.slane %v1766, 7
    %v1771 = vrot.slane %v1767, 7
    %v1772 = vsel %vm259, %v1770, %v1771
    %v1773 = vsel %vm259, %v1769, %v1770
    %v1774 = vsel %vm259, %v1768, %v1769
    %v1775 = vsel %vm259, %v1771, %v1768
    %v1776 = vmul.f32 %v1775, %v102
    %v1777 = vmul.f32 %v1774, %v107
    %v1778 = vmul.f32 %v1773, %v112
    %v1779 = vmul.f32 %v1772, %v117
    %v1780 = vpack.c.bf16 %v1777, %v1776
    %v1781 = vpack.c.bf16 %v1779, %v1778
    %v1782 = vmul.f32 %v1764, %v127
    %v1783 = vmul.f32 %v1765, %v132
    %v1784 = vmul.f32 %v1766, %v137
    %v1785 = vmul.f32 %v1767, %v142
    %v1786 = vpack.c.bf16 %v1783, %v1782
    %v1787 = vpack.c.bf16 %v1785, %v1784
    %v1788 = vrot.slane %v1764, 1
    %v1789 = vrot.slane %v1765, 1
    %v1790 = vrot.slane %v1766, 1
    %v1791 = vrot.slane %v1767, 1
    %v1792 = vsel %vm280, %v1790, %v1791
    %v1793 = vsel %vm280, %v1789, %v1790
    %v1794 = vsel %vm280, %v1788, %v1789
    %v1795 = vsel %vm280, %v1791, %v1788
    %v1796 = vmul.f32 %v1794, %v152
    %v1797 = vmul.f32 %v1793, %v157
    %v1798 = vmul.f32 %v1792, %v162
    %v1799 = vmul.f32 %v1795, %v167
    %v1800 = vpack.c.bf16 %v1797, %v1796
    %v1801 = vpack.c.bf16 %v1799, %v1798
    %s1802 = scalar_lea.vmem %s8, 8
    %v1803 = vld [vmem:[%s1802] sm:$0x7]
    %s1804 = scalar_lea.vmem %s7, 96
    %v1805 = vld [vmem:[%s1804] sm:$0xf]
    %v1806 = vld [vmem:[%s1804 + $0x4] sm:$0xf]
    %v1807 = vld [vmem:[%s1804 + $0x8] sm:$0xf]
    %v1808 = vld [vmem:[%s1804 + $0xc] sm:$0xf]
    %v1813 = vunpack.c.l.b16 %v1805
    %v1814 = vunpack.c.l.b16 %v1806
    %v1815 = vunpack.c.l.b16 %v1807
    %v1816 = vunpack.c.l.b16 %v1808
    %v1817 = vpack.c.b16 %v1814, %v1813
    %v1818 = vpack.c.b16 %v1816, %v1815
    %v1822 = vsel %vm308, %v1780, 0
    %v1825 = vsel %vm308, %v1781, 0
    %1827 = vmatprep.subr.bf16.mxu0 0
    %1828 = vmatpush1.bf16.msra.mxu0 0
    %1829 = vmatprep.subr.bf16.mxu0 0
    %1830 = vmatpush1.bf16.msra.mxu0 0
    %1831 = vmatprep.subr.bf16.mxu0 0
    %1832 = vmatpush1.bf16.msra.mxu0 0
    %1833 = vmatprep.subr.bf16.mxu0 0
    %1834 = vmatpush1.bf16.msra.mxu0 0
    %1835 = vmatprep.subr.bf16.mxu0 0
    %1836 = vmatpush1.bf16.msra.mxu0 0
    %1837 = vmatprep.subr.bf16.mxu0 0
    %1838 = vmatpush1.bf16.msra.mxu0 0
    %1839 = vmatprep.subr.bf16.mxu0 0
    %1840 = vmatpush1.bf16.msra.mxu0 %v1818
    %1841 = vmatprep.subr.bf16.mxu0 0
    %1842 = vmatpush1.bf16.msra.mxu0 %v1817
    %1843 = vmatprep.subr.bf16.mxu0 0
    %1844 = vmatpush2.bf16.msra.mxu0 0
    %1845 = vmatprep.subr.bf16.mxu0 0
    %1846 = vmatpush2.bf16.msra.mxu0 0
    %1847 = vmatprep.subr.bf16.mxu0 0
    %1848 = vmatpush2.bf16.msra.mxu0 0
    %1849 = vmatprep.subr.bf16.mxu0 0
    %1850 = vmatpush2.bf16.msra.mxu0 0
    %1851 = vmatprep.subr.bf16.mxu0 0
    %1852 = vmatpush2.bf16.msra.mxu0 0
    %1853 = vmatprep.subr.bf16.mxu0 0
    %1854 = vmatpush2.bf16.msra.mxu0 0
    %1855 = vmatprep.subr.bf16.mxu0 0
    %1856 = vmatpush2.bf16.msra.mxu0 0
    %1857 = vmatprep.subr.bf16.mxu0 0
    %1858 = vmatpush2.bf16.msra.mxu0 0
    %1859 = vmatprep.mubr.bf16.mxu0 0
    %1860 = vmatmul.mubr.bf16.gmra.mxu0 %v1822
    %v1861 = vpop.f32.mrf.mxu0
    %v1862 = vadd.f32 0.0, %v1861
    %v1863 = vpop.f32.mrf.mxu0
    %v1864 = vpop.f32.mrf.mxu0
    %v1865 = vadd.f32 0.0, %v1864
    %v1866 = vpop.f32.mrf.mxu0
    %1867 = vmatprep.mubr.bf16.mxu0 0
    %1868 = vmatmul.mubr.bf16.gmra.mxu0 %v1825
    %v1869 = vpop.f32.mrf.mxu0
    %v1870 = vadd.f32 0.0, %v1869
    %v1871 = vpop.f32.mrf.mxu0
    %v1872 = vpop.f32.mrf.mxu0
    %v1873 = vadd.f32 0.0, %v1872
    %v1874 = vpop.f32.mrf.mxu0
    %1875 = vdwg.mxu0
    %v1876 = vlaneseq
    %v1877 = vshrl.u32 %v1876, 7
    %v1878 = vsub.s32 0, %v1877
    %v1879 = vrot.slane %v1803, %v1878
    %v1880 = vadd.f32 %v1879, %v1862
    %v1881 = vadd.f32 %v1879, %v1865
    %v1882 = vadd.f32 %v1879, %v1870
    %v1883 = vadd.f32 %v1879, %v1873
    %s1884 = scalar_lea.vmem %s7, 112
    %v1885 = vld [vmem:[%s1884] sm:$0xf]
    %v1886 = vld [vmem:[%s1884 + $0x4] sm:$0xf]
    %v1887 = vld [vmem:[%s1884 + $0x8] sm:$0xf]
    %v1888 = vld [vmem:[%s1884 + $0xc] sm:$0xf]
    %v1893 = vunpack.c.l.b16 %v1885
    %v1894 = vunpack.c.l.b16 %v1886
    %v1895 = vunpack.c.l.b16 %v1887
    %v1896 = vunpack.c.l.b16 %v1888
    %v1897 = vpack.c.b16 %v1894, %v1893
    %v1898 = vpack.c.b16 %v1896, %v1895
    %v1902 = vsel %vm308, %v1786, 0
    %v1905 = vsel %vm308, %v1787, 0
    %1907 = vmatprep.subr.bf16.mxu0 0
    %1908 = vmatpush1.bf16.msra.mxu0 0
    %1909 = vmatprep.subr.bf16.mxu0 0
    %1910 = vmatpush1.bf16.msra.mxu0 0
    %1911 = vmatprep.subr.bf16.mxu0 0
    %1912 = vmatpush1.bf16.msra.mxu0 0
    %1913 = vmatprep.subr.bf16.mxu0 0
    %1914 = vmatpush1.bf16.msra.mxu0 0
    %1915 = vmatprep.subr.bf16.mxu0 0
    %1916 = vmatpush1.bf16.msra.mxu0 0
    %1917 = vmatprep.subr.bf16.mxu0 0
    %1918 = vmatpush1.bf16.msra.mxu0 0
    %1919 = vmatprep.subr.bf16.mxu0 0
    %1920 = vmatpush1.bf16.msra.mxu0 %v1898
    %1921 = vmatprep.subr.bf16.mxu0 0
    %1922 = vmatpush1.bf16.msra.mxu0 %v1897
    %1923 = vmatprep.subr.bf16.mxu0 0
    %1924 = vmatpush2.bf16.msra.mxu0 0
    %1925 = vmatprep.subr.bf16.mxu0 0
    %1926 = vmatpush2.bf16.msra.mxu0 0
    %1927 = vmatprep.subr.bf16.mxu0 0
    %1928 = vmatpush2.bf16.msra.mxu0 0
    %1929 = vmatprep.subr.bf16.mxu0 0
    %1930 = vmatpush2.bf16.msra.mxu0 0
    %1931 = vmatprep.subr.bf16.mxu0 0
    %1932 = vmatpush2.bf16.msra.mxu0 0
    %1933 = vmatprep.subr.bf16.mxu0 0
    %1934 = vmatpush2.bf16.msra.mxu0 0
    %1935 = vmatprep.subr.bf16.mxu0 0
    %1936 = vmatpush2.bf16.msra.mxu0 0
    %1937 = vmatprep.subr.bf16.mxu0 0
    %1938 = vmatpush2.bf16.msra.mxu0 0
    %1939 = vmatprep.mubr.bf16.mxu0 0
    %1940 = vmatmul.mubr.bf16.gmra.mxu0 %v1902
    %v1941 = vpop.f32.mrf.mxu0
    %v1942 = vadd.f32 0.0, %v1941
    %v1943 = vpop.f32.mrf.mxu0
    %v1944 = vpop.f32.mrf.mxu0
    %v1945 = vadd.f32 0.0, %v1944
    %v1946 = vpop.f32.mrf.mxu0
    %1947 = vmatprep.mubr.bf16.mxu0 0
    %1948 = vmatmul.mubr.bf16.gmra.mxu0 %v1905
    %v1949 = vpop.f32.mrf.mxu0
    %v1950 = vadd.f32 0.0, %v1949
    %v1951 = vpop.f32.mrf.mxu0
    %v1952 = vpop.f32.mrf.mxu0
    %v1953 = vadd.f32 0.0, %v1952
    %v1954 = vpop.f32.mrf.mxu0
    %1955 = vdwg.mxu0
    %v1956 = vadd.f32 %v1880, %v1942
    %v1957 = vadd.f32 %v1881, %v1945
    %v1958 = vadd.f32 %v1882, %v1950
    %v1959 = vadd.f32 %v1883, %v1953
    %s1960 = scalar_lea.vmem %s7, 128
    %v1961 = vld [vmem:[%s1960] sm:$0xf]
    %v1962 = vld [vmem:[%s1960 + $0x4] sm:$0xf]
    %v1963 = vld [vmem:[%s1960 + $0x8] sm:$0xf]
    %v1964 = vld [vmem:[%s1960 + $0xc] sm:$0xf]
    %v1969 = vunpack.c.l.b16 %v1961
    %v1970 = vunpack.c.l.b16 %v1962
    %v1971 = vunpack.c.l.b16 %v1963
    %v1972 = vunpack.c.l.b16 %v1964
    %v1973 = vpack.c.b16 %v1970, %v1969
    %v1974 = vpack.c.b16 %v1972, %v1971
    %v1978 = vsel %vm308, %v1800, 0
    %v1981 = vsel %vm308, %v1801, 0
    %1983 = vmatprep.subr.bf16.mxu0 0
    %1984 = vmatpush1.bf16.msra.mxu0 0
    %1985 = vmatprep.subr.bf16.mxu0 0
    %1986 = vmatpush1.bf16.msra.mxu0 0
    %1987 = vmatprep.subr.bf16.mxu0 0
    %1988 = vmatpush1.bf16.msra.mxu0 0
    %1989 = vmatprep.subr.bf16.mxu0 0
    %1990 = vmatpush1.bf16.msra.mxu0 0
    %1991 = vmatprep.subr.bf16.mxu0 0
    %1992 = vmatpush1.bf16.msra.mxu0 0
    %1993 = vmatprep.subr.bf16.mxu0 0
    %1994 = vmatpush1.bf16.msra.mxu0 0
    %1995 = vmatprep.subr.bf16.mxu0 0
    %1996 = vmatpush1.bf16.msra.mxu0 %v1974
    %1997 = vmatprep.subr.bf16.mxu0 0
    %1998 = vmatpush1.bf16.msra.mxu0 %v1973
    %1999 = vmatprep.subr.bf16.mxu0 0
    %2000 = vmatpush2.bf16.msra.mxu0 0
    %2001 = vmatprep.subr.bf16.mxu0 0
    %2002 = vmatpush2.bf16.msra.mxu0 0
    %2003 = vmatprep.subr.bf16.mxu0 0
    %2004 = vmatpush2.bf16.msra.mxu0 0
    %2005 = vmatprep.subr.bf16.mxu0 0
    %2006 = vmatpush2.bf16.msra.mxu0 0
    %2007 = vmatprep.subr.bf16.mxu0 0
    %2008 = vmatpush2.bf16.msra.mxu0 0
    %2009 = vmatprep.subr.bf16.mxu0 0
    %2010 = vmatpush2.bf16.msra.mxu0 0
    %2011 = vmatprep.subr.bf16.mxu0 0
    %2012 = vmatpush2.bf16.msra.mxu0 0
    %2013 = vmatprep.subr.bf16.mxu0 0
    %2014 = vmatpush2.bf16.msra.mxu0 0
    %2015 = vmatprep.mubr.bf16.mxu0 0
    %2016 = vmatmul.mubr.bf16.gmra.mxu0 %v1978
    %v2017 = vpop.f32.mrf.mxu0
    %v2018 = vadd.f32 0.0, %v2017
    %v2019 = vpop.f32.mrf.mxu0
    %v2020 = vpop.f32.mrf.mxu0
    %v2021 = vadd.f32 0.0, %v2020
    %v2022 = vpop.f32.mrf.mxu0
    %2023 = vmatprep.mubr.bf16.mxu0 0
    %2024 = vmatmul.mubr.bf16.gmra.mxu0 %v1981
    %v2025 = vpop.f32.mrf.mxu0
    %v2026 = vadd.f32 0.0, %v2025
    %v2027 = vpop.f32.mrf.mxu0
    %v2028 = vpop.f32.mrf.mxu0
    %v2029 = vadd.f32 0.0, %v2028
    %v2030 = vpop.f32.mrf.mxu0
    %2031 = vdwg.mxu0
    %v2032 = vadd.f32 %v1956, %v2018
    %v2033 = vadd.f32 %v1957, %v2021
    %v2034 = vadd.f32 %v1958, %v2026
    %v2035 = vadd.f32 %v1959, %v2029
    %v2036 = vsel %vm308, %v2032, 0.0
    %2037 = vadd.xlane.f32.xlu0 %v2036
    %v2038 = vpop.xlane.xlu0 %2037
    %v2039 = vsel %vm308, %v2033, 0.0
    %2040 = vadd.xlane.f32.xlu0 %v2039
    %v2041 = vpop.xlane.xlu0 %2040
    %v2042 = vsel %vm308, %v2034, 0.0
    %2043 = vadd.xlane.f32.xlu0 %v2042
    %v2044 = vpop.xlane.xlu0 %2043
    %v2045 = vsel %vm308, %v2035, 0.0
    %2046 = vadd.xlane.f32.xlu0 %v2045
    %v2047 = vpop.xlane.xlu0 %2046
    %v2048 = vmul.f32 %v2038, %v536
    %v2049 = vmul.f32 %v2041, %v536
    %v2050 = vmul.f32 %v2044, %v536
    %v2051 = vmul.f32 %v2047, %v536
    %v2052 = vmul.f32 %v2032, %v2032
    %v2053 = vmul.f32 %v2033, %v2033
    %v2054 = vmul.f32 %v2034, %v2034
    %v2055 = vmul.f32 %v2035, %v2035
    %v2056 = vsel %vm308, %v2052, 0.0
    %2057 = vadd.xlane.f32.xlu0 %v2056
    %v2058 = vpop.xlane.xlu0 %2057
    %v2059 = vsel %vm308, %v2053, 0.0
    %2060 = vadd.xlane.f32.xlu0 %v2059
    %v2061 = vpop.xlane.xlu0 %2060
    %v2062 = vsel %vm308, %v2054, 0.0
    %2063 = vadd.xlane.f32.xlu0 %v2062
    %v2064 = vpop.xlane.xlu0 %2063
    %v2065 = vsel %vm308, %v2055, 0.0
    %2066 = vadd.xlane.f32.xlu0 %v2065
    %v2067 = vpop.xlane.xlu0 %2066
    %v2068 = vmul.f32 %v2058, %v536
    %v2069 = vmul.f32 %v2061, %v536
    %v2070 = vmul.f32 %v2064, %v536
    %v2071 = vmul.f32 %v2067, %v536
    %v2072 = vmul.f32 %v2048, %v2048
    %v2073 = vmul.f32 %v2049, %v2049
    %v2074 = vmul.f32 %v2050, %v2050
    %v2075 = vmul.f32 %v2051, %v2051
    %v2076 = vsub.f32 %v2068, %v2072
    %v2077 = vsub.f32 %v2069, %v2073
    %v2078 = vsub.f32 %v2070, %v2074
    %v2079 = vsub.f32 %v2071, %v2075
    %v2080 = vmax.f32 %v2076, 0.0
    %v2081 = vmax.f32 %v2077, 0.0
    %v2082 = vmax.f32 %v2078, 0.0
    %v2083 = vmax.f32 %v2079, 0.0
    %v2084 = vsub.f32 %v2032, %v2048
    %v2085 = vsub.f32 %v2033, %v2049
    %v2086 = vsub.f32 %v2034, %v2050
    %v2087 = vsub.f32 %v2035, %v2051
    %v2088 = vadd.f32 %v2080, 1e-05
    %v2089 = vadd.f32 %v2081, 1e-05
    %v2090 = vadd.f32 %v2082, 1e-05
    %v2091 = vadd.f32 %v2083, 1e-05
    %v2092 = vrsqrt.pop %v2088
    %v2093 = vrsqrt.pop %v2089
    %v2094 = vrsqrt.pop %v2090
    %v2095 = vrsqrt.pop %v2091
    %v2096 = vmul.f32 %v2084, %v2092
    %v2097 = vmul.f32 %v2085, %v2093
    %v2098 = vmul.f32 %v2086, %v2094
    %v2099 = vmul.f32 %v2087, %v2095
    %v2100 = vlaneseq
    %v2101 = vshrl.u32 %v2100, 7
    %v2102 = vsub.s32 1, %v2101
    %v2103 = vrot.slane %v1803, %v2102
    %v2104 = vmul.f32 %v2096, %v2103
    %v2105 = vmul.f32 %v2097, %v2103
    %v2106 = vmul.f32 %v2098, %v2103
    %v2107 = vmul.f32 %v2099, %v2103
    %v2108 = vlaneseq
    %v2109 = vshrl.u32 %v2108, 7
    %v2110 = vsub.s32 2, %v2109
    %v2111 = vrot.slane %v1803, %v2110
    %v2112 = vadd.f32 %v2104, %v2111
    %v2113 = vadd.f32 %v2105, %v2111
    %v2114 = vadd.f32 %v2106, %v2111
    %v2115 = vadd.f32 %v2107, %v2111
    %v2116 = vmax.f32 %v2112, 0.0
    %v2117 = vmax.f32 %v2113, 0.0
    %v2118 = vmax.f32 %v2114, 0.0
    %v2119 = vmax.f32 %v2115, 0.0
    %v2120 = vadd.f32 %v2116, %v1764
    %v2121 = vadd.f32 %v2117, %v1765
    %v2122 = vadd.f32 %v2118, %v1766
    %v2123 = vadd.f32 %v2119, %v1767
    %v2124 = vrot.slane %v2120, 7
    %v2125 = vrot.slane %v2121, 7
    %v2126 = vrot.slane %v2122, 7
    %v2127 = vrot.slane %v2123, 7
    %v2128 = vsel %vm259, %v2126, %v2127
    %v2129 = vsel %vm259, %v2125, %v2126
    %v2130 = vsel %vm259, %v2124, %v2125
    %v2131 = vsel %vm259, %v2127, %v2124
    %v2132 = vmul.f32 %v2131, %v102
    %v2133 = vmul.f32 %v2130, %v107
    %v2134 = vmul.f32 %v2129, %v112
    %v2135 = vmul.f32 %v2128, %v117
    %v2136 = vpack.c.bf16 %v2133, %v2132
    %v2137 = vpack.c.bf16 %v2135, %v2134
    %v2138 = vmul.f32 %v2120, %v127
    %v2139 = vmul.f32 %v2121, %v132
    %v2140 = vmul.f32 %v2122, %v137
    %v2141 = vmul.f32 %v2123, %v142
    %v2142 = vpack.c.bf16 %v2139, %v2138
    %v2143 = vpack.c.bf16 %v2141, %v2140
    %v2144 = vrot.slane %v2120, 1
    %v2145 = vrot.slane %v2121, 1
    %v2146 = vrot.slane %v2122, 1
    %v2147 = vrot.slane %v2123, 1
    %v2148 = vsel %vm280, %v2146, %v2147
    %v2149 = vsel %vm280, %v2145, %v2146
    %v2150 = vsel %vm280, %v2144, %v2145
    %v2151 = vsel %vm280, %v2147, %v2144
    %v2152 = vmul.f32 %v2150, %v152
    %v2153 = vmul.f32 %v2149, %v157
    %v2154 = vmul.f32 %v2148, %v162
    %v2155 = vmul.f32 %v2151, %v167
    %v2156 = vpack.c.bf16 %v2153, %v2152
    %v2157 = vpack.c.bf16 %v2155, %v2154
    %s2158 = scalar_lea.vmem %s8, 12
    %v2159 = vld [vmem:[%s2158] sm:$0x7]
    %s2160 = scalar_lea.vmem %s7, 144
    %v2161 = vld [vmem:[%s2160] sm:$0xf]
    %v2162 = vld [vmem:[%s2160 + $0x4] sm:$0xf]
    %v2163 = vld [vmem:[%s2160 + $0x8] sm:$0xf]
    %v2164 = vld [vmem:[%s2160 + $0xc] sm:$0xf]
    %v2169 = vunpack.c.l.b16 %v2161
    %v2170 = vunpack.c.l.b16 %v2162
    %v2171 = vunpack.c.l.b16 %v2163
    %v2172 = vunpack.c.l.b16 %v2164
    %v2173 = vpack.c.b16 %v2170, %v2169
    %v2174 = vpack.c.b16 %v2172, %v2171
    %v2178 = vsel %vm308, %v2136, 0
    %v2181 = vsel %vm308, %v2137, 0
    %2183 = vmatprep.subr.bf16.mxu0 0
    %2184 = vmatpush1.bf16.msra.mxu0 0
    %2185 = vmatprep.subr.bf16.mxu0 0
    %2186 = vmatpush1.bf16.msra.mxu0 0
    %2187 = vmatprep.subr.bf16.mxu0 0
    %2188 = vmatpush1.bf16.msra.mxu0 0
    %2189 = vmatprep.subr.bf16.mxu0 0
    %2190 = vmatpush1.bf16.msra.mxu0 0
    %2191 = vmatprep.subr.bf16.mxu0 0
    %2192 = vmatpush1.bf16.msra.mxu0 0
    %2193 = vmatprep.subr.bf16.mxu0 0
    %2194 = vmatpush1.bf16.msra.mxu0 0
    %2195 = vmatprep.subr.bf16.mxu0 0
    %2196 = vmatpush1.bf16.msra.mxu0 %v2174
    %2197 = vmatprep.subr.bf16.mxu0 0
    %2198 = vmatpush1.bf16.msra.mxu0 %v2173
    %2199 = vmatprep.subr.bf16.mxu0 0
    %2200 = vmatpush2.bf16.msra.mxu0 0
    %2201 = vmatprep.subr.bf16.mxu0 0
    %2202 = vmatpush2.bf16.msra.mxu0 0
    %2203 = vmatprep.subr.bf16.mxu0 0
    %2204 = vmatpush2.bf16.msra.mxu0 0
    %2205 = vmatprep.subr.bf16.mxu0 0
    %2206 = vmatpush2.bf16.msra.mxu0 0
    %2207 = vmatprep.subr.bf16.mxu0 0
    %2208 = vmatpush2.bf16.msra.mxu0 0
    %2209 = vmatprep.subr.bf16.mxu0 0
    %2210 = vmatpush2.bf16.msra.mxu0 0
    %2211 = vmatprep.subr.bf16.mxu0 0
    %2212 = vmatpush2.bf16.msra.mxu0 0
    %2213 = vmatprep.subr.bf16.mxu0 0
    %2214 = vmatpush2.bf16.msra.mxu0 0
    %2215 = vmatprep.mubr.bf16.mxu0 0
    %2216 = vmatmul.mubr.bf16.gmra.mxu0 %v2178
    %v2217 = vpop.f32.mrf.mxu0
    %v2218 = vadd.f32 0.0, %v2217
    %v2219 = vpop.f32.mrf.mxu0
    %v2220 = vpop.f32.mrf.mxu0
    %v2221 = vadd.f32 0.0, %v2220
    %v2222 = vpop.f32.mrf.mxu0
    %2223 = vmatprep.mubr.bf16.mxu0 0
    %2224 = vmatmul.mubr.bf16.gmra.mxu0 %v2181
    %v2225 = vpop.f32.mrf.mxu0
    %v2226 = vadd.f32 0.0, %v2225
    %v2227 = vpop.f32.mrf.mxu0
    %v2228 = vpop.f32.mrf.mxu0
    %v2229 = vadd.f32 0.0, %v2228
    %v2230 = vpop.f32.mrf.mxu0
    %2231 = vdwg.mxu0
    %v2232 = vlaneseq
    %v2233 = vshrl.u32 %v2232, 7
    %v2234 = vsub.s32 0, %v2233
    %v2235 = vrot.slane %v2159, %v2234
    %v2236 = vadd.f32 %v2235, %v2218
    %v2237 = vadd.f32 %v2235, %v2221
    %v2238 = vadd.f32 %v2235, %v2226
    %v2239 = vadd.f32 %v2235, %v2229
    %s2240 = scalar_lea.vmem %s7, 160
    %v2241 = vld [vmem:[%s2240] sm:$0xf]
    %v2242 = vld [vmem:[%s2240 + $0x4] sm:$0xf]
    %v2243 = vld [vmem:[%s2240 + $0x8] sm:$0xf]
    %v2244 = vld [vmem:[%s2240 + $0xc] sm:$0xf]
    %v2249 = vunpack.c.l.b16 %v2241
    %v2250 = vunpack.c.l.b16 %v2242
    %v2251 = vunpack.c.l.b16 %v2243
    %v2252 = vunpack.c.l.b16 %v2244
    %v2253 = vpack.c.b16 %v2250, %v2249
    %v2254 = vpack.c.b16 %v2252, %v2251
    %v2258 = vsel %vm308, %v2142, 0
    %v2261 = vsel %vm308, %v2143, 0
    %2263 = vmatprep.subr.bf16.mxu0 0
    %2264 = vmatpush1.bf16.msra.mxu0 0
    %2265 = vmatprep.subr.bf16.mxu0 0
    %2266 = vmatpush1.bf16.msra.mxu0 0
    %2267 = vmatprep.subr.bf16.mxu0 0
    %2268 = vmatpush1.bf16.msra.mxu0 0
    %2269 = vmatprep.subr.bf16.mxu0 0
    %2270 = vmatpush1.bf16.msra.mxu0 0
    %2271 = vmatprep.subr.bf16.mxu0 0
    %2272 = vmatpush1.bf16.msra.mxu0 0
    %2273 = vmatprep.subr.bf16.mxu0 0
    %2274 = vmatpush1.bf16.msra.mxu0 0
    %2275 = vmatprep.subr.bf16.mxu0 0
    %2276 = vmatpush1.bf16.msra.mxu0 %v2254
    %2277 = vmatprep.subr.bf16.mxu0 0
    %2278 = vmatpush1.bf16.msra.mxu0 %v2253
    %2279 = vmatprep.subr.bf16.mxu0 0
    %2280 = vmatpush2.bf16.msra.mxu0 0
    %2281 = vmatprep.subr.bf16.mxu0 0
    %2282 = vmatpush2.bf16.msra.mxu0 0
    %2283 = vmatprep.subr.bf16.mxu0 0
    %2284 = vmatpush2.bf16.msra.mxu0 0
    %2285 = vmatprep.subr.bf16.mxu0 0
    %2286 = vmatpush2.bf16.msra.mxu0 0
    %2287 = vmatprep.subr.bf16.mxu0 0
    %2288 = vmatpush2.bf16.msra.mxu0 0
    %2289 = vmatprep.subr.bf16.mxu0 0
    %2290 = vmatpush2.bf16.msra.mxu0 0
    %2291 = vmatprep.subr.bf16.mxu0 0
    %2292 = vmatpush2.bf16.msra.mxu0 0
    %2293 = vmatprep.subr.bf16.mxu0 0
    %2294 = vmatpush2.bf16.msra.mxu0 0
    %2295 = vmatprep.mubr.bf16.mxu0 0
    %2296 = vmatmul.mubr.bf16.gmra.mxu0 %v2258
    %v2297 = vpop.f32.mrf.mxu0
    %v2298 = vadd.f32 0.0, %v2297
    %v2299 = vpop.f32.mrf.mxu0
    %v2300 = vpop.f32.mrf.mxu0
    %v2301 = vadd.f32 0.0, %v2300
    %v2302 = vpop.f32.mrf.mxu0
    %2303 = vmatprep.mubr.bf16.mxu0 0
    %2304 = vmatmul.mubr.bf16.gmra.mxu0 %v2261
    %v2305 = vpop.f32.mrf.mxu0
    %v2306 = vadd.f32 0.0, %v2305
    %v2307 = vpop.f32.mrf.mxu0
    %v2308 = vpop.f32.mrf.mxu0
    %v2309 = vadd.f32 0.0, %v2308
    %v2310 = vpop.f32.mrf.mxu0
    %2311 = vdwg.mxu0
    %v2312 = vadd.f32 %v2236, %v2298
    %v2313 = vadd.f32 %v2237, %v2301
    %v2314 = vadd.f32 %v2238, %v2306
    %v2315 = vadd.f32 %v2239, %v2309
    %s2316 = scalar_lea.vmem %s7, 176
    %v2317 = vld [vmem:[%s2316] sm:$0xf]
    %v2318 = vld [vmem:[%s2316 + $0x4] sm:$0xf]
    %v2319 = vld [vmem:[%s2316 + $0x8] sm:$0xf]
    %v2320 = vld [vmem:[%s2316 + $0xc] sm:$0xf]
    %v2325 = vunpack.c.l.b16 %v2317
    %v2326 = vunpack.c.l.b16 %v2318
    %v2327 = vunpack.c.l.b16 %v2319
    %v2328 = vunpack.c.l.b16 %v2320
    %v2329 = vpack.c.b16 %v2326, %v2325
    %v2330 = vpack.c.b16 %v2328, %v2327
    %v2334 = vsel %vm308, %v2156, 0
    %v2337 = vsel %vm308, %v2157, 0
    %2339 = vmatprep.subr.bf16.mxu0 0
    %2340 = vmatpush1.bf16.msra.mxu0 0
    %2341 = vmatprep.subr.bf16.mxu0 0
    %2342 = vmatpush1.bf16.msra.mxu0 0
    %2343 = vmatprep.subr.bf16.mxu0 0
    %2344 = vmatpush1.bf16.msra.mxu0 0
    %2345 = vmatprep.subr.bf16.mxu0 0
    %2346 = vmatpush1.bf16.msra.mxu0 0
    %2347 = vmatprep.subr.bf16.mxu0 0
    %2348 = vmatpush1.bf16.msra.mxu0 0
    %2349 = vmatprep.subr.bf16.mxu0 0
    %2350 = vmatpush1.bf16.msra.mxu0 0
    %2351 = vmatprep.subr.bf16.mxu0 0
    %2352 = vmatpush1.bf16.msra.mxu0 %v2330
    %2353 = vmatprep.subr.bf16.mxu0 0
    %2354 = vmatpush1.bf16.msra.mxu0 %v2329
    %2355 = vmatprep.subr.bf16.mxu0 0
    %2356 = vmatpush2.bf16.msra.mxu0 0
    %2357 = vmatprep.subr.bf16.mxu0 0
    %2358 = vmatpush2.bf16.msra.mxu0 0
    %2359 = vmatprep.subr.bf16.mxu0 0
    %2360 = vmatpush2.bf16.msra.mxu0 0
    %2361 = vmatprep.subr.bf16.mxu0 0
    %2362 = vmatpush2.bf16.msra.mxu0 0
    %2363 = vmatprep.subr.bf16.mxu0 0
    %2364 = vmatpush2.bf16.msra.mxu0 0
    %2365 = vmatprep.subr.bf16.mxu0 0
    %2366 = vmatpush2.bf16.msra.mxu0 0
    %2367 = vmatprep.subr.bf16.mxu0 0
    %2368 = vmatpush2.bf16.msra.mxu0 0
    %2369 = vmatprep.subr.bf16.mxu0 0
    %2370 = vmatpush2.bf16.msra.mxu0 0
    %2371 = vmatprep.mubr.bf16.mxu0 0
    %2372 = vmatmul.mubr.bf16.gmra.mxu0 %v2334
    %v2373 = vpop.f32.mrf.mxu0
    %v2374 = vadd.f32 0.0, %v2373
    %v2375 = vpop.f32.mrf.mxu0
    %v2376 = vpop.f32.mrf.mxu0
    %v2377 = vadd.f32 0.0, %v2376
    %v2378 = vpop.f32.mrf.mxu0
    %2379 = vmatprep.mubr.bf16.mxu0 0
    %2380 = vmatmul.mubr.bf16.gmra.mxu0 %v2337
    %v2381 = vpop.f32.mrf.mxu0
    %v2382 = vadd.f32 0.0, %v2381
    %v2383 = vpop.f32.mrf.mxu0
    %v2384 = vpop.f32.mrf.mxu0
    %v2385 = vadd.f32 0.0, %v2384
    %v2386 = vpop.f32.mrf.mxu0
    %2387 = vdwg.mxu0
    %v2388 = vadd.f32 %v2312, %v2374
    %v2389 = vadd.f32 %v2313, %v2377
    %v2390 = vadd.f32 %v2314, %v2382
    %v2391 = vadd.f32 %v2315, %v2385
    %v2392 = vsel %vm308, %v2388, 0.0
    %2393 = vadd.xlane.f32.xlu0 %v2392
    %v2394 = vpop.xlane.xlu0 %2393
    %v2395 = vsel %vm308, %v2389, 0.0
    %2396 = vadd.xlane.f32.xlu0 %v2395
    %v2397 = vpop.xlane.xlu0 %2396
    %v2398 = vsel %vm308, %v2390, 0.0
    %2399 = vadd.xlane.f32.xlu0 %v2398
    %v2400 = vpop.xlane.xlu0 %2399
    %v2401 = vsel %vm308, %v2391, 0.0
    %2402 = vadd.xlane.f32.xlu0 %v2401
    %v2403 = vpop.xlane.xlu0 %2402
    %v2404 = vmul.f32 %v2394, %v536
    %v2405 = vmul.f32 %v2397, %v536
    %v2406 = vmul.f32 %v2400, %v536
    %v2407 = vmul.f32 %v2403, %v536
    %v2408 = vmul.f32 %v2388, %v2388
    %v2409 = vmul.f32 %v2389, %v2389
    %v2410 = vmul.f32 %v2390, %v2390
    %v2411 = vmul.f32 %v2391, %v2391
    %v2412 = vsel %vm308, %v2408, 0.0
    %2413 = vadd.xlane.f32.xlu0 %v2412
    %v2414 = vpop.xlane.xlu0 %2413
    %v2415 = vsel %vm308, %v2409, 0.0
    %2416 = vadd.xlane.f32.xlu0 %v2415
    %v2417 = vpop.xlane.xlu0 %2416
    %v2418 = vsel %vm308, %v2410, 0.0
    %2419 = vadd.xlane.f32.xlu0 %v2418
    %v2420 = vpop.xlane.xlu0 %2419
    %v2421 = vsel %vm308, %v2411, 0.0
    %2422 = vadd.xlane.f32.xlu0 %v2421
    %v2423 = vpop.xlane.xlu0 %2422
    %v2424 = vmul.f32 %v2414, %v536
    %v2425 = vmul.f32 %v2417, %v536
    %v2426 = vmul.f32 %v2420, %v536
    %v2427 = vmul.f32 %v2423, %v536
    %v2428 = vmul.f32 %v2404, %v2404
    %v2429 = vmul.f32 %v2405, %v2405
    %v2430 = vmul.f32 %v2406, %v2406
    %v2431 = vmul.f32 %v2407, %v2407
    %v2432 = vsub.f32 %v2424, %v2428
    %v2433 = vsub.f32 %v2425, %v2429
    %v2434 = vsub.f32 %v2426, %v2430
    %v2435 = vsub.f32 %v2427, %v2431
    %v2436 = vmax.f32 %v2432, 0.0
    %v2437 = vmax.f32 %v2433, 0.0
    %v2438 = vmax.f32 %v2434, 0.0
    %v2439 = vmax.f32 %v2435, 0.0
    %v2440 = vsub.f32 %v2388, %v2404
    %v2441 = vsub.f32 %v2389, %v2405
    %v2442 = vsub.f32 %v2390, %v2406
    %v2443 = vsub.f32 %v2391, %v2407
    %v2444 = vadd.f32 %v2436, 1e-05
    %v2445 = vadd.f32 %v2437, 1e-05
    %v2446 = vadd.f32 %v2438, 1e-05
    %v2447 = vadd.f32 %v2439, 1e-05
    %v2448 = vrsqrt.pop %v2444
    %v2449 = vrsqrt.pop %v2445
    %v2450 = vrsqrt.pop %v2446
    %v2451 = vrsqrt.pop %v2447
    %v2452 = vmul.f32 %v2440, %v2448
    %v2453 = vmul.f32 %v2441, %v2449
    %v2454 = vmul.f32 %v2442, %v2450
    %v2455 = vmul.f32 %v2443, %v2451
    %v2456 = vlaneseq
    %v2457 = vshrl.u32 %v2456, 7
    %v2458 = vsub.s32 1, %v2457
    %v2459 = vrot.slane %v2159, %v2458
    %v2460 = vmul.f32 %v2452, %v2459
    %v2461 = vmul.f32 %v2453, %v2459
    %v2462 = vmul.f32 %v2454, %v2459
    %v2463 = vmul.f32 %v2455, %v2459
    %v2464 = vlaneseq
    %v2465 = vshrl.u32 %v2464, 7
    %v2466 = vsub.s32 2, %v2465
    %v2467 = vrot.slane %v2159, %v2466
    %v2468 = vadd.f32 %v2460, %v2467
    %v2469 = vadd.f32 %v2461, %v2467
    %v2470 = vadd.f32 %v2462, %v2467
    %v2471 = vadd.f32 %v2463, %v2467
    %v2472 = vmax.f32 %v2468, 0.0
    %v2473 = vmax.f32 %v2469, 0.0
    %v2474 = vmax.f32 %v2470, 0.0
    %v2475 = vmax.f32 %v2471, 0.0
    %v2476 = vadd.f32 %v2472, %v2120
    %v2477 = vadd.f32 %v2473, %v2121
    %v2478 = vadd.f32 %v2474, %v2122
    %v2479 = vadd.f32 %v2475, %v2123
    %v2480 = vpack.c.bf16 %v2477, %v2476
    %v2481 = vpack.c.bf16 %v2479, %v2478
    %s2482 = scalar_lea.vmem %s9, 48
    %v2483 = vld [vmem:[%s2482] sm:$0xf]
    %v2484 = vld [vmem:[%s2482 + $0x4] sm:$0xf]
    %v2485 = vld [vmem:[%s2482 + $0x8] sm:$0xf]
    %v2486 = vld [vmem:[%s2482 + $0xc] sm:$0xf]
    %s2487 = scalar_lea.vmem %s10, 3
    %v2488 = vld [vmem:[%s2487] sm:$0x1]
    %v2490 = vlaneseq
    %v2491 = vshrl.u32 %v2490, 7
    %v2492 = vsub.s32 0, %v2491
    %v2493 = vrot.slane %v2488, %v2492
    %v2499 = vunpack.c.l.b16 %v2483
    %v2500 = vunpack.c.l.b16 %v2484
    %v2501 = vunpack.c.l.b16 %v2485
    %v2502 = vunpack.c.l.b16 %v2486
    %v2503 = vpack.c.b16 %v2500, %v2499
    %v2504 = vpack.c.b16 %v2502, %v2501
    %v2508 = vsel %vm308, %v2480, 0
    %v2511 = vsel %vm308, %v2481, 0
    %2513 = vmatprep.subr.bf16.mxu0 0
    %2514 = vmatpush1.bf16.msra.mxu0 0
    %2515 = vmatprep.subr.bf16.mxu0 0
    %2516 = vmatpush1.bf16.msra.mxu0 0
    %2517 = vmatprep.subr.bf16.mxu0 0
    %2518 = vmatpush1.bf16.msra.mxu0 0
    %2519 = vmatprep.subr.bf16.mxu0 0
    %2520 = vmatpush1.bf16.msra.mxu0 0
    %2521 = vmatprep.subr.bf16.mxu0 0
    %2522 = vmatpush1.bf16.msra.mxu0 0
    %2523 = vmatprep.subr.bf16.mxu0 0
    %2524 = vmatpush1.bf16.msra.mxu0 0
    %2525 = vmatprep.subr.bf16.mxu0 0
    %2526 = vmatpush1.bf16.msra.mxu0 %v2504
    %2527 = vmatprep.subr.bf16.mxu0 0
    %2528 = vmatpush1.bf16.msra.mxu0 %v2503
    %2529 = vmatprep.subr.bf16.mxu0 0
    %2530 = vmatpush2.bf16.msra.mxu0 0
    %2531 = vmatprep.subr.bf16.mxu0 0
    %2532 = vmatpush2.bf16.msra.mxu0 0
    %2533 = vmatprep.subr.bf16.mxu0 0
    %2534 = vmatpush2.bf16.msra.mxu0 0
    %2535 = vmatprep.subr.bf16.mxu0 0
    %2536 = vmatpush2.bf16.msra.mxu0 0
    %2537 = vmatprep.subr.bf16.mxu0 0
    %2538 = vmatpush2.bf16.msra.mxu0 0
    %2539 = vmatprep.subr.bf16.mxu0 0
    %2540 = vmatpush2.bf16.msra.mxu0 0
    %2541 = vmatprep.subr.bf16.mxu0 0
    %2542 = vmatpush2.bf16.msra.mxu0 0
    %2543 = vmatprep.subr.bf16.mxu0 0
    %2544 = vmatpush2.bf16.msra.mxu0 0
    %2545 = vmatprep.mubr.bf16.mxu0 0
    %2546 = vmatmul.mubr.bf16.gmra.mxu0 %v2508
    %v2547 = vpop.f32.mrf.mxu0
    %v2548 = vadd.f32 %v2493, %v2547
    %v2549 = vpop.f32.mrf.mxu0
    %v2550 = vpop.f32.mrf.mxu0
    %v2551 = vadd.f32 %v2493, %v2550
    %v2552 = vpop.f32.mrf.mxu0
    %2553 = vmatprep.mubr.bf16.mxu0 0
    %2554 = vmatmul.mubr.bf16.gmra.mxu0 %v2511
    %v2555 = vpop.f32.mrf.mxu0
    %v2556 = vadd.f32 %v2493, %v2555
    %v2557 = vpop.f32.mrf.mxu0
    %v2558 = vpop.f32.mrf.mxu0
    %v2559 = vadd.f32 %v2493, %v2558
    %v2560 = vpop.f32.mrf.mxu0
    %2561 = vdwg.mxu0
    %s2562 = scalar_lea.vmem %s9, 64
    %v2563 = vld [vmem:[%s2562] sm:$0xf]
    %v2564 = vld [vmem:[%s2562 + $0x4] sm:$0xf]
    %v2565 = vld [vmem:[%s2562 + $0x8] sm:$0xf]
    %v2566 = vld [vmem:[%s2562 + $0xc] sm:$0xf]
    %s2567 = scalar_lea.vmem %s10, 4
    %v2568 = vld [vmem:[%s2567] sm:$0x1]
    %v2570 = vlaneseq
    %v2571 = vshrl.u32 %v2570, 7
    %v2572 = vsub.s32 0, %v2571
    %v2573 = vrot.slane %v2568, %v2572
    %v2579 = vunpack.c.l.b16 %v2563
    %v2580 = vunpack.c.l.b16 %v2564
    %v2581 = vunpack.c.l.b16 %v2565
    %v2582 = vunpack.c.l.b16 %v2566
    %v2583 = vpack.c.b16 %v2580, %v2579
    %v2584 = vpack.c.b16 %v2582, %v2581
    %2587 = vmatprep.subr.bf16.mxu0 0
    %2588 = vmatpush1.bf16.msra.mxu0 0
    %2589 = vmatprep.subr.bf16.mxu0 0
    %2590 = vmatpush1.bf16.msra.mxu0 0
    %2591 = vmatprep.subr.bf16.mxu0 0
    %2592 = vmatpush1.bf16.msra.mxu0 0
    %2593 = vmatprep.subr.bf16.mxu0 0
    %2594 = vmatpush1.bf16.msra.mxu0 0
    %2595 = vmatprep.subr.bf16.mxu0 0
    %2596 = vmatpush1.bf16.msra.mxu0 0
    %2597 = vmatprep.subr.bf16.mxu0 0
    %2598 = vmatpush1.bf16.msra.mxu0 0
    %2599 = vmatprep.subr.bf16.mxu0 0
    %2600 = vmatpush1.bf16.msra.mxu0 %v2584
    %2601 = vmatprep.subr.bf16.mxu0 0
    %2602 = vmatpush1.bf16.msra.mxu0 %v2583
    %2603 = vmatprep.subr.bf16.mxu0 0
    %2604 = vmatpush2.bf16.msra.mxu0 0
    %2605 = vmatprep.subr.bf16.mxu0 0
    %2606 = vmatpush2.bf16.msra.mxu0 0
    %2607 = vmatprep.subr.bf16.mxu0 0
    %2608 = vmatpush2.bf16.msra.mxu0 0
    %2609 = vmatprep.subr.bf16.mxu0 0
    %2610 = vmatpush2.bf16.msra.mxu0 0
    %2611 = vmatprep.subr.bf16.mxu0 0
    %2612 = vmatpush2.bf16.msra.mxu0 0
    %2613 = vmatprep.subr.bf16.mxu0 0
    %2614 = vmatpush2.bf16.msra.mxu0 0
    %2615 = vmatprep.subr.bf16.mxu0 0
    %2616 = vmatpush2.bf16.msra.mxu0 0
    %2617 = vmatprep.subr.bf16.mxu0 0
    %2618 = vmatpush2.bf16.msra.mxu0 0
    %2619 = vmatprep.mubr.bf16.mxu0 0
    %2620 = vmatmul.mubr.bf16.gmra.mxu0 %v1075
    %v2621 = vpop.f32.mrf.mxu0
    %v2622 = vadd.f32 %v2573, %v2621
    %v2623 = vpop.f32.mrf.mxu0
    %v2624 = vpop.f32.mrf.mxu0
    %v2625 = vadd.f32 %v2573, %v2624
    %v2626 = vpop.f32.mrf.mxu0
    %2627 = vdwg.mxu0
    %s2628 = scalar_lea.vmem %s9, 80
    %v2629 = vld [vmem:[%s2628] sm:$0xf]
    %v2630 = vld [vmem:[%s2628 + $0x4] sm:$0xf]
    %v2631 = vld [vmem:[%s2628 + $0x8] sm:$0xf]
    %v2632 = vld [vmem:[%s2628 + $0xc] sm:$0xf]
    %s2633 = scalar_lea.vmem %s10, 5
    %v2634 = vld [vmem:[%s2633] sm:$0x1]
    %v2636 = vlaneseq
    %v2637 = vshrl.u32 %v2636, 7
    %v2638 = vsub.s32 0, %v2637
    %v2639 = vrot.slane %v2634, %v2638
    %v2645 = vunpack.c.l.b16 %v2629
    %v2646 = vunpack.c.l.b16 %v2630
    %v2647 = vunpack.c.l.b16 %v2631
    %v2648 = vunpack.c.l.b16 %v2632
    %v2649 = vpack.c.b16 %v2646, %v2645
    %v2650 = vpack.c.b16 %v2648, %v2647
    %2653 = vmatprep.subr.bf16.mxu0 0
    %2654 = vmatpush1.bf16.msra.mxu0 0
    %2655 = vmatprep.subr.bf16.mxu0 0
    %2656 = vmatpush1.bf16.msra.mxu0 0
    %2657 = vmatprep.subr.bf16.mxu0 0
    %2658 = vmatpush1.bf16.msra.mxu0 0
    %2659 = vmatprep.subr.bf16.mxu0 0
    %2660 = vmatpush1.bf16.msra.mxu0 0
    %2661 = vmatprep.subr.bf16.mxu0 0
    %2662 = vmatpush1.bf16.msra.mxu0 0
    %2663 = vmatprep.subr.bf16.mxu0 0
    %2664 = vmatpush1.bf16.msra.mxu0 0
    %2665 = vmatprep.subr.bf16.mxu0 0
    %2666 = vmatpush1.bf16.msra.mxu0 %v2650
    %2667 = vmatprep.subr.bf16.mxu0 0
    %2668 = vmatpush1.bf16.msra.mxu0 %v2649
    %2669 = vmatprep.subr.bf16.mxu0 0
    %2670 = vmatpush2.bf16.msra.mxu0 0
    %2671 = vmatprep.subr.bf16.mxu0 0
    %2672 = vmatpush2.bf16.msra.mxu0 0
    %2673 = vmatprep.subr.bf16.mxu0 0
    %2674 = vmatpush2.bf16.msra.mxu0 0
    %2675 = vmatprep.subr.bf16.mxu0 0
    %2676 = vmatpush2.bf16.msra.mxu0 0
    %2677 = vmatprep.subr.bf16.mxu0 0
    %2678 = vmatpush2.bf16.msra.mxu0 0
    %2679 = vmatprep.subr.bf16.mxu0 0
    %2680 = vmatpush2.bf16.msra.mxu0 0
    %2681 = vmatprep.subr.bf16.mxu0 0
    %2682 = vmatpush2.bf16.msra.mxu0 0
    %2683 = vmatprep.subr.bf16.mxu0 0
    %2684 = vmatpush2.bf16.msra.mxu0 0
    %2685 = vmatprep.mubr.bf16.mxu0 0
    %2686 = vmatmul.mubr.bf16.gmra.mxu0 %v1075
    %v2687 = vpop.f32.mrf.mxu0
    %v2688 = vadd.f32 %v2639, %v2687
    %v2689 = vpop.f32.mrf.mxu0
    %v2690 = vpop.f32.mrf.mxu0
    %v2691 = vadd.f32 %v2639, %v2690
    %v2692 = vpop.f32.mrf.mxu0
    %2693 = vdwg.mxu0
    %v2694 = vpack.c.bf16 %v2551, %v2548
    %v2695 = vpack.c.bf16 %v2559, %v2556
    %v2696 = vpack.c.bf16 %v2625, %v2622
    %v2697 = vpack.c.bf16 %v2691, %v2688
    %v2699 = vsel %vm1188, %v2694, 0
    %v2702 = vsel %vm1188, %v2695, 0
    %v2705 = vsel %vm1188, %v2696, 0
    %2707 = vmatprep.subr.bf16.mxu0 0
    %2708 = vmatpush1.bf16.xpose.msra.mxu0 0
    %2709 = vmatprep.subr.bf16.mxu0 0
    %2710 = vmatpush1.bf16.xpose.msra.mxu0 0
    %2711 = vmatprep.subr.bf16.mxu0 0
    %2712 = vmatpush1.bf16.xpose.msra.mxu0 0
    %2713 = vmatprep.subr.bf16.mxu0 0
    %2714 = vmatpush1.bf16.xpose.msra.mxu0 0
    %2715 = vmatprep.subr.bf16.mxu0 0
    %2716 = vmatpush1.bf16.xpose.msra.mxu0 0
    %2717 = vmatprep.subr.bf16.mxu0 0
    %2718 = vmatpush1.bf16.xpose.msra.mxu0 0
    %2719 = vmatprep.subr.bf16.mxu0 0
    %2720 = vmatpush1.bf16.xpose.msra.mxu0 0
    %2721 = vmatprep.subr.bf16.mxu0 0
    %2722 = vmatpush1.bf16.xpose.msra.mxu0 %v2705
    %2723 = vmatprep.subr.bf16.mxu0 0
    %2724 = vmatpush2.bf16.xpose.msra.mxu0 0
    %2725 = vmatprep.subr.bf16.mxu0 0
    %2726 = vmatpush2.bf16.xpose.msra.mxu0 0
    %2727 = vmatprep.subr.bf16.mxu0 0
    %2728 = vmatpush2.bf16.xpose.msra.mxu0 0
    %2729 = vmatprep.subr.bf16.mxu0 0
    %2730 = vmatpush2.bf16.xpose.msra.mxu0 0
    %2731 = vmatprep.subr.bf16.mxu0 0
    %2732 = vmatpush2.bf16.xpose.msra.mxu0 0
    %2733 = vmatprep.subr.bf16.mxu0 0
    %2734 = vmatpush2.bf16.xpose.msra.mxu0 0
    %2735 = vmatprep.subr.bf16.mxu0 0
    %2736 = vmatpush2.bf16.xpose.msra.mxu0 0
    %2737 = vmatprep.subr.bf16.mxu0 0
    %2738 = vmatpush2.bf16.xpose.msra.mxu0 0
    %2739 = vmatprep.mubr.bf16.mxu0 0
    %2740 = vmatmul.mubr.bf16.gmra.mxu0 %v2699
    %v2741 = vpop.f32.mrf.mxu0
    %v2742 = vadd.f32 %v169, %v2741
    %v2743 = vpop.f32.mrf.mxu0
    %v2744 = vpop.f32.mrf.mxu0
    %v2745 = vadd.f32 %v170, %v2744
    %v2746 = vpop.f32.mrf.mxu0
    %2747 = vmatprep.mubr.bf16.mxu0 0
    %2748 = vmatmul.mubr.bf16.gmra.mxu0 %v2702
    %v2749 = vpop.f32.mrf.mxu0
    %v2750 = vadd.f32 %v171, %v2749
    %v2751 = vpop.f32.mrf.mxu0
    %v2752 = vpop.f32.mrf.mxu0
    %v2753 = vadd.f32 %v172, %v2752
    %v2754 = vpop.f32.mrf.mxu0
    %2755 = vdwg.mxu0
    %v2756 = vsel %vm1188, %v2742, -inf
    %2757 = vmax.xlane.f32.xlu0 %v2756
    %v2758 = vpop.xlane.xlu0 %2757
    %v2759 = vsel %vm1188, %v2745, -inf
    %2760 = vmax.xlane.f32.xlu0 %v2759
    %v2761 = vpop.xlane.xlu0 %2760
    %v2762 = vsel %vm1188, %v2750, -inf
    %2763 = vmax.xlane.f32.xlu0 %v2762
    %v2764 = vpop.xlane.xlu0 %2763
    %v2765 = vsel %vm1188, %v2753, -inf
    %2766 = vmax.xlane.f32.xlu0 %v2765
    %v2767 = vpop.xlane.xlu0 %2766
    %v2768 = vsub.f32 %v2742, %v2758
    %v2769 = vsub.f32 %v2745, %v2761
    %v2770 = vsub.f32 %v2750, %v2764
    %v2771 = vsub.f32 %v2753, %v2767
    %v2772 = vmul.f32 %v2768, 1.442695
    %v2773 = vpow.pop %v2772
    %v2774 = vmul.f32 %v2769, 1.442695
    %v2775 = vpow.pop %v2774
    %v2776 = vmul.f32 %v2770, 1.442695
    %v2777 = vpow.pop %v2776
    %v2778 = vmul.f32 %v2771, 1.442695
    %v2779 = vpow.pop %v2778
    %v2780 = vsel %vm1188, %v2773, 0.0
    %2781 = vadd.xlane.f32.xlu0 %v2780
    %v2782 = vpop.xlane.xlu0 %2781
    %v2783 = vsel %vm1188, %v2775, 0.0
    %2784 = vadd.xlane.f32.xlu0 %v2783
    %v2785 = vpop.xlane.xlu0 %2784
    %v2786 = vsel %vm1188, %v2777, 0.0
    %2787 = vadd.xlane.f32.xlu0 %v2786
    %v2788 = vpop.xlane.xlu0 %2787
    %v2789 = vsel %vm1188, %v2779, 0.0
    %2790 = vadd.xlane.f32.xlu0 %v2789
    %v2791 = vpop.xlane.xlu0 %2790
    %v2792 = vrcp.pop %v2782
    %v2793 = vrcp.pop %v2785
    %v2794 = vrcp.pop %v2788
    %v2795 = vrcp.pop %v2791
    %v2796 = vmul.f32 %v2773, %v2792
    %v2797 = vmul.f32 %v2775, %v2793
    %v2798 = vmul.f32 %v2777, %v2794
    %v2799 = vmul.f32 %v2779, %v2795
    %v2800 = vpack.c.bf16 %v2797, %v2796
    %v2801 = vpack.c.bf16 %v2799, %v2798
    %v2803 = vsel %vm1188, %v2800, 0
    %v2806 = vsel %vm1188, %v2801, 0
    %2808 = vmatprep.subr.bf16.mxu0 0
    %2809 = vmatpush1.bf16.msra.mxu0 0
    %2810 = vmatprep.subr.bf16.mxu0 0
    %2811 = vmatpush1.bf16.msra.mxu0 0
    %2812 = vmatprep.subr.bf16.mxu0 0
    %2813 = vmatpush1.bf16.msra.mxu0 0
    %2814 = vmatprep.subr.bf16.mxu0 0
    %2815 = vmatpush1.bf16.msra.mxu0 0
    %2816 = vmatprep.subr.bf16.mxu0 0
    %2817 = vmatpush1.bf16.msra.mxu0 0
    %2818 = vmatprep.subr.bf16.mxu0 0
    %2819 = vmatpush1.bf16.msra.mxu0 0
    %2820 = vmatprep.subr.bf16.mxu0 0
    %2821 = vmatpush1.bf16.msra.mxu0 0
    %2822 = vmatprep.subr.bf16.mxu0 0
    %2823 = vmatpush1.bf16.msra.mxu0 %v2697
    %2824 = vmatprep.subr.bf16.mxu0 0
    %2825 = vmatpush2.bf16.msra.mxu0 0
    %2826 = vmatprep.subr.bf16.mxu0 0
    %2827 = vmatpush2.bf16.msra.mxu0 0
    %2828 = vmatprep.subr.bf16.mxu0 0
    %2829 = vmatpush2.bf16.msra.mxu0 0
    %2830 = vmatprep.subr.bf16.mxu0 0
    %2831 = vmatpush2.bf16.msra.mxu0 0
    %2832 = vmatprep.subr.bf16.mxu0 0
    %2833 = vmatpush2.bf16.msra.mxu0 0
    %2834 = vmatprep.subr.bf16.mxu0 0
    %2835 = vmatpush2.bf16.msra.mxu0 0
    %2836 = vmatprep.subr.bf16.mxu0 0
    %2837 = vmatpush2.bf16.msra.mxu0 0
    %2838 = vmatprep.subr.bf16.mxu0 0
    %2839 = vmatpush2.bf16.msra.mxu0 0
    %2840 = vmatprep.mubr.bf16.mxu0 0
    %2841 = vmatmul.mubr.bf16.gmra.mxu0 %v2803
    %v2842 = vpop.f32.mrf.mxu0
    %v2843 = vadd.f32 0.0, %v2842
    %v2844 = vpop.f32.mrf.mxu0
    %v2845 = vpop.f32.mrf.mxu0
    %v2846 = vadd.f32 0.0, %v2845
    %v2847 = vpop.f32.mrf.mxu0
    %2848 = vmatprep.mubr.bf16.mxu0 0
    %2849 = vmatmul.mubr.bf16.gmra.mxu0 %v2806
    %v2850 = vpop.f32.mrf.mxu0
    %v2851 = vadd.f32 0.0, %v2850
    %v2852 = vpop.f32.mrf.mxu0
    %v2853 = vpop.f32.mrf.mxu0
    %v2854 = vadd.f32 0.0, %v2853
    %v2855 = vpop.f32.mrf.mxu0
    %2856 = vdwg.mxu0
    %v2857 = vpack.c.bf16 %v2846, %v2843
    %v2858 = vpack.c.bf16 %v2854, %v2851
    %s2859 = scalar_lea.vmem %s11, 32
    %v2860 = vld [vmem:[%s2859] sm:$0xf]
    %v2861 = vld [vmem:[%s2859 + $0x4] sm:$0xf]
    %v2862 = vld [vmem:[%s2859 + $0x8] sm:$0xf]
    %v2863 = vld [vmem:[%s2859 + $0xc] sm:$0xf]
    %2866 = vrot.lane.b32.xlu0 %v2694, 112
    %v2867 = vpop.permute.xlu0 %2866
    %2868 = vrot.lane.b32.xlu0 %v2695, 112
    %v2869 = vpop.permute.xlu0 %2868
    %2871 = vrot.lane.b32.xlu0 %v2696, 112
    %v2872 = vpop.permute.xlu0 %2871
    %v2874 = vsel %vm1188, %v2867, 0
    %v2877 = vsel %vm1188, %v2869, 0
    %v2880 = vsel %vm1188, %v2872, 0
    %2882 = vmatprep.subr.bf16.mxu0 0
    %2883 = vmatpush1.bf16.xpose.msra.mxu0 0
    %2884 = vmatprep.subr.bf16.mxu0 0
    %2885 = vmatpush1.bf16.xpose.msra.mxu0 0
    %2886 = vmatprep.subr.bf16.mxu0 0
    %2887 = vmatpush1.bf16.xpose.msra.mxu0 0
    %2888 = vmatprep.subr.bf16.mxu0 0
    %2889 = vmatpush1.bf16.xpose.msra.mxu0 0
    %2890 = vmatprep.subr.bf16.mxu0 0
    %2891 = vmatpush1.bf16.xpose.msra.mxu0 0
    %2892 = vmatprep.subr.bf16.mxu0 0
    %2893 = vmatpush1.bf16.xpose.msra.mxu0 0
    %2894 = vmatprep.subr.bf16.mxu0 0
    %2895 = vmatpush1.bf16.xpose.msra.mxu0 0
    %2896 = vmatprep.subr.bf16.mxu0 0
    %2897 = vmatpush1.bf16.xpose.msra.mxu0 %v2880
    %2898 = vmatprep.subr.bf16.mxu0 0
    %2899 = vmatpush2.bf16.xpose.msra.mxu0 0
    %2900 = vmatprep.subr.bf16.mxu0 0
    %2901 = vmatpush2.bf16.xpose.msra.mxu0 0
    %2902 = vmatprep.subr.bf16.mxu0 0
    %2903 = vmatpush2.bf16.xpose.msra.mxu0 0
    %2904 = vmatprep.subr.bf16.mxu0 0
    %2905 = vmatpush2.bf16.xpose.msra.mxu0 0
    %2906 = vmatprep.subr.bf16.mxu0 0
    %2907 = vmatpush2.bf16.xpose.msra.mxu0 0
    %2908 = vmatprep.subr.bf16.mxu0 0
    %2909 = vmatpush2.bf16.xpose.msra.mxu0 0
    %2910 = vmatprep.subr.bf16.mxu0 0
    %2911 = vmatpush2.bf16.xpose.msra.mxu0 0
    %2912 = vmatprep.subr.bf16.mxu0 0
    %2913 = vmatpush2.bf16.xpose.msra.mxu0 0
    %2914 = vmatprep.mubr.bf16.mxu0 0
    %2915 = vmatmul.mubr.bf16.gmra.mxu0 %v2874
    %v2916 = vpop.f32.mrf.mxu0
    %v2917 = vadd.f32 %v169, %v2916
    %v2918 = vpop.f32.mrf.mxu0
    %v2919 = vpop.f32.mrf.mxu0
    %v2920 = vadd.f32 %v170, %v2919
    %v2921 = vpop.f32.mrf.mxu0
    %2922 = vmatprep.mubr.bf16.mxu0 0
    %2923 = vmatmul.mubr.bf16.gmra.mxu0 %v2877
    %v2924 = vpop.f32.mrf.mxu0
    %v2925 = vadd.f32 %v171, %v2924
    %v2926 = vpop.f32.mrf.mxu0
    %v2927 = vpop.f32.mrf.mxu0
    %v2928 = vadd.f32 %v172, %v2927
    %v2929 = vpop.f32.mrf.mxu0
    %2930 = vdwg.mxu0
    %v2931 = vsel %vm1188, %v2917, -inf
    %2932 = vmax.xlane.f32.xlu0 %v2931
    %v2933 = vpop.xlane.xlu0 %2932
    %v2934 = vsel %vm1188, %v2920, -inf
    %2935 = vmax.xlane.f32.xlu0 %v2934
    %v2936 = vpop.xlane.xlu0 %2935
    %v2937 = vsel %vm1188, %v2925, -inf
    %2938 = vmax.xlane.f32.xlu0 %v2937
    %v2939 = vpop.xlane.xlu0 %2938
    %v2940 = vsel %vm1188, %v2928, -inf
    %2941 = vmax.xlane.f32.xlu0 %v2940
    %v2942 = vpop.xlane.xlu0 %2941
    %v2943 = vsub.f32 %v2917, %v2933
    %v2944 = vsub.f32 %v2920, %v2936
    %v2945 = vsub.f32 %v2925, %v2939
    %v2946 = vsub.f32 %v2928, %v2942
    %v2947 = vmul.f32 %v2943, 1.442695
    %v2948 = vpow.pop %v2947
    %v2949 = vmul.f32 %v2944, 1.442695
    %v2950 = vpow.pop %v2949
    %v2951 = vmul.f32 %v2945, 1.442695
    %v2952 = vpow.pop %v2951
    %v2953 = vmul.f32 %v2946, 1.442695
    %v2954 = vpow.pop %v2953
    %v2955 = vsel %vm1188, %v2948, 0.0
    %2956 = vadd.xlane.f32.xlu0 %v2955
    %v2957 = vpop.xlane.xlu0 %2956
    %v2958 = vsel %vm1188, %v2950, 0.0
    %2959 = vadd.xlane.f32.xlu0 %v2958
    %v2960 = vpop.xlane.xlu0 %2959
    %v2961 = vsel %vm1188, %v2952, 0.0
    %2962 = vadd.xlane.f32.xlu0 %v2961
    %v2963 = vpop.xlane.xlu0 %2962
    %v2964 = vsel %vm1188, %v2954, 0.0
    %2965 = vadd.xlane.f32.xlu0 %v2964
    %v2966 = vpop.xlane.xlu0 %2965
    %v2967 = vrcp.pop %v2957
    %v2968 = vrcp.pop %v2960
    %v2969 = vrcp.pop %v2963
    %v2970 = vrcp.pop %v2966
    %v2971 = vmul.f32 %v2948, %v2967
    %v2972 = vmul.f32 %v2950, %v2968
    %v2973 = vmul.f32 %v2952, %v2969
    %v2974 = vmul.f32 %v2954, %v2970
    %v2975 = vpack.c.bf16 %v2972, %v2971
    %v2976 = vpack.c.bf16 %v2974, %v2973
    %2978 = vrot.lane.b32.xlu0 %v2697, 112
    %v2979 = vpop.permute.xlu0 %2978
    %v2982 = vsel %vm1188, %v2975, 0
    %v2985 = vsel %vm1188, %v2976, 0
    %2987 = vmatprep.subr.bf16.mxu0 0
    %2988 = vmatpush1.bf16.msra.mxu0 0
    %2989 = vmatprep.subr.bf16.mxu0 0
    %2990 = vmatpush1.bf16.msra.mxu0 0
    %2991 = vmatprep.subr.bf16.mxu0 0
    %2992 = vmatpush1.bf16.msra.mxu0 0
    %2993 = vmatprep.subr.bf16.mxu0 0
    %2994 = vmatpush1.bf16.msra.mxu0 0
    %2995 = vmatprep.subr.bf16.mxu0 0
    %2996 = vmatpush1.bf16.msra.mxu0 0
    %2997 = vmatprep.subr.bf16.mxu0 0
    %2998 = vmatpush1.bf16.msra.mxu0 0
    %2999 = vmatprep.subr.bf16.mxu0 0
    %3000 = vmatpush1.bf16.msra.mxu0 0
    %3001 = vmatprep.subr.bf16.mxu0 0
    %3002 = vmatpush1.bf16.msra.mxu0 %v2979
    %3003 = vmatprep.subr.bf16.mxu0 0
    %3004 = vmatpush2.bf16.msra.mxu0 0
    %3005 = vmatprep.subr.bf16.mxu0 0
    %3006 = vmatpush2.bf16.msra.mxu0 0
    %3007 = vmatprep.subr.bf16.mxu0 0
    %3008 = vmatpush2.bf16.msra.mxu0 0
    %3009 = vmatprep.subr.bf16.mxu0 0
    %3010 = vmatpush2.bf16.msra.mxu0 0
    %3011 = vmatprep.subr.bf16.mxu0 0
    %3012 = vmatpush2.bf16.msra.mxu0 0
    %3013 = vmatprep.subr.bf16.mxu0 0
    %3014 = vmatpush2.bf16.msra.mxu0 0
    %3015 = vmatprep.subr.bf16.mxu0 0
    %3016 = vmatpush2.bf16.msra.mxu0 0
    %3017 = vmatprep.subr.bf16.mxu0 0
    %3018 = vmatpush2.bf16.msra.mxu0 0
    %3019 = vmatprep.mubr.bf16.mxu0 0
    %3020 = vmatmul.mubr.bf16.gmra.mxu0 %v2982
    %v3021 = vpop.f32.mrf.mxu0
    %v3022 = vadd.f32 0.0, %v3021
    %v3023 = vpop.f32.mrf.mxu0
    %v3024 = vpop.f32.mrf.mxu0
    %v3025 = vadd.f32 0.0, %v3024
    %v3026 = vpop.f32.mrf.mxu0
    %3027 = vmatprep.mubr.bf16.mxu0 0
    %3028 = vmatmul.mubr.bf16.gmra.mxu0 %v2985
    %v3029 = vpop.f32.mrf.mxu0
    %v3030 = vadd.f32 0.0, %v3029
    %v3031 = vpop.f32.mrf.mxu0
    %v3032 = vpop.f32.mrf.mxu0
    %v3033 = vadd.f32 0.0, %v3032
    %v3034 = vpop.f32.mrf.mxu0
    %3035 = vdwg.mxu0
    %v3036 = vpack.c.bf16 %v3025, %v3022
    %v3037 = vpack.c.bf16 %v3033, %v3030
    %s3038 = scalar_lea.vmem %s11, 48
    %v3039 = vld [vmem:[%s3038] sm:$0xf]
    %v3040 = vld [vmem:[%s3038 + $0x4] sm:$0xf]
    %v3041 = vld [vmem:[%s3038 + $0x8] sm:$0xf]
    %v3042 = vld [vmem:[%s3038 + $0xc] sm:$0xf]
    %v3047 = vunpack.c.l.b16 %v3039
    %v3048 = vunpack.c.l.b16 %v3040
    %v3049 = vunpack.c.l.b16 %v3041
    %v3050 = vunpack.c.l.b16 %v3042
    %v3051 = vpack.c.b16 %v3048, %v3047
    %v3052 = vpack.c.b16 %v3050, %v3049
    %v3054 = vsel %vm1188, %v3036, 0
    %v3057 = vsel %vm1188, %v3037, 0
    %v3060 = vsel %vm1188, %v3051, 0
    %v3063 = vsel %vm1188, %v3052, 0
    %3065 = vmatprep.subr.bf16.mxu0 0
    %3066 = vmatpush1.bf16.xpose.msra.mxu0 0
    %3067 = vmatprep.subr.bf16.mxu0 0
    %3068 = vmatpush1.bf16.xpose.msra.mxu0 0
    %3069 = vmatprep.subr.bf16.mxu0 0
    %3070 = vmatpush1.bf16.xpose.msra.mxu0 0
    %3071 = vmatprep.subr.bf16.mxu0 0
    %3072 = vmatpush1.bf16.xpose.msra.mxu0 0
    %3073 = vmatprep.subr.bf16.mxu0 0
    %3074 = vmatpush1.bf16.xpose.msra.mxu0 0
    %3075 = vmatprep.subr.bf16.mxu0 0
    %3076 = vmatpush1.bf16.xpose.msra.mxu0 0
    %3077 = vmatprep.subr.bf16.mxu0 0
    %3078 = vmatpush1.bf16.xpose.msra.mxu0 %v3063
    %3079 = vmatprep.subr.bf16.mxu0 0
    %3080 = vmatpush1.bf16.xpose.msra.mxu0 %v3060
    %3081 = vmatprep.subr.bf16.mxu0 0
    %3082 = vmatpush2.bf16.xpose.msra.mxu0 0
    %3083 = vmatprep.subr.bf16.mxu0 0
    %3084 = vmatpush2.bf16.xpose.msra.mxu0 0
    %3085 = vmatprep.subr.bf16.mxu0 0
    %3086 = vmatpush2.bf16.xpose.msra.mxu0 0
    %3087 = vmatprep.subr.bf16.mxu0 0
    %3088 = vmatpush2.bf16.xpose.msra.mxu0 0
    %3089 = vmatprep.subr.bf16.mxu0 0
    %3090 = vmatpush2.bf16.xpose.msra.mxu0 0
    %3091 = vmatprep.subr.bf16.mxu0 0
    %3092 = vmatpush2.bf16.xpose.msra.mxu0 0
    %3093 = vmatprep.subr.bf16.mxu0 0
    %3094 = vmatpush2.bf16.xpose.msra.mxu0 0
    %3095 = vmatprep.subr.bf16.mxu0 0
    %3096 = vmatpush2.bf16.xpose.msra.mxu0 0
    %3097 = vmatprep.mubr.bf16.mxu0 0
    %3098 = vmatmul.mubr.bf16.gmra.mxu0 %v3054
    %v3099 = vpop.f32.mrf.mxu0
    %v3100 = vadd.f32 0.0, %v3099
    %v3101 = vpop.f32.mrf.mxu0
    %v3102 = vpop.f32.mrf.mxu0
    %v3103 = vadd.f32 0.0, %v3102
    %v3104 = vpop.f32.mrf.mxu0
    %3105 = vmatprep.mubr.bf16.mxu0 0
    %3106 = vmatmul.mubr.bf16.gmra.mxu0 %v3057
    %v3107 = vpop.f32.mrf.mxu0
    %v3108 = vadd.f32 0.0, %v3107
    %v3109 = vpop.f32.mrf.mxu0
    %v3110 = vpop.f32.mrf.mxu0
    %v3111 = vadd.f32 0.0, %v3110
    %v3112 = vpop.f32.mrf.mxu0
    %3113 = vdwg.mxu0
    %v3118 = vunpack.c.l.b16 %v2860
    %v3119 = vunpack.c.l.b16 %v2861
    %v3120 = vunpack.c.l.b16 %v2862
    %v3121 = vunpack.c.l.b16 %v2863
    %v3122 = vpack.c.b16 %v3119, %v3118
    %v3123 = vpack.c.b16 %v3121, %v3120
    %v3125 = vsel %vm1188, %v2857, 0
    %v3128 = vsel %vm1188, %v2858, 0
    %v3131 = vsel %vm1188, %v3122, 0
    %v3134 = vsel %vm1188, %v3123, 0
    %3136 = vmatprep.subr.bf16.mxu0 0
    %3137 = vmatpush1.bf16.xpose.msra.mxu0 0
    %3138 = vmatprep.subr.bf16.mxu0 0
    %3139 = vmatpush1.bf16.xpose.msra.mxu0 0
    %3140 = vmatprep.subr.bf16.mxu0 0
    %3141 = vmatpush1.bf16.xpose.msra.mxu0 0
    %3142 = vmatprep.subr.bf16.mxu0 0
    %3143 = vmatpush1.bf16.xpose.msra.mxu0 0
    %3144 = vmatprep.subr.bf16.mxu0 0
    %3145 = vmatpush1.bf16.xpose.msra.mxu0 0
    %3146 = vmatprep.subr.bf16.mxu0 0
    %3147 = vmatpush1.bf16.xpose.msra.mxu0 0
    %3148 = vmatprep.subr.bf16.mxu0 0
    %3149 = vmatpush1.bf16.xpose.msra.mxu0 %v3134
    %3150 = vmatprep.subr.bf16.mxu0 0
    %3151 = vmatpush1.bf16.xpose.msra.mxu0 %v3131
    %3152 = vmatprep.subr.bf16.mxu0 0
    %3153 = vmatpush2.bf16.xpose.msra.mxu0 0
    %3154 = vmatprep.subr.bf16.mxu0 0
    %3155 = vmatpush2.bf16.xpose.msra.mxu0 0
    %3156 = vmatprep.subr.bf16.mxu0 0
    %3157 = vmatpush2.bf16.xpose.msra.mxu0 0
    %3158 = vmatprep.subr.bf16.mxu0 0
    %3159 = vmatpush2.bf16.xpose.msra.mxu0 0
    %3160 = vmatprep.subr.bf16.mxu0 0
    %3161 = vmatpush2.bf16.xpose.msra.mxu0 0
    %3162 = vmatprep.subr.bf16.mxu0 0
    %3163 = vmatpush2.bf16.xpose.msra.mxu0 0
    %3164 = vmatprep.subr.bf16.mxu0 0
    %3165 = vmatpush2.bf16.xpose.msra.mxu0 0
    %3166 = vmatprep.subr.bf16.mxu0 0
    %3167 = vmatpush2.bf16.xpose.msra.mxu0 0
    %3168 = vmatprep.mubr.bf16.mxu0 0
    %3169 = vmatmul.mubr.bf16.gmra.mxu0 %v3125
    %v3170 = vpop.f32.mrf.mxu0
    %v3171 = vadd.f32 %v3100, %v3170
    %v3172 = vpop.f32.mrf.mxu0
    %v3173 = vpop.f32.mrf.mxu0
    %v3174 = vadd.f32 %v3103, %v3173
    %v3175 = vpop.f32.mrf.mxu0
    %3176 = vmatprep.mubr.bf16.mxu0 0
    %3177 = vmatmul.mubr.bf16.gmra.mxu0 %v3128
    %v3178 = vpop.f32.mrf.mxu0
    %v3179 = vadd.f32 %v3108, %v3178
    %v3180 = vpop.f32.mrf.mxu0
    %v3181 = vpop.f32.mrf.mxu0
    %v3182 = vadd.f32 %v3111, %v3181
    %v3183 = vpop.f32.mrf.mxu0
    %3184 = vdwg.mxu0
    %s3185 = scalar_lea.vmem %s12, 4
    %v3186 = vld [vmem:[%s3185] sm:$0x7]
    %v3187 = vlaneseq
    %v3188 = vshrl.u32 %v3187, 7
    %v3189 = vsub.s32 0, %v3188
    %v3190 = vrot.slane %v3186, %v3189
    %v3191 = vadd.f32 %v3171, %v3190
    %v3192 = vadd.f32 %v3174, %v3190
    %v3193 = vadd.f32 %v3179, %v3190
    %v3194 = vadd.f32 %v3182, %v3190
    %v3195 = vadd.f32 %v3191, %v2476
    %v3196 = vadd.f32 %v3192, %v2477
    %v3197 = vadd.f32 %v3193, %v2478
    %v3198 = vadd.f32 %v3194, %v2479
    %v3199 = vsel %vm308, %v3195, 0.0
    %3200 = vadd.xlane.f32.xlu0 %v3199
    %v3201 = vpop.xlane.xlu0 %3200
    %v3202 = vsel %vm308, %v3196, 0.0
    %3203 = vadd.xlane.f32.xlu0 %v3202
    %v3204 = vpop.xlane.xlu0 %3203
    %v3205 = vsel %vm308, %v3197, 0.0
    %3206 = vadd.xlane.f32.xlu0 %v3205
    %v3207 = vpop.xlane.xlu0 %3206
    %v3208 = vsel %vm308, %v3198, 0.0
    %3209 = vadd.xlane.f32.xlu0 %v3208
    %v3210 = vpop.xlane.xlu0 %3209
    %v3211 = vmul.f32 %v3201, %v536
    %v3212 = vmul.f32 %v3204, %v536
    %v3213 = vmul.f32 %v3207, %v536
    %v3214 = vmul.f32 %v3210, %v536
    %v3215 = vmul.f32 %v3195, %v3195
    %v3216 = vmul.f32 %v3196, %v3196
    %v3217 = vmul.f32 %v3197, %v3197
    %v3218 = vmul.f32 %v3198, %v3198
    %v3219 = vsel %vm308, %v3215, 0.0
    %3220 = vadd.xlane.f32.xlu0 %v3219
    %v3221 = vpop.xlane.xlu0 %3220
    %v3222 = vsel %vm308, %v3216, 0.0
    %3223 = vadd.xlane.f32.xlu0 %v3222
    %v3224 = vpop.xlane.xlu0 %3223
    %v3225 = vsel %vm308, %v3217, 0.0
    %3226 = vadd.xlane.f32.xlu0 %v3225
    %v3227 = vpop.xlane.xlu0 %3226
    %v3228 = vsel %vm308, %v3218, 0.0
    %3229 = vadd.xlane.f32.xlu0 %v3228
    %v3230 = vpop.xlane.xlu0 %3229
    %v3231 = vmul.f32 %v3221, %v536
    %v3232 = vmul.f32 %v3224, %v536
    %v3233 = vmul.f32 %v3227, %v536
    %v3234 = vmul.f32 %v3230, %v536
    %v3235 = vmul.f32 %v3211, %v3211
    %v3236 = vmul.f32 %v3212, %v3212
    %v3237 = vmul.f32 %v3213, %v3213
    %v3238 = vmul.f32 %v3214, %v3214
    %v3239 = vsub.f32 %v3231, %v3235
    %v3240 = vsub.f32 %v3232, %v3236
    %v3241 = vsub.f32 %v3233, %v3237
    %v3242 = vsub.f32 %v3234, %v3238
    %v3243 = vmax.f32 %v3239, 0.0
    %v3244 = vmax.f32 %v3240, 0.0
    %v3245 = vmax.f32 %v3241, 0.0
    %v3246 = vmax.f32 %v3242, 0.0
    %v3247 = vsub.f32 %v3195, %v3211
    %v3248 = vsub.f32 %v3196, %v3212
    %v3249 = vsub.f32 %v3197, %v3213
    %v3250 = vsub.f32 %v3198, %v3214
    %v3251 = vadd.f32 %v3243, 1e-05
    %v3252 = vadd.f32 %v3244, 1e-05
    %v3253 = vadd.f32 %v3245, 1e-05
    %v3254 = vadd.f32 %v3246, 1e-05
    %v3255 = vrsqrt.pop %v3251
    %v3256 = vrsqrt.pop %v3252
    %v3257 = vrsqrt.pop %v3253
    %v3258 = vrsqrt.pop %v3254
    %v3259 = vmul.f32 %v3247, %v3255
    %v3260 = vmul.f32 %v3248, %v3256
    %v3261 = vmul.f32 %v3249, %v3257
    %v3262 = vmul.f32 %v3250, %v3258
    %v3263 = vlaneseq
    %v3264 = vshrl.u32 %v3263, 7
    %v3265 = vsub.s32 1, %v3264
    %v3266 = vrot.slane %v3186, %v3265
    %v3267 = vmul.f32 %v3259, %v3266
    %v3268 = vmul.f32 %v3260, %v3266
    %v3269 = vmul.f32 %v3261, %v3266
    %v3270 = vmul.f32 %v3262, %v3266
    %v3271 = vlaneseq
    %v3272 = vshrl.u32 %v3271, 7
    %v3273 = vsub.s32 2, %v3272
    %v3274 = vrot.slane %v3186, %v3273
    %v3275 = vadd.f32 %v3267, %v3274
    %v3276 = vadd.f32 %v3268, %v3274
    %v3277 = vadd.f32 %v3269, %v3274
    %v3278 = vadd.f32 %v3270, %v3274
    %v3279 = vrot.slane %v3275, 7
    %v3280 = vrot.slane %v3276, 7
    %v3281 = vrot.slane %v3277, 7
    %v3282 = vrot.slane %v3278, 7
    %v3283 = vsel %vm259, %v3281, %v3282
    %v3284 = vsel %vm259, %v3280, %v3281
    %v3285 = vsel %vm259, %v3279, %v3280
    %v3286 = vsel %vm259, %v3282, %v3279
    %v3287 = vmul.f32 %v3286, %v102
    %v3288 = vmul.f32 %v3285, %v107
    %v3289 = vmul.f32 %v3284, %v112
    %v3290 = vmul.f32 %v3283, %v117
    %v3291 = vpack.c.bf16 %v3288, %v3287
    %v3292 = vpack.c.bf16 %v3290, %v3289
    %v3293 = vmul.f32 %v3275, %v127
    %v3294 = vmul.f32 %v3276, %v132
    %v3295 = vmul.f32 %v3277, %v137
    %v3296 = vmul.f32 %v3278, %v142
    %v3297 = vpack.c.bf16 %v3294, %v3293
    %v3298 = vpack.c.bf16 %v3296, %v3295
    %v3299 = vrot.slane %v3275, 1
    %v3300 = vrot.slane %v3276, 1
    %v3301 = vrot.slane %v3277, 1
    %v3302 = vrot.slane %v3278, 1
    %v3303 = vsel %vm280, %v3301, %v3302
    %v3304 = vsel %vm280, %v3300, %v3301
    %v3305 = vsel %vm280, %v3299, %v3300
    %v3306 = vsel %vm280, %v3302, %v3299
    %v3307 = vmul.f32 %v3305, %v152
    %v3308 = vmul.f32 %v3304, %v157
    %v3309 = vmul.f32 %v3303, %v162
    %v3310 = vmul.f32 %v3306, %v167
    %v3311 = vpack.c.bf16 %v3308, %v3307
    %v3312 = vpack.c.bf16 %v3310, %v3309
    %v3313 = vld [vmem:[%s13] sm:$0x1]
    %s3314 = scalar_lea.vmem %s13, 1
    %v3315 = vld [vmem:[%s3314] sm:$0x1]
    %v3317 = vsel %vm308, %v3315, 0
    %v3320 = vsel %vm308, %v3297, 0
    %v3323 = vsel %vm308, %v3298, 0
    %3325 = vmatprep.subr.bf16.mxu0 0
    %3326 = vmatpush1.bf16.xpose.msra.mxu0 0
    %3327 = vmatprep.subr.bf16.mxu0 0
    %3328 = vmatpush1.bf16.xpose.msra.mxu0 0
    %3329 = vmatprep.subr.bf16.mxu0 0
    %3330 = vmatpush1.bf16.xpose.msra.mxu0 0
    %3331 = vmatprep.subr.bf16.mxu0 0
    %3332 = vmatpush1.bf16.xpose.msra.mxu0 0
    %3333 = vmatprep.subr.bf16.mxu0 0
    %3334 = vmatpush1.bf16.xpose.msra.mxu0 0
    %3335 = vmatprep.subr.bf16.mxu0 0
    %3336 = vmatpush1.bf16.xpose.msra.mxu0 0
    %3337 = vmatprep.subr.bf16.mxu0 0
    %3338 = vmatpush1.bf16.xpose.msra.mxu0 %v3323
    %3339 = vmatprep.subr.bf16.mxu0 0
    %3340 = vmatpush1.bf16.xpose.msra.mxu0 %v3320
    %3341 = vmatprep.subr.bf16.mxu0 0
    %3342 = vmatpush2.bf16.xpose.msra.mxu0 0
    %3343 = vmatprep.subr.bf16.mxu0 0
    %3344 = vmatpush2.bf16.xpose.msra.mxu0 0
    %3345 = vmatprep.subr.bf16.mxu0 0
    %3346 = vmatpush2.bf16.xpose.msra.mxu0 0
    %3347 = vmatprep.subr.bf16.mxu0 0
    %3348 = vmatpush2.bf16.xpose.msra.mxu0 0
    %3349 = vmatprep.subr.bf16.mxu0 0
    %3350 = vmatpush2.bf16.xpose.msra.mxu0 0
    %3351 = vmatprep.subr.bf16.mxu0 0
    %3352 = vmatpush2.bf16.xpose.msra.mxu0 0
    %3353 = vmatprep.subr.bf16.mxu0 0
    %3354 = vmatpush2.bf16.xpose.msra.mxu0 0
    %3355 = vmatprep.subr.bf16.mxu0 0
    %3356 = vmatpush2.bf16.xpose.msra.mxu0 0
    %3357 = vmatprep.mubr.bf16.mxu0 0
    %3358 = vmatmul.mubr.bf16.gmra.mxu0 %v3317
    %v3359 = vpop.f32.mrf.mxu0
    %v3360 = vadd.f32 0.0, %v3359
    %v3361 = vpop.f32.mrf.mxu0
    %v3362 = vpop.f32.mrf.mxu0
    %v3363 = vpop.f32.mrf.mxu0
    %3364 = vdwg.mxu0
    %v3366 = vsel %vm308, %v3313, 0
    %v3369 = vsel %vm308, %v3291, 0
    %v3372 = vsel %vm308, %v3292, 0
    %3374 = vmatprep.subr.bf16.mxu0 0
    %3375 = vmatpush1.bf16.xpose.msra.mxu0 0
    %3376 = vmatprep.subr.bf16.mxu0 0
    %3377 = vmatpush1.bf16.xpose.msra.mxu0 0
    %3378 = vmatprep.subr.bf16.mxu0 0
    %3379 = vmatpush1.bf16.xpose.msra.mxu0 0
    %3380 = vmatprep.subr.bf16.mxu0 0
    %3381 = vmatpush1.bf16.xpose.msra.mxu0 0
    %3382 = vmatprep.subr.bf16.mxu0 0
    %3383 = vmatpush1.bf16.xpose.msra.mxu0 0
    %3384 = vmatprep.subr.bf16.mxu0 0
    %3385 = vmatpush1.bf16.xpose.msra.mxu0 0
    %3386 = vmatprep.subr.bf16.mxu0 0
    %3387 = vmatpush1.bf16.xpose.msra.mxu0 %v3372
    %3388 = vmatprep.subr.bf16.mxu0 0
    %3389 = vmatpush1.bf16.xpose.msra.mxu0 %v3369
    %3390 = vmatprep.subr.bf16.mxu0 0
    %3391 = vmatpush2.bf16.xpose.msra.mxu0 0
    %3392 = vmatprep.subr.bf16.mxu0 0
    %3393 = vmatpush2.bf16.xpose.msra.mxu0 0
    %3394 = vmatprep.subr.bf16.mxu0 0
    %3395 = vmatpush2.bf16.xpose.msra.mxu0 0
    %3396 = vmatprep.subr.bf16.mxu0 0
    %3397 = vmatpush2.bf16.xpose.msra.mxu0 0
    %3398 = vmatprep.subr.bf16.mxu0 0
    %3399 = vmatpush2.bf16.xpose.msra.mxu0 0
    %3400 = vmatprep.subr.bf16.mxu0 0
    %3401 = vmatpush2.bf16.xpose.msra.mxu0 0
    %3402 = vmatprep.subr.bf16.mxu0 0
    %3403 = vmatpush2.bf16.xpose.msra.mxu0 0
    %3404 = vmatprep.subr.bf16.mxu0 0
    %3405 = vmatpush2.bf16.xpose.msra.mxu0 0
    %3406 = vmatprep.mubr.bf16.mxu0 0
    %3407 = vmatmul.mubr.bf16.gmra.mxu0 %v3366
    %v3408 = vpop.f32.mrf.mxu0
    %v3409 = vadd.f32 %v3360, %v3408
    %v3410 = vpop.f32.mrf.mxu0
    %v3411 = vpop.f32.mrf.mxu0
    %v3412 = vpop.f32.mrf.mxu0
    %3413 = vdwg.mxu0
    %s3414 = scalar_lea.vmem %s13, 2
    %v3415 = vld [vmem:[%s3414] sm:$0x1]
    %v3417 = vsel %vm308, %v3415, 0
    %v3420 = vsel %vm308, %v3311, 0
    %v3423 = vsel %vm308, %v3312, 0
    %3425 = vmatprep.subr.bf16.mxu0 0
    %3426 = vmatpush1.bf16.xpose.msra.mxu0 0
    %3427 = vmatprep.subr.bf16.mxu0 0
    %3428 = vmatpush1.bf16.xpose.msra.mxu0 0
    %3429 = vmatprep.subr.bf16.mxu0 0
    %3430 = vmatpush1.bf16.xpose.msra.mxu0 0
    %3431 = vmatprep.subr.bf16.mxu0 0
    %3432 = vmatpush1.bf16.xpose.msra.mxu0 0
    %3433 = vmatprep.subr.bf16.mxu0 0
    %3434 = vmatpush1.bf16.xpose.msra.mxu0 0
    %3435 = vmatprep.subr.bf16.mxu0 0
    %3436 = vmatpush1.bf16.xpose.msra.mxu0 0
    %3437 = vmatprep.subr.bf16.mxu0 0
    %3438 = vmatpush1.bf16.xpose.msra.mxu0 %v3423
    %3439 = vmatprep.subr.bf16.mxu0 0
    %3440 = vmatpush1.bf16.xpose.msra.mxu0 %v3420
    %3441 = vmatprep.subr.bf16.mxu0 0
    %3442 = vmatpush2.bf16.xpose.msra.mxu0 0
    %3443 = vmatprep.subr.bf16.mxu0 0
    %3444 = vmatpush2.bf16.xpose.msra.mxu0 0
    %3445 = vmatprep.subr.bf16.mxu0 0
    %3446 = vmatpush2.bf16.xpose.msra.mxu0 0
    %3447 = vmatprep.subr.bf16.mxu0 0
    %3448 = vmatpush2.bf16.xpose.msra.mxu0 0
    %3449 = vmatprep.subr.bf16.mxu0 0
    %3450 = vmatpush2.bf16.xpose.msra.mxu0 0
    %3451 = vmatprep.subr.bf16.mxu0 0
    %3452 = vmatpush2.bf16.xpose.msra.mxu0 0
    %3453 = vmatprep.subr.bf16.mxu0 0
    %3454 = vmatpush2.bf16.xpose.msra.mxu0 0
    %3455 = vmatprep.subr.bf16.mxu0 0
    %3456 = vmatpush2.bf16.xpose.msra.mxu0 0
    %3457 = vmatprep.mubr.bf16.mxu0 0
    %3458 = vmatmul.mubr.bf16.gmra.mxu0 %v3417
    %v3459 = vpop.f32.mrf.mxu0
    %v3460 = vadd.f32 0.0, %v3459
    %v3461 = vpop.f32.mrf.mxu0
    %v3462 = vpop.f32.mrf.mxu0
    %v3463 = vpop.f32.mrf.mxu0
    %3464 = vdwg.mxu0
    %v3465 = vadd.f32 %v3409, %v3460
    %v3466 = vld [vmem:[#allocation2] sm:$0x1]
    %3468 = vset.pattern.permute.xlu0 0
    %3469 = vperm.xlu0 %3468, %v3466
    %v3470 = vpop.permute.xlu0 %3469
    %v3472 = vlaneseq
    %v3473 = vshrl.u32 %v3472, 7
    %v3474 = vsub.s32 0, %v3473
    %v3475 = vrot.slane %v3470, %v3474
    %v3476 = vadd.f32 %v3465, %v3475
    %v3477 = vld [vmem:[#allocation6] sm:$0x1]
    %v3478 = vmul.f32 %v3476, %v3477
    %v3479 = vmax.f32 %v3478, 0.0
    %v3480 = vand.u32 2147483647, %v3478
    %v3481 = vsub.f32 0.0, %v3480
    %v3482 = vmul.f32 %v3481, 1.442695
    %v3483 = vpow.pop %v3482
    %v3484 = vadd.f32 %v3483, 1.0
    %v3485 = vlog2.pop %v3484
    %v3486 = vmul.f32 %v3485, 0.6931472
    %v3487 = vadd.f32 %v3479, %v3486
    %vm3488 = vcmask 253952
    %3489 = vst.msk [vmem:[#allocation9] sm:$0x1] %vm3488, %v3487
    // Predicated region
    $region74: #{tpu_custom_call.1} parent=1 // pred_check
      _
    $region75: #{tpu_custom_call.1} parent=1 // pred_check_branch
      %3491 = sbr.rel (0) target = $region77
    $region76: #{tpu_custom_call.1} parent=1 // pred_region
      %s3493 = ssub.s32 16, 16
      %3494 = vsyncadd [#allocation5], %s3493
      %s3496 = sshll.u32 [#allocation9], 4
      %s3497 = int_to_ptr.vmem [resolvable:$true] %s3496
      %3499 = dma.vmem_to_hbm [thread:$0]  %s3497, 16, %s15, [#allocation5]
    $region77: #{tpu_custom_call.1} parent=1 // pred_fallthru
      _
    // Predicated region
    $region78: #{tpu_custom_call.1} parent=1 // pred_check
      _
    $region79: #{tpu_custom_call.1} parent=1 // pred_check_branch
      %3501 = sbr.rel (0) target = $region81
    $region80: #{tpu_custom_call.1} parent=1 // pred_region
      %3502 = dma.done [#allocation5], 16
    $region81: #{tpu_custom_call.1} parent=1 // pred_fallthru
      _
    %3503 = vsyncpa [#allocation4], 1
    %3504 = vsyncpa [#allocation7], 1
    %3505 = vsyncpa [#allocation5], 1

</llo_original>
